<compile_context>
chip_gen: v6e
topology: v6e:2x2x1
jax: 0.10.0
libtpu: 0.0.40
codegen_flags: <defaults>
</compile_context>

<pallas_src>
import functools
import math

import jax
import jax.numpy as jnp
from jax import lax
from jax.experimental import pallas as pl
from jax.experimental.pallas import tpu as pltpu


# ------------------------------ helpers -------------------------------------

def _layernorm(x, g, b, eps):
    mean = jnp.mean(x, axis=-1, keepdims=True)
    xc = x - mean
    var = jnp.mean(xc * xc, axis=-1, keepdims=True)
    return xc * lax.rsqrt(var + eps) * g + b


def sinusoidal_pe(max_len, d_model):
    pos = jnp.arange(max_len, dtype=jnp.float32)[:, None]
    div = jnp.exp(jnp.arange(0, d_model, 2, dtype=jnp.float32)
                  * (-math.log(10000.0) / d_model))
    pe = jnp.zeros((max_len, d_model), dtype=jnp.float32)
    pe = pe.at[:, 0::2].set(jnp.sin(pos * div))
    pe = pe.at[:, 1::2].set(jnp.cos(pos * div))
    return pe


# ------------------------- fused encoder kernel ------------------------------

def _encoder_kernel(src_ref, w_in_ref, pe_ref, qtok_ref, subj_ref,
                    w_qkv_ref, w_out_ref, w_ff1_ref, w_ff2_ref, vec_ref,
                    out_ref, h_s,
                    *, B, T, nq, S_subj, S_src, H, dh, F, eps):
    D = H * dh
    P = nq + S_subj
    layer = pl.program_id(0)
    last = pl.num_programs(0) - 1

    # ---- layer 0: input projection (+PE, bias folded into PE src rows) and
    #      sequence assembly [query | subject | src], all in VMEM -------------
    @pl.when(layer == 0)
    def _init():
        xs = jnp.dot(src_ref[...], w_in_ref[...],
                     preferred_element_type=jnp.float32)        # (B*S_src, D)
        pe_subj = pe_ref[0:S_subj, :]
        pe_src = pe_ref[S_subj:S_subj + S_src, :]
        qtok = qtok_ref[...]
        for b in range(B):                                      # B tiny: unroll
            base = b * T
            h_s[base:base + nq, :] = qtok                       # no PE on queries
            h_s[base + nq:base + P, :] = subj_ref[b] + pe_subj
            h_s[base + P:base + T, :] = (xs[b * S_src:(b + 1) * S_src, :]
                                         + pe_src)

    # ---- current layer's weights (BlockSpec pipeline prefetches next set) ---
    w_qkv = w_qkv_ref[...]          # (D, 3D); q columns pre-scaled by 1/sqrt(dh)
    w_out = w_out_ref[...]          # (D, D)
    w_ff1 = w_ff1_ref[...]          # (D, F)
    w_ff2 = w_ff2_ref[...]          # (F, D)
    vec = vec_ref[...]              # (8, Wmax) packed per-layer vectors
    b_qkv = vec[0:1, 0:3 * D]
    b_out = vec[1:2, 0:D]
    b_ff1 = vec[2:3, 0:F]
    b_ff2 = vec[3:4, 0:D]
    g1, beta1 = vec[4:5, 0:D], vec[5:6, 0:D]
    g2, beta2 = vec[6:7, 0:D], vec[7:8, 0:D]

    # ---- hoisted QKV projection: one (B*T, D)@(D, 3D) matmul per layer ------
    h = h_s[...]                                                 # (B*T, D)
    qkv = jnp.dot(h, w_qkv, preferred_element_type=jnp.float32) + b_qkv

    # ---- per-batch / per-head attention (statically unrolled; B, H tiny) ----
    # TODO(synk): src_key_padding_mask path not exercised (mask=None), so no
    # key-padding masking is applied inside the attention computation.
    # TODO(synk): at real sizes replace these static unrolls with fori_loop /
    # a "parallel" row-grid axis (v7x megacore), tile the matmuls, cast MXU
    # operands to bf16 (f32 accumulate), and re-derive vmem_limit_bytes.
    ctx_pieces = []
    for b in range(B):
        qkv_b = qkv[b * T:(b + 1) * T, :]                        # (T, 3D)
        head_outs = []
        for hd in range(H):
            c = hd * dh
            q = qkv_b[:, c:c + dh]                               # already scaled
            k = qkv_b[:, D + c:D + c + dh]
            v = qkv_b[:, 2 * D + c:2 * D + c + dh]
            # NT matmul: contract dh of q with dh of k (no explicit k.T)
            s = lax.dot_general(q, k, (((1,), (1,)), ((), ())),
                                preferred_element_type=jnp.float32)   # (T, T)
            s = s - jnp.max(s, axis=-1, keepdims=True)
            p = jnp.exp(s)
            p = p * pl.reciprocal(jnp.sum(p, axis=-1, keepdims=True),
                                  approx=True)
            head_outs.append(jnp.dot(p, v,
                                     preferred_element_type=jnp.float32))
        ctx_pieces.append(jnp.concatenate(head_outs, axis=1))    # (T, D)
    ctx = jnp.concatenate(ctx_pieces, axis=0)                    # (B*T, D)

    # ---- hoisted output projection, layernorms and FFN on (B*T, D) ----------
    attn = jnp.dot(ctx, w_out, preferred_element_type=jnp.float32) + b_out
    h1 = _layernorm(h + attn, g1, beta1, eps)                    # norm1
    f = jnp.maximum(
        jnp.dot(h1, w_ff1, preferred_element_type=jnp.float32) + b_ff1, 0.0)
    f = jnp.dot(f, w_ff2, preferred_element_type=jnp.float32) + b_ff2
    h2 = _layernorm(h1 + f, g2, beta2, eps)                      # norm2
    h_s[...] = h2

    # ---- single contiguous emit of the query-token rows at the last layer ---
    @pl.when(layer == last)
    def _emit():
        out_ref[...] = jnp.stack(
            [h2[b * T:b * T + nq, :] for b in range(B)], axis=0)  # (B, nq, D)


# ----------------------------- parameter setup ------------------------------

def init_params(key, input_dim, latent_dim, nhead, num_layers, dim_ff,
                num_query):
    def nrm(k, shape, scale=0.05):
        return scale * jax.random.normal(k, shape, dtype=jnp.float32)

    keys = jax.random.split(key, 3 + num_layers)
    params = {
        # stored input-major so kernels compute x @ W
        "w_in": nrm(keys[0], (input_dim, latent_dim)),
        "b_in": nrm(keys[1], (latent_dim,)),
        "query_tokens": jax.random.normal(keys[2], (num_query, 1, latent_dim),
                                          dtype=jnp.float32),
        "layers": [],
    }
    for l in range(num_layers):
        lk = jax.random.split(keys[3 + l], 8)
        D, F = latent_dim, dim_ff
        params["layers"].append({
            "w_qkv": nrm(lk[0], (D, 3 * D)),
            "b_qkv": nrm(lk[1], (3 * D,)),
            "w_out": nrm(lk[2], (D, D)),
            "b_out": nrm(lk[3], (D,)),
            "w_ff1": nrm(lk[4], (D, F)),
            "b_ff1": nrm(lk[5], (F,)),
            "w_ff2": nrm(lk[6], (F, D)),
            "b_ff2": nrm(lk[7], (D,)),
            "g1": jnp.ones((D,), jnp.float32),
            "beta1": jnp.zeros((D,), jnp.float32),
            "g2": jnp.ones((D,), jnp.float32),
            "beta2": jnp.zeros((D,), jnp.float32),
        })
    return params


# ------------------------------- forward pass --------------------------------

@functools.partial(jax.jit, static_argnames=("latent_dim", "nhead"))
def encoder_forward(src, subject_embedded, params, *, latent_dim, nhead):
    B, S_src, input_dim = src.shape
    S_subj = subject_embedded.shape[1]
    D = latent_dim
    H = nhead
    dh = D // H
    nq = params["query_tokens"].shape[0]
    T = nq + S_subj + S_src
    L = len(params["layers"])
    F = params["layers"][0]["w_ff1"].shape[1]
    scale = 1.0 / math.sqrt(dh)

    # PE over [subject | src] (queries get none); input-projection bias folded
    # into the PE rows that cover the src positions.
    pe = sinusoidal_pe(S_subj + S_src, D)
    pe = pe.at[S_subj:].add(params["b_in"][None, :])

    src2d = src.reshape(B * S_src, input_dim)
    qtok = params["query_tokens"].reshape(nq, D)

    # stack per-layer params; fold 1/sqrt(dh) into the q projection (W and b)
    def stk(name):
        return jnp.stack([lp[name] for lp in params["layers"]], axis=0)

    w_qkv = stk("w_qkv").at[:, :, :D].multiply(scale)            # (L, D, 3D)
    w_out = stk("w_out")                                         # (L, D, D)
    w_ff1 = stk("w_ff1")                                         # (L, D, F)
    w_ff2 = stk("w_ff2")                                         # (L, F, D)

    # pack the 8 small per-layer vectors into ONE per-layer (8, Wmax) stream
    Wmax = max(3 * D, F, D)

    def pack_layer_vecs(lp):
        rows = [lp["b_qkv"].at[:D].multiply(scale), lp["b_out"],
                lp["b_ff1"], lp["b_ff2"],
                lp["g1"], lp["beta1"], lp["g2"], lp["beta2"]]
        return jnp.stack([jnp.pad(r, (0, Wmax - r.shape[0])) for r in rows],
                         axis=0)

    vecs = jnp.stack([pack_layer_vecs(lp) for lp in params["layers"]], axis=0)

    const2d = lambda r, c: pl.BlockSpec((r, c), lambda l: (0, 0))
    const3d = lambda a, b, c: pl.BlockSpec((a, b, c), lambda l: (0, 0, 0))
    per_layer = lambda r, c: pl.BlockSpec((None, r, c), lambda l: (l, 0, 0))

    out = pl.pallas_call(
        functools.partial(_encoder_kernel, B=B, T=T, nq=nq, S_subj=S_subj,
                          S_src=S_src, H=H, dh=dh, F=F, eps=1e-5),
        out_shape=jax.ShapeDtypeStruct((B, nq, D), jnp.float32),
        grid=(L,),
        in_specs=[
            const2d(B * S_src, input_dim),      # src (flattened)
            const2d(input_dim, D),              # w_in
            const2d(S_subj + S_src, D),         # pe (+ b_in on src rows)
            const2d(nq, D),                     # query tokens
            const3d(B, S_subj, D),              # subject_embedded
            per_layer(D, 3 * D),                # w_qkv
            per_layer(D, D),                    # w_out
            per_layer(D, F),                    # w_ff1
            per_layer(F, D),                    # w_ff2
            per_layer(8, Wmax),                 # packed biases / LN params
        ],
        out_specs=pl.BlockSpec((B, nq, D), lambda l: (0, 0, 0)),
        scratch_shapes=[pltpu.VMEM((B * T, D), jnp.float32)],
        compiler_params=pltpu.CompilerParams(
            dimension_semantics=("arbitrary",)),   # layer loop is sequential
    )(src2d, params["w_in"], pe, qtok, subject_embedded,
      w_qkv, w_out, w_ff1, w_ff2, vecs)

    # (B, nq, D) -> (nq, B, D), matching `memory[:num_query_tokens]` (tiny op)
    return jnp.transpose(out, (1, 0, 2))


# ----------------------------------- main ------------------------------------

if __name__ == "__main__":
    # module hyper-parameters (small)
    input_dim = 16
    latent_dim = 32
    nhead = 4
    num_encoder_layers = 2
    dim_feedforward = 64
    num_query_tokens = 4

    # input shapes
    B, S_src, S_subj = 2, 8, 2

    key = jax.random.PRNGKey(0)
    k_src, k_subj, k_par = jax.random.split(key, 3)
    src = jax.random.normal(k_src, (B, S_src, input_dim), dtype=jnp.float32)
    subject_embedded = jax.random.normal(k_subj, (B, S_subj, latent_dim),
                                         dtype=jnp.float32)

    params = init_params(k_par, input_dim, latent_dim, nhead,
                         num_encoder_layers, dim_feedforward, num_query_tokens)

    out = encoder_forward(src, subject_embedded, params,
                          latent_dim=latent_dim, nhead=nhead)
    out = jax.block_until_ready(out)
    assert out.shape == (num_query_tokens, B, latent_dim), out.shape
    assert bool(jnp.all(jnp.isfinite(out)))
    print("KERNEL_OK")
</pallas_src>

<mosaic_0001>
module attributes {stable_mosaic.version = 11 : i64} {
  func.func @_encoder_kernel(%arg0: i32, %arg1: memref<16x16xf32, #tpu.memory_space<vmem>>, %arg2: memref<16x32xf32, #tpu.memory_space<vmem>>, %arg3: memref<10x32xf32, #tpu.memory_space<vmem>>, %arg4: memref<4x32xf32, #tpu.memory_space<vmem>>, %arg5: memref<2x2x32xf32, #tpu.memory_space<vmem>>, %arg6: memref<1x32x96xf32, #tpu.memory_space<vmem>>, %arg7: memref<1x32x32xf32, #tpu.memory_space<vmem>>, %arg8: memref<1x32x64xf32, #tpu.memory_space<vmem>>, %arg9: memref<1x64x32xf32, #tpu.memory_space<vmem>>, %arg10: memref<1x8x96xf32, #tpu.memory_space<vmem>>, %arg11: memref<2x4x32xf32, #tpu.memory_space<vmem>>, %arg12: memref<28x32xf32, #tpu.memory_space<vmem>>) attributes {dimension_semantics = [#tpu.dimension_semantics<arbitrary>], iteration_bounds = array<i64: 2>, scalar_prefetch = 0 : i64, scratch_operands = 1 : i64, tpu.core_type = #tpu.core_type<tc>, window_params = [{pipeline_mode = #tpu.pipeline_mode<synchronous>, transform_indices = @transform_0, window_bounds = array<i64: 16, 16>}, {pipeline_mode = #tpu.pipeline_mode<synchronous>, transform_indices = @transform_1, window_bounds = array<i64: 16, 32>}, {pipeline_mode = #tpu.pipeline_mode<synchronous>, transform_indices = @transform_2, window_bounds = array<i64: 10, 32>}, {pipeline_mode = #tpu.pipeline_mode<synchronous>, transform_indices = @transform_3, window_bounds = array<i64: 4, 32>}, {pipeline_mode = #tpu.pipeline_mode<synchronous>, transform_indices = @transform_4, window_bounds = array<i64: 2, 2, 32>}, {transform_indices = @transform_5, window_bounds = array<i64: 1, 32, 96>}, {transform_indices = @transform_6, window_bounds = array<i64: 1, 32, 32>}, {transform_indices = @transform_7, window_bounds = array<i64: 1, 32, 64>}, {transform_indices = @transform_8, window_bounds = array<i64: 1, 64, 32>}, {transform_indices = @transform_9, window_bounds = array<i64: 1, 8, 96>}, {pipeline_mode = #tpu.pipeline_mode<synchronous>, transform_indices = @transform_10, window_bounds = array<i64: 2, 4, 32>}]} {
    %c0_i32 = arith.constant 0 : i32
    %0 = arith.cmpi eq, %arg0, %c0_i32 : i32
    %1 = arith.extui %0 : i1 to i32
    %c0_i32_0 = arith.constant 0 : i32
    %2 = arith.cmpi ne, %1, %c0_i32_0 : i32
    scf.if %2 {
      %c0_66 = arith.constant 0 : index
      %c0_67 = arith.constant 0 : index
      %207 = vector.load %arg1[%c0_66, %c0_67] : memref<16x16xf32, #tpu.memory_space<vmem>>, vector<16x16xf32>
      %c0_68 = arith.constant 0 : index
      %c0_69 = arith.constant 0 : index
      %208 = vector.load %arg2[%c0_68, %c0_69] : memref<16x32xf32, #tpu.memory_space<vmem>>, vector<16x32xf32>
      %cst_70 = arith.constant dense<0.000000e+00> : vector<16x32xf32>
      %209 = tpu.matmul %207, %208, %cst_70 {dimension_numbers = #tpu.dot_dimension_numbers<[1], [0], [0], [1], [0, 0, 1, 1], [], []>} : vector<16x16xf32>, vector<16x32xf32>, vector<16x32xf32> -> vector<16x32xf32>
      %c0_71 = arith.constant 0 : index
      %c0_72 = arith.constant 0 : index
      %210 = vector.load %arg3[%c0_71, %c0_72] : memref<10x32xf32, #tpu.memory_space<vmem>>, vector<2x32xf32>
      %c2 = arith.constant 2 : index
      %c0_73 = arith.constant 0 : index
      %211 = vector.load %arg3[%c2, %c0_73] : memref<10x32xf32, #tpu.memory_space<vmem>>, vector<8x32xf32>
      %c0_74 = arith.constant 0 : index
      %c0_75 = arith.constant 0 : index
      %212 = vector.load %arg4[%c0_74, %c0_75] : memref<4x32xf32, #tpu.memory_space<vmem>>, vector<4x32xf32>
      %c0_76 = arith.constant 0 : index
      %c0_77 = arith.constant 0 : index
      %213 = vector.load %arg12[%c0_76, %c0_77] : memref<28x32xf32, #tpu.memory_space<vmem>>, vector<4x32xf32>
      tpu.vector_store %arg12[%c0_76, %c0_77], %212 {strides = array<i32>} : memref<28x32xf32, #tpu.memory_space<vmem>>, vector<4x32xf32>,
      %c0_78 = arith.constant 0 : index
      %c0_79 = arith.constant 0 : index
      %c0_80 = arith.constant 0 : index
      %214 = vector.load %arg5[%c0_78, %c0_79, %c0_80] : memref<2x2x32xf32, #tpu.memory_space<vmem>>, vector<1x2x32xf32>
      %215 = vector.shape_cast %214 : vector<1x2x32xf32> to vector<2x32xf32>
      %216 = arith.addf %215, %210 : vector<2x32xf32>
      %c4 = arith.constant 4 : index
      %c0_81 = arith.constant 0 : index
      %217 = vector.load %arg12[%c4, %c0_81] : memref<28x32xf32, #tpu.memory_space<vmem>>, vector<2x32xf32>
      tpu.vector_store %arg12[%c4, %c0_81], %216 {strides = array<i32>} : memref<28x32xf32, #tpu.memory_space<vmem>>, vector<2x32xf32>,
      %218 = vector.extract_strided_slice %209 {offsets = [0, 0], sizes = [8, 32], strides = [1, 1]} : vector<16x32xf32> to vector<8x32xf32>
      %219 = arith.addf %218, %211 : vector<8x32xf32>
      %c6 = arith.constant 6 : index
      %c0_82 = arith.constant 0 : index
      %220 = vector.load %arg12[%c6, %c0_82] : memref<28x32xf32, #tpu.memory_space<vmem>>, vector<8x32xf32>
      tpu.vector_store %arg12[%c6, %c0_82], %219 {strides = array<i32>} : memref<28x32xf32, #tpu.memory_space<vmem>>, vector<8x32xf32>,
      %c14 = arith.constant 14 : index
      %c0_83 = arith.constant 0 : index
      %221 = vector.load %arg12[%c14, %c0_83] : memref<28x32xf32, #tpu.memory_space<vmem>>, vector<4x32xf32>
      tpu.vector_store %arg12[%c14, %c0_83], %212 {strides = array<i32>} : memref<28x32xf32, #tpu.memory_space<vmem>>, vector<4x32xf32>,
      %c1 = arith.constant 1 : index
      %c0_84 = arith.constant 0 : index
      %c0_85 = arith.constant 0 : index
      %222 = vector.load %arg5[%c1, %c0_84, %c0_85] : memref<2x2x32xf32, #tpu.memory_space<vmem>>, vector<1x2x32xf32>
      %223 = vector.shape_cast %222 : vector<1x2x32xf32> to vector<2x32xf32>
      %224 = arith.addf %223, %210 : vector<2x32xf32>
      %c18 = arith.constant 18 : index
      %c0_86 = arith.constant 0 : index
      %225 = vector.load %arg12[%c18, %c0_86] : memref<28x32xf32, #tpu.memory_space<vmem>>, vector<2x32xf32>
      tpu.vector_store %arg12[%c18, %c0_86], %224 {strides = array<i32>} : memref<28x32xf32, #tpu.memory_space<vmem>>, vector<2x32xf32>,
      %226 = vector.extract_strided_slice %209 {offsets = [8, 0], sizes = [8, 32], strides = [1, 1]} : vector<16x32xf32> to vector<8x32xf32>
      %227 = arith.addf %226, %211 : vector<8x32xf32>
      %c20 = arith.constant 20 : index
      %c0_87 = arith.constant 0 : index
      %228 = vector.load %arg12[%c20, %c0_87] : memref<28x32xf32, #tpu.memory_space<vmem>>, vector<8x32xf32>
      tpu.vector_store %arg12[%c20, %c0_87], %227 {strides = array<i32>} : memref<28x32xf32, #tpu.memory_space<vmem>>, vector<8x32xf32>,
    } else {
    }
    %c0 = arith.constant 0 : index
    %c0_1 = arith.constant 0 : index
    %c0_2 = arith.constant 0 : index
    %3 = vector.load %arg6[%c0, %c0_1, %c0_2] : memref<1x32x96xf32, #tpu.memory_space<vmem>>, vector<1x32x96xf32>
    %4 = vector.shape_cast %3 : vector<1x32x96xf32> to vector<32x96xf32>
    %c0_3 = arith.constant 0 : index
    %c0_4 = arith.constant 0 : index
    %c0_5 = arith.constant 0 : index
    %5 = vector.load %arg7[%c0_3, %c0_4, %c0_5] : memref<1x32x32xf32, #tpu.memory_space<vmem>>, vector<1x32x32xf32>
    %6 = vector.shape_cast %5 : vector<1x32x32xf32> to vector<32x32xf32>
    %c0_6 = arith.constant 0 : index
    %c0_7 = arith.constant 0 : index
    %c0_8 = arith.constant 0 : index
    %7 = vector.load %arg8[%c0_6, %c0_7, %c0_8] : memref<1x32x64xf32, #tpu.memory_space<vmem>>, vector<1x32x64xf32>
    %8 = vector.shape_cast %7 : vector<1x32x64xf32> to vector<32x64xf32>
    %c0_9 = arith.constant 0 : index
    %c0_10 = arith.constant 0 : index
    %c0_11 = arith.constant 0 : index
    %9 = vector.load %arg9[%c0_9, %c0_10, %c0_11] : memref<1x64x32xf32, #tpu.memory_space<vmem>>, vector<1x64x32xf32>
    %10 = vector.shape_cast %9 : vector<1x64x32xf32> to vector<64x32xf32>
    %c0_12 = arith.constant 0 : index
    %c0_13 = arith.constant 0 : index
    %c0_14 = arith.constant 0 : index
    %11 = vector.load %arg10[%c0_12, %c0_13, %c0_14] : memref<1x8x96xf32, #tpu.memory_space<vmem>>, vector<1x8x96xf32>
    %12 = vector.shape_cast %11 : vector<1x8x96xf32> to vector<8x96xf32>
    %13 = vector.extract_strided_slice %12 {offsets = [0, 0], sizes = [1, 96], strides = [1, 1]} : vector<8x96xf32> to vector<1x96xf32>
    %14 = vector.extract_strided_slice %12 {offsets = [1, 0], sizes = [1, 32], strides = [1, 1]} : vector<8x96xf32> to vector<1x32xf32>
    %15 = vector.extract_strided_slice %12 {offsets = [2, 0], sizes = [1, 64], strides = [1, 1]} : vector<8x96xf32> to vector<1x64xf32>
    %16 = vector.extract_strided_slice %12 {offsets = [3, 0], sizes = [1, 32], strides = [1, 1]} : vector<8x96xf32> to vector<1x32xf32>
    %17 = vector.extract_strided_slice %12 {offsets = [4, 0], sizes = [1, 32], strides = [1, 1]} : vector<8x96xf32> to vector<1x32xf32>
    %18 = vector.extract_strided_slice %12 {offsets = [5, 0], sizes = [1, 32], strides = [1, 1]} : vector<8x96xf32> to vector<1x32xf32>
    %19 = vector.extract_strided_slice %12 {offsets = [6, 0], sizes = [1, 32], strides = [1, 1]} : vector<8x96xf32> to vector<1x32xf32>
    %20 = vector.extract_strided_slice %12 {offsets = [7, 0], sizes = [1, 32], strides = [1, 1]} : vector<8x96xf32> to vector<1x32xf32>
    %c0_15 = arith.constant 0 : index
    %c0_16 = arith.constant 0 : index
    %21 = vector.load %arg12[%c0_15, %c0_16] : memref<28x32xf32, #tpu.memory_space<vmem>>, vector<28x32xf32>
    %cst = arith.constant dense<0.000000e+00> : vector<28x96xf32>
    %22 = tpu.matmul %21, %4, %cst {dimension_numbers = #tpu.dot_dimension_numbers<[1], [0], [0], [1], [0, 0, 1, 1], [], []>} : vector<28x32xf32>, vector<32x96xf32>, vector<28x96xf32> -> vector<28x96xf32>
    %23 = vector.broadcast %13 : vector<1x96xf32> to vector<28x96xf32>
    %24 = arith.addf %22, %23 : vector<28x96xf32>
    %25 = vector.extract_strided_slice %24 {offsets = [0, 0], sizes = [14, 96], strides = [1, 1]} : vector<28x96xf32> to vector<14x96xf32>
    %26 = vector.extract_strided_slice %25 {offsets = [0, 0], sizes = [14, 8], strides = [1, 1]} : vector<14x96xf32> to vector<14x8xf32>
    %27 = vector.extract_strided_slice %25 {offsets = [0, 32], sizes = [14, 8], strides = [1, 1]} : vector<14x96xf32> to vector<14x8xf32>
    %28 = vector.extract_strided_slice %25 {offsets = [0, 64], sizes = [14, 8], strides = [1, 1]} : vector<14x96xf32> to vector<14x8xf32>
    %cst_17 = arith.constant dense<0.000000e+00> : vector<14x14xf32>
    %29 = tpu.matmul %26, %27, %cst_17 {dimension_numbers = #tpu.dot_dimension_numbers<[1], [1], [0], [0], [0, 0, 1, 0], [], []>} : vector<14x8xf32>, vector<14x8xf32>, vector<14x14xf32> -> vector<14x14xf32>
    %cst_18 = arith.constant dense<0xFF800000> : vector<14xf32>
    %30 = vector.multi_reduction <maximumf>, %29, %cst_18 [1] : vector<14x14xf32> to vector<14xf32>
    %31 = vector.shape_cast %30 : vector<14xf32> to vector<14x1xf32>
    %32 = vector.broadcast %31 : vector<14x1xf32> to vector<14x14xf32>
    %33 = arith.subf %29, %32 : vector<14x14xf32>
    %34 = math.exp %33 : vector<14x14xf32>
    %cst_19 = arith.constant dense<0.000000e+00> : vector<14xf32>
    %35 = vector.multi_reduction <add>, %34, %cst_19 [1] : vector<14x14xf32> to vector<14xf32>
    %36 = vector.shape_cast %35 : vector<14xf32> to vector<14x1xf32>
    %37 = tpu.reciprocal %36 {approx = true} : vector<14x1xf32> -> vector<14x1xf32>
    %38 = vector.broadcast %37 : vector<14x1xf32> to vector<14x14xf32>
    %39 = arith.mulf %34, %38 : vector<14x14xf32>
    %cst_20 = arith.constant dense<0.000000e+00> : vector<14x8xf32>
    %40 = tpu.matmul %39, %28, %cst_20 {dimension_numbers = #tpu.dot_dimension_numbers<[1], [0], [0], [1], [0, 0, 1, 1], [], []>} : vector<14x14xf32>, vector<14x8xf32>, vector<14x8xf32> -> vector<14x8xf32>
    %41 = vector.extract_strided_slice %25 {offsets = [0, 8], sizes = [14, 8], strides = [1, 1]} : vector<14x96xf32> to vector<14x8xf32>
    %42 = vector.extract_strided_slice %25 {offsets = [0, 40], sizes = [14, 8], strides = [1, 1]} : vector<14x96xf32> to vector<14x8xf32>
    %43 = vector.extract_strided_slice %25 {offsets = [0, 72], sizes = [14, 8], strides = [1, 1]} : vector<14x96xf32> to vector<14x8xf32>
    %cst_21 = arith.constant dense<0.000000e+00> : vector<14x14xf32>
    %44 = tpu.matmul %41, %42, %cst_21 {dimension_numbers = #tpu.dot_dimension_numbers<[1], [1], [0], [0], [0, 0, 1, 0], [], []>} : vector<14x8xf32>, vector<14x8xf32>, vector<14x14xf32> -> vector<14x14xf32>
    %cst_22 = arith.constant dense<0xFF800000> : vector<14xf32>
    %45 = vector.multi_reduction <maximumf>, %44, %cst_22 [1] : vector<14x14xf32> to vector<14xf32>
    %46 = vector.shape_cast %45 : vector<14xf32> to vector<14x1xf32>
    %47 = vector.broadcast %46 : vector<14x1xf32> to vector<14x14xf32>
    %48 = arith.subf %44, %47 : vector<14x14xf32>
    %49 = math.exp %48 : vector<14x14xf32>
    %cst_23 = arith.constant dense<0.000000e+00> : vector<14xf32>
    %50 = vector.multi_reduction <add>, %49, %cst_23 [1] : vector<14x14xf32> to vector<14xf32>
    %51 = vector.shape_cast %50 : vector<14xf32> to vector<14x1xf32>
    %52 = tpu.reciprocal %51 {approx = true} : vector<14x1xf32> -> vector<14x1xf32>
    %53 = vector.broadcast %52 : vector<14x1xf32> to vector<14x14xf32>
    %54 = arith.mulf %49, %53 : vector<14x14xf32>
    %cst_24 = arith.constant dense<0.000000e+00> : vector<14x8xf32>
    %55 = tpu.matmul %54, %43, %cst_24 {dimension_numbers = #tpu.dot_dimension_numbers<[1], [0], [0], [1], [0, 0, 1, 1], [], []>} : vector<14x14xf32>, vector<14x8xf32>, vector<14x8xf32> -> vector<14x8xf32>
    %56 = vector.extract_strided_slice %25 {offsets = [0, 16], sizes = [14, 8], strides = [1, 1]} : vector<14x96xf32> to vector<14x8xf32>
    %57 = vector.extract_strided_slice %25 {offsets = [0, 48], sizes = [14, 8], strides = [1, 1]} : vector<14x96xf32> to vector<14x8xf32>
    %58 = vector.extract_strided_slice %25 {offsets = [0, 80], sizes = [14, 8], strides = [1, 1]} : vector<14x96xf32> to vector<14x8xf32>
    %cst_25 = arith.constant dense<0.000000e+00> : vector<14x14xf32>
    %59 = tpu.matmul %56, %57, %cst_25 {dimension_numbers = #tpu.dot_dimension_numbers<[1], [1], [0], [0], [0, 0, 1, 0], [], []>} : vector<14x8xf32>, vector<14x8xf32>, vector<14x14xf32> -> vector<14x14xf32>
    %cst_26 = arith.constant dense<0xFF800000> : vector<14xf32>
    %60 = vector.multi_reduction <maximumf>, %59, %cst_26 [1] : vector<14x14xf32> to vector<14xf32>
    %61 = vector.shape_cast %60 : vector<14xf32> to vector<14x1xf32>
    %62 = vector.broadcast %61 : vector<14x1xf32> to vector<14x14xf32>
    %63 = arith.subf %59, %62 : vector<14x14xf32>
    %64 = math.exp %63 : vector<14x14xf32>
    %cst_27 = arith.constant dense<0.000000e+00> : vector<14xf32>
    %65 = vector.multi_reduction <add>, %64, %cst_27 [1] : vector<14x14xf32> to vector<14xf32>
    %66 = vector.shape_cast %65 : vector<14xf32> to vector<14x1xf32>
    %67 = tpu.reciprocal %66 {approx = true} : vector<14x1xf32> -> vector<14x1xf32>
    %68 = vector.broadcast %67 : vector<14x1xf32> to vector<14x14xf32>
    %69 = arith.mulf %64, %68 : vector<14x14xf32>
    %cst_28 = arith.constant dense<0.000000e+00> : vector<14x8xf32>
    %70 = tpu.matmul %69, %58, %cst_28 {dimension_numbers = #tpu.dot_dimension_numbers<[1], [0], [0], [1], [0, 0, 1, 1], [], []>} : vector<14x14xf32>, vector<14x8xf32>, vector<14x8xf32> -> vector<14x8xf32>
    %71 = vector.extract_strided_slice %25 {offsets = [0, 24], sizes = [14, 8], strides = [1, 1]} : vector<14x96xf32> to vector<14x8xf32>
    %72 = vector.extract_strided_slice %25 {offsets = [0, 56], sizes = [14, 8], strides = [1, 1]} : vector<14x96xf32> to vector<14x8xf32>
    %73 = vector.extract_strided_slice %25 {offsets = [0, 88], sizes = [14, 8], strides = [1, 1]} : vector<14x96xf32> to vector<14x8xf32>
    %cst_29 = arith.constant dense<0.000000e+00> : vector<14x14xf32>
    %74 = tpu.matmul %71, %72, %cst_29 {dimension_numbers = #tpu.dot_dimension_numbers<[1], [1], [0], [0], [0, 0, 1, 0], [], []>} : vector<14x8xf32>, vector<14x8xf32>, vector<14x14xf32> -> vector<14x14xf32>
    %cst_30 = arith.constant dense<0xFF800000> : vector<14xf32>
    %75 = vector.multi_reduction <maximumf>, %74, %cst_30 [1] : vector<14x14xf32> to vector<14xf32>
    %76 = vector.shape_cast %75 : vector<14xf32> to vector<14x1xf32>
    %77 = vector.broadcast %76 : vector<14x1xf32> to vector<14x14xf32>
    %78 = arith.subf %74, %77 : vector<14x14xf32>
    %79 = math.exp %78 : vector<14x14xf32>
    %cst_31 = arith.constant dense<0.000000e+00> : vector<14xf32>
    %80 = vector.multi_reduction <add>, %79, %cst_31 [1] : vector<14x14xf32> to vector<14xf32>
    %81 = vector.shape_cast %80 : vector<14xf32> to vector<14x1xf32>
    %82 = tpu.reciprocal %81 {approx = true} : vector<14x1xf32> -> vector<14x1xf32>
    %83 = vector.broadcast %82 : vector<14x1xf32> to vector<14x14xf32>
    %84 = arith.mulf %79, %83 : vector<14x14xf32>
    %cst_32 = arith.constant dense<0.000000e+00> : vector<14x8xf32>
    %85 = tpu.matmul %84, %73, %cst_32 {dimension_numbers = #tpu.dot_dimension_numbers<[1], [0], [0], [1], [0, 0, 1, 1], [], []>} : vector<14x14xf32>, vector<14x8xf32>, vector<14x8xf32> -> vector<14x8xf32>
    %86 = tpu.concatenate %40, %55, %70, %85 in 1 : vector<14x8xf32>, vector<14x8xf32>, vector<14x8xf32>, vector<14x8xf32> -> vector<14x32xf32>
    %87 = vector.extract_strided_slice %24 {offsets = [14, 0], sizes = [14, 96], strides = [1, 1]} : vector<28x96xf32> to vector<14x96xf32>
    %88 = vector.extract_strided_slice %87 {offsets = [0, 0], sizes = [14, 8], strides = [1, 1]} : vector<14x96xf32> to vector<14x8xf32>
    %89 = vector.extract_strided_slice %87 {offsets = [0, 32], sizes = [14, 8], strides = [1, 1]} : vector<14x96xf32> to vector<14x8xf32>
    %90 = vector.extract_strided_slice %87 {offsets = [0, 64], sizes = [14, 8], strides = [1, 1]} : vector<14x96xf32> to vector<14x8xf32>
    %cst_33 = arith.constant dense<0.000000e+00> : vector<14x14xf32>
    %91 = tpu.matmul %88, %89, %cst_33 {dimension_numbers = #tpu.dot_dimension_numbers<[1], [1], [0], [0], [0, 0, 1, 0], [], []>} : vector<14x8xf32>, vector<14x8xf32>, vector<14x14xf32> -> vector<14x14xf32>
    %cst_34 = arith.constant dense<0xFF800000> : vector<14xf32>
    %92 = vector.multi_reduction <maximumf>, %91, %cst_34 [1] : vector<14x14xf32> to vector<14xf32>
    %93 = vector.shape_cast %92 : vector<14xf32> to vector<14x1xf32>
    %94 = vector.broadcast %93 : vector<14x1xf32> to vector<14x14xf32>
    %95 = arith.subf %91, %94 : vector<14x14xf32>
    %96 = math.exp %95 : vector<14x14xf32>
    %cst_35 = arith.constant dense<0.000000e+00> : vector<14xf32>
    %97 = vector.multi_reduction <add>, %96, %cst_35 [1] : vector<14x14xf32> to vector<14xf32>
    %98 = vector.shape_cast %97 : vector<14xf32> to vector<14x1xf32>
    %99 = tpu.reciprocal %98 {approx = true} : vector<14x1xf32> -> vector<14x1xf32>
    %100 = vector.broadcast %99 : vector<14x1xf32> to vector<14x14xf32>
    %101 = arith.mulf %96, %100 : vector<14x14xf32>
    %cst_36 = arith.constant dense<0.000000e+00> : vector<14x8xf32>
    %102 = tpu.matmul %101, %90, %cst_36 {dimension_numbers = #tpu.dot_dimension_numbers<[1], [0], [0], [1], [0, 0, 1, 1], [], []>} : vector<14x14xf32>, vector<14x8xf32>, vector<14x8xf32> -> vector<14x8xf32>
    %103 = vector.extract_strided_slice %87 {offsets = [0, 8], sizes = [14, 8], strides = [1, 1]} : vector<14x96xf32> to vector<14x8xf32>
    %104 = vector.extract_strided_slice %87 {offsets = [0, 40], sizes = [14, 8], strides = [1, 1]} : vector<14x96xf32> to vector<14x8xf32>
    %105 = vector.extract_strided_slice %87 {offsets = [0, 72], sizes = [14, 8], strides = [1, 1]} : vector<14x96xf32> to vector<14x8xf32>
    %cst_37 = arith.constant dense<0.000000e+00> : vector<14x14xf32>
    %106 = tpu.matmul %103, %104, %cst_37 {dimension_numbers = #tpu.dot_dimension_numbers<[1], [1], [0], [0], [0, 0, 1, 0], [], []>} : vector<14x8xf32>, vector<14x8xf32>, vector<14x14xf32> -> vector<14x14xf32>
    %cst_38 = arith.constant dense<0xFF800000> : vector<14xf32>
    %107 = vector.multi_reduction <maximumf>, %106, %cst_38 [1] : vector<14x14xf32> to vector<14xf32>
    %108 = vector.shape_cast %107 : vector<14xf32> to vector<14x1xf32>
    %109 = vector.broadcast %108 : vector<14x1xf32> to vector<14x14xf32>
    %110 = arith.subf %106, %109 : vector<14x14xf32>
    %111 = math.exp %110 : vector<14x14xf32>
    %cst_39 = arith.constant dense<0.000000e+00> : vector<14xf32>
    %112 = vector.multi_reduction <add>, %111, %cst_39 [1] : vector<14x14xf32> to vector<14xf32>
    %113 = vector.shape_cast %112 : vector<14xf32> to vector<14x1xf32>
    %114 = tpu.reciprocal %113 {approx = true} : vector<14x1xf32> -> vector<14x1xf32>
    %115 = vector.broadcast %114 : vector<14x1xf32> to vector<14x14xf32>
    %116 = arith.mulf %111, %115 : vector<14x14xf32>
    %cst_40 = arith.constant dense<0.000000e+00> : vector<14x8xf32>
    %117 = tpu.matmul %116, %105, %cst_40 {dimension_numbers = #tpu.dot_dimension_numbers<[1], [0], [0], [1], [0, 0, 1, 1], [], []>} : vector<14x14xf32>, vector<14x8xf32>, vector<14x8xf32> -> vector<14x8xf32>
    %118 = vector.extract_strided_slice %87 {offsets = [0, 16], sizes = [14, 8], strides = [1, 1]} : vector<14x96xf32> to vector<14x8xf32>
    %119 = vector.extract_strided_slice %87 {offsets = [0, 48], sizes = [14, 8], strides = [1, 1]} : vector<14x96xf32> to vector<14x8xf32>
    %120 = vector.extract_strided_slice %87 {offsets = [0, 80], sizes = [14, 8], strides = [1, 1]} : vector<14x96xf32> to vector<14x8xf32>
    %cst_41 = arith.constant dense<0.000000e+00> : vector<14x14xf32>
    %121 = tpu.matmul %118, %119, %cst_41 {dimension_numbers = #tpu.dot_dimension_numbers<[1], [1], [0], [0], [0, 0, 1, 0], [], []>} : vector<14x8xf32>, vector<14x8xf32>, vector<14x14xf32> -> vector<14x14xf32>
    %cst_42 = arith.constant dense<0xFF800000> : vector<14xf32>
    %122 = vector.multi_reduction <maximumf>, %121, %cst_42 [1] : vector<14x14xf32> to vector<14xf32>
    %123 = vector.shape_cast %122 : vector<14xf32> to vector<14x1xf32>
    %124 = vector.broadcast %123 : vector<14x1xf32> to vector<14x14xf32>
    %125 = arith.subf %121, %124 : vector<14x14xf32>
    %126 = math.exp %125 : vector<14x14xf32>
    %cst_43 = arith.constant dense<0.000000e+00> : vector<14xf32>
    %127 = vector.multi_reduction <add>, %126, %cst_43 [1] : vector<14x14xf32> to vector<14xf32>
    %128 = vector.shape_cast %127 : vector<14xf32> to vector<14x1xf32>
    %129 = tpu.reciprocal %128 {approx = true} : vector<14x1xf32> -> vector<14x1xf32>
    %130 = vector.broadcast %129 : vector<14x1xf32> to vector<14x14xf32>
    %131 = arith.mulf %126, %130 : vector<14x14xf32>
    %cst_44 = arith.constant dense<0.000000e+00> : vector<14x8xf32>
    %132 = tpu.matmul %131, %120, %cst_44 {dimension_numbers = #tpu.dot_dimension_numbers<[1], [0], [0], [1], [0, 0, 1, 1], [], []>} : vector<14x14xf32>, vector<14x8xf32>, vector<14x8xf32> -> vector<14x8xf32>
    %133 = vector.extract_strided_slice %87 {offsets = [0, 24], sizes = [14, 8], strides = [1, 1]} : vector<14x96xf32> to vector<14x8xf32>
    %134 = vector.extract_strided_slice %87 {offsets = [0, 56], sizes = [14, 8], strides = [1, 1]} : vector<14x96xf32> to vector<14x8xf32>
    %135 = vector.extract_strided_slice %87 {offsets = [0, 88], sizes = [14, 8], strides = [1, 1]} : vector<14x96xf32> to vector<14x8xf32>
    %cst_45 = arith.constant dense<0.000000e+00> : vector<14x14xf32>
    %136 = tpu.matmul %133, %134, %cst_45 {dimension_numbers = #tpu.dot_dimension_numbers<[1], [1], [0], [0], [0, 0, 1, 0], [], []>} : vector<14x8xf32>, vector<14x8xf32>, vector<14x14xf32> -> vector<14x14xf32>
    %cst_46 = arith.constant dense<0xFF800000> : vector<14xf32>
    %137 = vector.multi_reduction <maximumf>, %136, %cst_46 [1] : vector<14x14xf32> to vector<14xf32>
    %138 = vector.shape_cast %137 : vector<14xf32> to vector<14x1xf32>
    %139 = vector.broadcast %138 : vector<14x1xf32> to vector<14x14xf32>
    %140 = arith.subf %136, %139 : vector<14x14xf32>
    %141 = math.exp %140 : vector<14x14xf32>
    %cst_47 = arith.constant dense<0.000000e+00> : vector<14xf32>
    %142 = vector.multi_reduction <add>, %141, %cst_47 [1] : vector<14x14xf32> to vector<14xf32>
    %143 = vector.shape_cast %142 : vector<14xf32> to vector<14x1xf32>
    %144 = tpu.reciprocal %143 {approx = true} : vector<14x1xf32> -> vector<14x1xf32>
    %145 = vector.broadcast %144 : vector<14x1xf32> to vector<14x14xf32>
    %146 = arith.mulf %141, %145 : vector<14x14xf32>
    %cst_48 = arith.constant dense<0.000000e+00> : vector<14x8xf32>
    %147 = tpu.matmul %146, %135, %cst_48 {dimension_numbers = #tpu.dot_dimension_numbers<[1], [0], [0], [1], [0, 0, 1, 1], [], []>} : vector<14x14xf32>, vector<14x8xf32>, vector<14x8xf32> -> vector<14x8xf32>
    %148 = tpu.concatenate %102, %117, %132, %147 in 1 : vector<14x8xf32>, vector<14x8xf32>, vector<14x8xf32>, vector<14x8xf32> -> vector<14x32xf32>
    %149 = tpu.concatenate %86, %148 in 0 : vector<14x32xf32>, vector<14x32xf32> -> vector<28x32xf32>
    %cst_49 = arith.constant dense<0.000000e+00> : vector<28x32xf32>
    %150 = tpu.matmul %149, %6, %cst_49 {dimension_numbers = #tpu.dot_dimension_numbers<[1], [0], [0], [1], [0, 0, 1, 1], [], []>} : vector<28x32xf32>, vector<32x32xf32>, vector<28x32xf32> -> vector<28x32xf32>
    %151 = vector.broadcast %14 : vector<1x32xf32> to vector<28x32xf32>
    %152 = arith.addf %150, %151 : vector<28x32xf32>
    %153 = arith.addf %21, %152 : vector<28x32xf32>
    %cst_50 = arith.constant dense<0.000000e+00> : vector<28xf32>
    %154 = vector.multi_reduction <add>, %153, %cst_50 [1] : vector<28x32xf32> to vector<28xf32>
    %155 = vector.shape_cast %154 : vector<28xf32> to vector<28x1xf32>
    %cst_51 = arith.constant 3.200000e+01 : f32
    %156 = vector.broadcast %cst_51 : f32 to vector<28x1xf32>
    %157 = arith.divf %155, %156 : vector<28x1xf32>
    %158 = vector.broadcast %157 : vector<28x1xf32> to vector<28x32xf32>
    %159 = arith.subf %153, %158 : vector<28x32xf32>
    %160 = arith.mulf %159, %159 : vector<28x32xf32>
    %cst_52 = arith.constant dense<0.000000e+00> : vector<28xf32>
    %161 = vector.multi_reduction <add>, %160, %cst_52 [1] : vector<28x32xf32> to vector<28xf32>
    %162 = vector.shape_cast %161 : vector<28xf32> to vector<28x1xf32>
    %cst_53 = arith.constant 3.200000e+01 : f32
    %163 = vector.broadcast %cst_53 : f32 to vector<28x1xf32>
    %164 = arith.divf %162, %163 : vector<28x1xf32>
    %cst_54 = arith.constant 9.99999974E-6 : f32
    %165 = vector.broadcast %cst_54 : f32 to vector<28x1xf32>
    %166 = arith.addf %164, %165 : vector<28x1xf32>
    %167 = math.rsqrt %166 : vector<28x1xf32>
    %168 = vector.broadcast %167 : vector<28x1xf32> to vector<28x32xf32>
    %169 = arith.mulf %159, %168 : vector<28x32xf32>
    %170 = vector.broadcast %17 : vector<1x32xf32> to vector<28x32xf32>
    %171 = arith.mulf %169, %170 : vector<28x32xf32>
    %172 = vector.broadcast %18 : vector<1x32xf32> to vector<28x32xf32>
    %173 = arith.addf %171, %172 : vector<28x32xf32>
    %cst_55 = arith.constant dense<0.000000e+00> : vector<28x64xf32>
    %174 = tpu.matmul %173, %8, %cst_55 {dimension_numbers = #tpu.dot_dimension_numbers<[1], [0], [0], [1], [0, 0, 1, 1], [], []>} : vector<28x32xf32>, vector<32x64xf32>, vector<28x64xf32> -> vector<28x64xf32>
    %175 = vector.broadcast %15 : vector<1x64xf32> to vector<28x64xf32>
    %176 = arith.addf %174, %175 : vector<28x64xf32>
    %cst_56 = arith.constant 0.000000e+00 : f32
    %177 = vector.broadcast %cst_56 : f32 to vector<28x64xf32>
    %178 = arith.maximumf %176, %177 : vector<28x64xf32>
    %cst_57 = arith.constant dense<0.000000e+00> : vector<28x32xf32>
    %179 = tpu.matmul %178, %10, %cst_57 {dimension_numbers = #tpu.dot_dimension_numbers<[1], [0], [0], [1], [0, 0, 1, 1], [], []>} : vector<28x64xf32>, vector<64x32xf32>, vector<28x32xf32> -> vector<28x32xf32>
    %180 = vector.broadcast %16 : vector<1x32xf32> to vector<28x32xf32>
    %181 = arith.addf %179, %180 : vector<28x32xf32>
    %182 = arith.addf %173, %181 : vector<28x32xf32>
    %cst_58 = arith.constant dense<0.000000e+00> : vector<28xf32>
    %183 = vector.multi_reduction <add>, %182, %cst_58 [1] : vector<28x32xf32> to vector<28xf32>
    %184 = vector.shape_cast %183 : vector<28xf32> to vector<28x1xf32>
    %cst_59 = arith.constant 3.200000e+01 : f32
    %185 = vector.broadcast %cst_59 : f32 to vector<28x1xf32>
    %186 = arith.divf %184, %185 : vector<28x1xf32>
    %187 = vector.broadcast %186 : vector<28x1xf32> to vector<28x32xf32>
    %188 = arith.subf %182, %187 : vector<28x32xf32>
    %189 = arith.mulf %188, %188 : vector<28x32xf32>
    %cst_60 = arith.constant dense<0.000000e+00> : vector<28xf32>
    %190 = vector.multi_reduction <add>, %189, %cst_60 [1] : vector<28x32xf32> to vector<28xf32>
    %191 = vector.shape_cast %190 : vector<28xf32> to vector<28x1xf32>
    %cst_61 = arith.constant 3.200000e+01 : f32
    %192 = vector.broadcast %cst_61 : f32 to vector<28x1xf32>
    %193 = arith.divf %191, %192 : vector<28x1xf32>
    %cst_62 = arith.constant 9.99999974E-6 : f32
    %194 = vector.broadcast %cst_62 : f32 to vector<28x1xf32>
    %195 = arith.addf %193, %194 : vector<28x1xf32>
    %196 = math.rsqrt %195 : vector<28x1xf32>
    %197 = vector.broadcast %196 : vector<28x1xf32> to vector<28x32xf32>
    %198 = arith.mulf %188, %197 : vector<28x32xf32>
    %199 = vector.broadcast %19 : vector<1x32xf32> to vector<28x32xf32>
    %200 = arith.mulf %198, %199 : vector<28x32xf32>
    %201 = vector.broadcast %20 : vector<1x32xf32> to vector<28x32xf32>
    %202 = arith.addf %200, %201 : vector<28x32xf32>
    %c0_63 = arith.constant 0 : index
    %c0_64 = arith.constant 0 : index
    %203 = vector.load %arg12[%c0_63, %c0_64] : memref<28x32xf32, #tpu.memory_space<vmem>>, vector<28x32xf32>
    tpu.vector_store %arg12[%c0_63, %c0_64], %202 {strides = array<i32>} : memref<28x32xf32, #tpu.memory_space<vmem>>, vector<28x32xf32>,
    %c1_i32 = arith.constant 1 : i32
    %204 = arith.cmpi eq, %arg0, %c1_i32 : i32
    %205 = arith.extui %204 : i1 to i32
    %c0_i32_65 = arith.constant 0 : i32
    %206 = arith.cmpi ne, %205, %c0_i32_65 : i32
    scf.if %206 {
      %207 = vector.extract_strided_slice %202 {offsets = [0, 0], sizes = [4, 32], strides = [1, 1]} : vector<28x32xf32> to vector<4x32xf32>
      %208 = vector.extract_strided_slice %202 {offsets = [14, 0], sizes = [4, 32], strides = [1, 1]} : vector<28x32xf32> to vector<4x32xf32>
      %209 = vector.shape_cast %207 : vector<4x32xf32> to vector<1x4x32xf32>
      %210 = vector.shape_cast %208 : vector<4x32xf32> to vector<1x4x32xf32>
      %211 = tpu.concatenate %209, %210 in 0 : vector<1x4x32xf32>, vector<1x4x32xf32> -> vector<2x4x32xf32>
      %c0_66 = arith.constant 0 : index
      %c0_67 = arith.constant 0 : index
      %c0_68 = arith.constant 0 : index
      %212 = vector.load %arg11[%c0_66, %c0_67, %c0_68] : memref<2x4x32xf32, #tpu.memory_space<vmem>>, vector<2x4x32xf32>
      tpu.vector_store %arg11[%c0_66, %c0_67, %c0_68], %211 {strides = array<i32>} : memref<2x4x32xf32, #tpu.memory_space<vmem>>, vector<2x4x32xf32>,
    } else {
    }
    return
  }
  func.func @transform_0(%arg0: i32) -> (i32, i32) {
    %c0_i32 = arith.constant 0 : i32
    %c0_i32_0 = arith.constant 0 : i32
    %c0_i32_1 = arith.constant 0 : i32
    return %c0_i32, %c0_i32_0 : i32, i32
  }
  func.func @transform_1(%arg0: i32) -> (i32, i32) {
    %c0_i32 = arith.constant 0 : i32
    %c0_i32_0 = arith.constant 0 : i32
    %c0_i32_1 = arith.constant 0 : i32
    return %c0_i32, %c0_i32_0 : i32, i32
  }
  func.func @transform_2(%arg0: i32) -> (i32, i32) {
    %c0_i32 = arith.constant 0 : i32
    %c0_i32_0 = arith.constant 0 : i32
    %c0_i32_1 = arith.constant 0 : i32
    return %c0_i32, %c0_i32_0 : i32, i32
  }
  func.func @transform_3(%arg0: i32) -> (i32, i32) {
    %c0_i32 = arith.constant 0 : i32
    %c0_i32_0 = arith.constant 0 : i32
    %c0_i32_1 = arith.constant 0 : i32
    return %c0_i32, %c0_i32_0 : i32, i32
  }
  func.func @transform_4(%arg0: i32) -> (i32, i32, i32) {
    %c0_i32 = arith.constant 0 : i32
    %c0_i32_0 = arith.constant 0 : i32
    %c0_i32_1 = arith.constant 0 : i32
    %c0_i32_2 = arith.constant 0 : i32
    return %c0_i32, %c0_i32_0, %c0_i32_1 : i32, i32, i32
  }
  func.func @transform_5(%arg0: i32) -> (i32, i32, i32) {
    %c0_i32 = arith.constant 0 : i32
    %c0_i32_0 = arith.constant 0 : i32
    %c0_i32_1 = arith.constant 0 : i32
    return %arg0, %c0_i32, %c0_i32_0 : i32, i32, i32
  }
  func.func @transform_6(%arg0: i32) -> (i32, i32, i32) {
    %c0_i32 = arith.constant 0 : i32
    %c0_i32_0 = arith.constant 0 : i32
    %c0_i32_1 = arith.constant 0 : i32
    return %arg0, %c0_i32, %c0_i32_0 : i32, i32, i32
  }
  func.func @transform_7(%arg0: i32) -> (i32, i32, i32) {
    %c0_i32 = arith.constant 0 : i32
    %c0_i32_0 = arith.constant 0 : i32
    %c0_i32_1 = arith.constant 0 : i32
    return %arg0, %c0_i32, %c0_i32_0 : i32, i32, i32
  }
  func.func @transform_8(%arg0: i32) -> (i32, i32, i32) {
    %c0_i32 = arith.constant 0 : i32
    %c0_i32_0 = arith.constant 0 : i32
    %c0_i32_1 = arith.constant 0 : i32
    return %arg0, %c0_i32, %c0_i32_0 : i32, i32, i32
  }
  func.func @transform_9(%arg0: i32) -> (i32, i32, i32) {
    %c0_i32 = arith.constant 0 : i32
    %c0_i32_0 = arith.constant 0 : i32
    %c0_i32_1 = arith.constant 0 : i32
    return %arg0, %c0_i32, %c0_i32_0 : i32, i32, i32
  }
  func.func @transform_10(%arg0: i32) -> (i32, i32, i32) {
    %c0_i32 = arith.constant 0 : i32
    %c0_i32_0 = arith.constant 0 : i32
    %c0_i32_1 = arith.constant 0 : i32
    %c0_i32_2 = arith.constant 0 : i32
    return %c0_i32, %c0_i32_0, %c0_i32_1 : i32, i32, i32
  }
}

</mosaic_0001>

<llo_original>
// kernel: encoder_forward.1
$region0: #{encoder_forward.1}
  #allocation0 [shape = 'u32[]', space=smem, size = 0x4, offset = 0x4, fixed_abs, tag = 'smem constant byte address 0x4 - core index']
  #allocation1 [shape = 'u32[144,128]{1,0:T(1,128)}', space=vmem, size = 0x12000, scoped, tag = 'internal scratch']
  #allocation2 [shape = 'f32[28,32]{1,0:T(8,128)}', space=vmem, size = 0x4000, scoped, tag = 'scratch operand']
  %s0 = inlined_call_operand.vmem [shape: f32[16,16], index: 0, kind: input, shape index: {}]
  %s1 = inlined_call_operand.vmem [shape: f32[16,32], index: 1, kind: input, shape index: {}]
  %s2 = inlined_call_operand.vmem [shape: f32[10,32], index: 2, kind: input, shape index: {}]
  %s3 = inlined_call_operand.vmem [shape: f32[4,32], index: 3, kind: input, shape index: {}]
  %s4 = inlined_call_operand.vmem [shape: f32[2,2,32], index: 4, kind: input, shape index: {}]
  %s5 = inlined_call_operand.vmem [shape: f32[2,32,96], index: 5, kind: input, shape index: {}]
  %s6 = inlined_call_operand.vmem [shape: f32[2,32,32], index: 6, kind: input, shape index: {}]
  %s7 = inlined_call_operand.vmem [shape: f32[2,32,64], index: 7, kind: input, shape index: {}]
  %s8 = inlined_call_operand.vmem [shape: f32[2,64,32], index: 8, kind: input, shape index: {}]
  %s9 = inlined_call_operand.vmem [shape: f32[2,8,96], index: 9, kind: input, shape index: {}]
  %s10 = inlined_call_operand.vmem [shape: f32[2,4,32], index: 10, kind: output, shape index: {}]
  %s11 = sld [smem:[#allocation0]]
  $region81: #{encoder_forward.1} parent=0
    _
  %s13 = ssub.s32 1, %s11
  %s14 = scalar_select 0, %s13, %s11
  loop: start=0, step=1, limit=4
  $region2: #{encoder_forward.1} parent=0 // loop_pre_header
    _
  $region3: #{encoder_forward.1} parent=0 // loop_header
    %s16 = sphi 0, %s20
    %p17 = scmp.ge.s32.totalorder %s16, 4
    %s24 = sphi 0, %s24
    %s26 = sphi 0, %s24
    %s27 = sphi 0, %s26
    %s41 = sphi 0, %s27
    %s45 = sphi 0, %s45
    %s47 = sphi 0, %s45
    %s48 = sphi 0, %s47
    %s62 = sphi 0, %s48
    %s66 = sphi 0, %s66
    %s68 = sphi 0, %s66
    %s69 = sphi 0, %s68
    %s83 = sphi 0, %s69
    %s87 = sphi 0, %s87
    %s89 = sphi 0, %s87
    %s90 = sphi 0, %s89
    %s104 = sphi 0, %s90
    %s108 = sphi 0, %s108
    %s110 = sphi 0, %s108
    %s111 = sphi 0, %s110
    %s125 = sphi 0, %s111
    %s131 = sphi 0, %s133
    %s134 = sphi 0, %s131
    %s135 = sphi 0, %s134
    %s151 = sphi 0, %s135
    %s157 = sphi 0, %s159
    %s160 = sphi 0, %s157
    %s161 = sphi 0, %s160
    %s177 = sphi 0, %s161
    %s183 = sphi 0, %s185
    %s186 = sphi 0, %s183
    %s187 = sphi 0, %s186
    %s203 = sphi 0, %s187
    %s209 = sphi 0, %s211
    %s212 = sphi 0, %s209
    %s213 = sphi 0, %s212
    %s229 = sphi 0, %s213
    %s235 = sphi 0, %s237
    %s238 = sphi 0, %s235
    %s239 = sphi 0, %s238
    %s255 = sphi 0, %s239
    %s259 = sphi 0, %s259
    %s261 = sphi 0, %s259
    %s262 = sphi 0, %s261
    %s276 = sphi 0, %s262
  $region4: #{encoder_forward.1} parent=0 // loop_header_branch
    %19 = sbr.rel (%p17) target = $region8
  $region5: #{encoder_forward.1} parent=0 // loop_body
    %s21 = ssub.s32 %s16, 1
    %s22 = ssub.s32 %s16, 2
    %s23 = sadd.s32 %s16, 1
    %s25 = sadd.s32 %s24, 1
    %p28 = scmp.eq.s32.totalorder %s16, 1
    %p29 = scmp.ne.s32.totalorder %s24, %s26
    %p30 = scmp.eq.s32.totalorder %s16, 0
    %p31 = por %p29, %p30
    %p32 = scmp.ne.s32.totalorder %s24, %s26
    %p33 = scmp.eq.s32.totalorder %s21, 1
    %p34 = por %p32, %p33
    %p35 = scmp.ne.s32.totalorder %s26, %s27
    %p36 = scmp.eq.s32.totalorder %s21, 0
    %p37 = por %p35, %p36
    %p38 = scmp.ne.s32.totalorder %s26, %s27
    %p39 = scmp.eq.s32.totalorder %s22, 1
    %p40 = por %p38, %p39
    %p42 = scmp.ne.s32.totalorder %s27, %s41
    %p43 = scmp.eq.s32.totalorder %s22, 0
    %p44 = por %p42, %p43
    %s46 = sadd.s32 %s45, 1
    %p49 = scmp.eq.s32.totalorder %s16, 1
    %p50 = scmp.ne.s32.totalorder %s45, %s47
    %p51 = scmp.eq.s32.totalorder %s16, 0
    %p52 = por %p50, %p51
    %p53 = scmp.ne.s32.totalorder %s45, %s47
    %p54 = scmp.eq.s32.totalorder %s21, 1
    %p55 = por %p53, %p54
    %p56 = scmp.ne.s32.totalorder %s47, %s48
    %p57 = scmp.eq.s32.totalorder %s21, 0
    %p58 = por %p56, %p57
    %p59 = scmp.ne.s32.totalorder %s47, %s48
    %p60 = scmp.eq.s32.totalorder %s22, 1
    %p61 = por %p59, %p60
    %p63 = scmp.ne.s32.totalorder %s48, %s62
    %p64 = scmp.eq.s32.totalorder %s22, 0
    %p65 = por %p63, %p64
    %s67 = sadd.s32 %s66, 1
    %p70 = scmp.eq.s32.totalorder %s16, 1
    %p71 = scmp.ne.s32.totalorder %s66, %s68
    %p72 = scmp.eq.s32.totalorder %s16, 0
    %p73 = por %p71, %p72
    %p74 = scmp.ne.s32.totalorder %s66, %s68
    %p75 = scmp.eq.s32.totalorder %s21, 1
    %p76 = por %p74, %p75
    %p77 = scmp.ne.s32.totalorder %s68, %s69
    %p78 = scmp.eq.s32.totalorder %s21, 0
    %p79 = por %p77, %p78
    %p80 = scmp.ne.s32.totalorder %s68, %s69
    %p81 = scmp.eq.s32.totalorder %s22, 1
    %p82 = por %p80, %p81
    %p84 = scmp.ne.s32.totalorder %s69, %s83
    %p85 = scmp.eq.s32.totalorder %s22, 0
    %p86 = por %p84, %p85
    %s88 = sadd.s32 %s87, 1
    %p91 = scmp.eq.s32.totalorder %s16, 1
    %p92 = scmp.ne.s32.totalorder %s87, %s89
    %p93 = scmp.eq.s32.totalorder %s16, 0
    %p94 = por %p92, %p93
    %p95 = scmp.ne.s32.totalorder %s87, %s89
    %p96 = scmp.eq.s32.totalorder %s21, 1
    %p97 = por %p95, %p96
    %p98 = scmp.ne.s32.totalorder %s89, %s90
    %p99 = scmp.eq.s32.totalorder %s21, 0
    %p100 = por %p98, %p99
    %p101 = scmp.ne.s32.totalorder %s89, %s90
    %p102 = scmp.eq.s32.totalorder %s22, 1
    %p103 = por %p101, %p102
    %p105 = scmp.ne.s32.totalorder %s90, %s104
    %p106 = scmp.eq.s32.totalorder %s22, 0
    %p107 = por %p105, %p106
    %s109 = sadd.s32 %s108, 1
    %p112 = scmp.eq.s32.totalorder %s16, 1
    %p113 = scmp.ne.s32.totalorder %s108, %s110
    %p114 = scmp.eq.s32.totalorder %s16, 0
    %p115 = por %p113, %p114
    %p116 = scmp.ne.s32.totalorder %s108, %s110
    %p117 = scmp.eq.s32.totalorder %s21, 1
    %p118 = por %p116, %p117
    %p119 = scmp.ne.s32.totalorder %s110, %s111
    %p120 = scmp.eq.s32.totalorder %s21, 0
    %p121 = por %p119, %p120
    %p122 = scmp.ne.s32.totalorder %s110, %s111
    %p123 = scmp.eq.s32.totalorder %s22, 1
    %p124 = por %p122, %p123
    %p126 = scmp.ne.s32.totalorder %s111, %s125
    %p127 = scmp.eq.s32.totalorder %s22, 0
    %p128 = por %p126, %p127
    %s129 = ssub.s32 %s16, %s23
    %p130 = scmp.eq.s32.totalorder %s129, 0
    %s132 = sadd.s32 %s131, 1
    %s133 = scalar_select %p130, %s131, %s132
    %p136 = pneg %p130
    %p137 = scmp.eq.s32.totalorder %s16, 1
    %p138 = por %p136, %p137
    %p139 = scmp.ne.s32.totalorder %s131, %s134
    %p140 = scmp.eq.s32.totalorder %s16, 0
    %p141 = por %p139, %p140
    %p142 = scmp.ne.s32.totalorder %s131, %s134
    %p143 = scmp.eq.s32.totalorder %s21, 1
    %p144 = por %p142, %p143
    %p145 = scmp.ne.s32.totalorder %s134, %s135
    %p146 = scmp.eq.s32.totalorder %s21, 0
    %p147 = por %p145, %p146
    %p148 = scmp.ne.s32.totalorder %s134, %s135
    %p149 = scmp.eq.s32.totalorder %s22, 1
    %p150 = por %p148, %p149
    %p152 = scmp.ne.s32.totalorder %s135, %s151
    %p153 = scmp.eq.s32.totalorder %s22, 0
    %p154 = por %p152, %p153
    %s155 = ssub.s32 %s16, %s23
    %p156 = scmp.eq.s32.totalorder %s155, 0
    %s158 = sadd.s32 %s157, 1
    %s159 = scalar_select %p156, %s157, %s158
    %p162 = pneg %p156
    %p163 = scmp.eq.s32.totalorder %s16, 1
    %p164 = por %p162, %p163
    %p165 = scmp.ne.s32.totalorder %s157, %s160
    %p166 = scmp.eq.s32.totalorder %s16, 0
    %p167 = por %p165, %p166
    %p168 = scmp.ne.s32.totalorder %s157, %s160
    %p169 = scmp.eq.s32.totalorder %s21, 1
    %p170 = por %p168, %p169
    %p171 = scmp.ne.s32.totalorder %s160, %s161
    %p172 = scmp.eq.s32.totalorder %s21, 0
    %p173 = por %p171, %p172
    %p174 = scmp.ne.s32.totalorder %s160, %s161
    %p175 = scmp.eq.s32.totalorder %s22, 1
    %p176 = por %p174, %p175
    %p178 = scmp.ne.s32.totalorder %s161, %s177
    %p179 = scmp.eq.s32.totalorder %s22, 0
    %p180 = por %p178, %p179
    %s181 = ssub.s32 %s16, %s23
    %p182 = scmp.eq.s32.totalorder %s181, 0
    %s184 = sadd.s32 %s183, 1
    %s185 = scalar_select %p182, %s183, %s184
    %p188 = pneg %p182
    %p189 = scmp.eq.s32.totalorder %s16, 1
    %p190 = por %p188, %p189
    %p191 = scmp.ne.s32.totalorder %s183, %s186
    %p192 = scmp.eq.s32.totalorder %s16, 0
    %p193 = por %p191, %p192
    %p194 = scmp.ne.s32.totalorder %s183, %s186
    %p195 = scmp.eq.s32.totalorder %s21, 1
    %p196 = por %p194, %p195
    %p197 = scmp.ne.s32.totalorder %s186, %s187
    %p198 = scmp.eq.s32.totalorder %s21, 0
    %p199 = por %p197, %p198
    %p200 = scmp.ne.s32.totalorder %s186, %s187
    %p201 = scmp.eq.s32.totalorder %s22, 1
    %p202 = por %p200, %p201
    %p204 = scmp.ne.s32.totalorder %s187, %s203
    %p205 = scmp.eq.s32.totalorder %s22, 0
    %p206 = por %p204, %p205
    %s207 = ssub.s32 %s16, %s23
    %p208 = scmp.eq.s32.totalorder %s207, 0
    %s210 = sadd.s32 %s209, 1
    %s211 = scalar_select %p208, %s209, %s210
    %p214 = pneg %p208
    %p215 = scmp.eq.s32.totalorder %s16, 1
    %p216 = por %p214, %p215
    %p217 = scmp.ne.s32.totalorder %s209, %s212
    %p218 = scmp.eq.s32.totalorder %s16, 0
    %p219 = por %p217, %p218
    %p220 = scmp.ne.s32.totalorder %s209, %s212
    %p221 = scmp.eq.s32.totalorder %s21, 1
    %p222 = por %p220, %p221
    %p223 = scmp.ne.s32.totalorder %s212, %s213
    %p224 = scmp.eq.s32.totalorder %s21, 0
    %p225 = por %p223, %p224
    %p226 = scmp.ne.s32.totalorder %s212, %s213
    %p227 = scmp.eq.s32.totalorder %s22, 1
    %p228 = por %p226, %p227
    %p230 = scmp.ne.s32.totalorder %s213, %s229
    %p231 = scmp.eq.s32.totalorder %s22, 0
    %p232 = por %p230, %p231
    %s233 = ssub.s32 %s16, %s23
    %p234 = scmp.eq.s32.totalorder %s233, 0
    %s236 = sadd.s32 %s235, 1
    %s237 = scalar_select %p234, %s235, %s236
    %p240 = pneg %p234
    %p241 = scmp.eq.s32.totalorder %s16, 1
    %p242 = por %p240, %p241
    %p243 = scmp.ne.s32.totalorder %s235, %s238
    %p244 = scmp.eq.s32.totalorder %s16, 0
    %p245 = por %p243, %p244
    %p246 = scmp.ne.s32.totalorder %s235, %s238
    %p247 = scmp.eq.s32.totalorder %s21, 1
    %p248 = por %p246, %p247
    %p249 = scmp.ne.s32.totalorder %s238, %s239
    %p250 = scmp.eq.s32.totalorder %s21, 0
    %p251 = por %p249, %p250
    %p252 = scmp.ne.s32.totalorder %s238, %s239
    %p253 = scmp.eq.s32.totalorder %s22, 1
    %p254 = por %p252, %p253
    %p256 = scmp.ne.s32.totalorder %s239, %s255
    %p257 = scmp.eq.s32.totalorder %s22, 0
    %p258 = por %p256, %p257
    %s260 = sadd.s32 %s259, 1
    %p263 = scmp.eq.s32.totalorder %s16, 1
    %p264 = scmp.ne.s32.totalorder %s259, %s261
    %p265 = scmp.eq.s32.totalorder %s16, 0
    %p266 = por %p264, %p265
    %p267 = scmp.ne.s32.totalorder %s259, %s261
    %p268 = scmp.eq.s32.totalorder %s21, 1
    %p269 = por %p267, %p268
    %p270 = scmp.ne.s32.totalorder %s261, %s262
    %p271 = scmp.eq.s32.totalorder %s21, 0
    %p272 = por %p270, %p271
    %p273 = scmp.ne.s32.totalorder %s261, %s262
    %p274 = scmp.eq.s32.totalorder %s22, 1
    %p275 = por %p273, %p274
    %p277 = scmp.ne.s32.totalorder %s262, %s276
    %p278 = scmp.eq.s32.totalorder %s22, 0
    %p279 = por %p277, %p278
    %p280 = scmp.le.s32.totalorder 1, %s16
    %p281 = scmp.lt.s32.totalorder %s16, 3
    %p282 = pnand %p280, %p281
    %p283 = pneg %p282
    // Predicated region
    $region9: #{encoder_forward.1} parent=5 // pred_check
      _
    $region10: #{encoder_forward.1} parent=5 // pred_check_branch
      %285 = sbr.rel (%p282) target = $region12
    $region11: #{encoder_forward.1} parent=5 // pred_region
      %s286 = ssub.s32 %s16, 1
      // Predicated region
      $region13: #{encoder_forward.1} parent=11 // pred_check
        %p287 = pneg %p37
      $region14: #{encoder_forward.1} parent=11 // pred_check_branch
        %289 = sbr.rel (%p287) target = $region16
      $region15: #{encoder_forward.1} parent=11 // pred_region
        _
      $region16: #{encoder_forward.1} parent=11 // pred_fallthru
        _
      // Predicated region
      $region17: #{encoder_forward.1} parent=11 // pred_check
        %p290 = pneg %p58
      $region18: #{encoder_forward.1} parent=11 // pred_check_branch
        %292 = sbr.rel (%p290) target = $region20
      $region19: #{encoder_forward.1} parent=11 // pred_region
        _
      $region20: #{encoder_forward.1} parent=11 // pred_fallthru
        _
      // Predicated region
      $region21: #{encoder_forward.1} parent=11 // pred_check
        %p293 = pneg %p79
      $region22: #{encoder_forward.1} parent=11 // pred_check_branch
        %295 = sbr.rel (%p293) target = $region24
      $region23: #{encoder_forward.1} parent=11 // pred_region
        _
      $region24: #{encoder_forward.1} parent=11 // pred_fallthru
        _
      // Predicated region
      $region25: #{encoder_forward.1} parent=11 // pred_check
        %p296 = pneg %p100
      $region26: #{encoder_forward.1} parent=11 // pred_check_branch
        %298 = sbr.rel (%p296) target = $region28
      $region27: #{encoder_forward.1} parent=11 // pred_region
        _
      $region28: #{encoder_forward.1} parent=11 // pred_fallthru
        _
      // Predicated region
      $region29: #{encoder_forward.1} parent=11 // pred_check
        %p299 = pneg %p121
      $region30: #{encoder_forward.1} parent=11 // pred_check_branch
        %301 = sbr.rel (%p299) target = $region32
      $region31: #{encoder_forward.1} parent=11 // pred_region
        _
      $region32: #{encoder_forward.1} parent=11 // pred_fallthru
        _
    $region12: #{encoder_forward.1} parent=5 // pred_fallthru
      _
    %p302 = scmp.lt.s32.totalorder %s16, 2
    // Predicated region
    $region33: #{encoder_forward.1} parent=5 // pred_check
      %p303 = pneg %p302
    $region34: #{encoder_forward.1} parent=5 // pred_check_branch
      %305 = sbr.rel (%p303) target = $region36
    $region35: #{encoder_forward.1} parent=5 // pred_region
      // Predicated region
      $region37: #{encoder_forward.1} parent=35 // pred_check
        %p306 = pneg %p141
      $region38: #{encoder_forward.1} parent=35 // pred_check_branch
        %308 = sbr.rel (%p306) target = $region40
      $region39: #{encoder_forward.1} parent=35 // pred_region
        %p309 = scmp.lt.s32.totalorder %s16, 1
        %s310 = scalar_select %p309, %s16, 1
        %s311 = smul.addr %s310, 4
        %s312 = smul.addr %s311, 8
        %s313 = scalar_lea.vmem %s5, %s312
      $region40: #{encoder_forward.1} parent=35 // pred_fallthru
        _
      // Predicated region
      $region41: #{encoder_forward.1} parent=35 // pred_check
        %p314 = pneg %p167
      $region42: #{encoder_forward.1} parent=35 // pred_check_branch
        %316 = sbr.rel (%p314) target = $region44
      $region43: #{encoder_forward.1} parent=35 // pred_region
        %p317 = scmp.lt.s32.totalorder %s16, 1
        %s318 = scalar_select %p317, %s16, 1
        %s319 = smul.addr %s318, 4
        %s320 = smul.addr %s319, 8
        %s321 = scalar_lea.vmem %s6, %s320
      $region44: #{encoder_forward.1} parent=35 // pred_fallthru
        _
      // Predicated region
      $region45: #{encoder_forward.1} parent=35 // pred_check
        %p322 = pneg %p193
      $region46: #{encoder_forward.1} parent=35 // pred_check_branch
        %324 = sbr.rel (%p322) target = $region48
      $region47: #{encoder_forward.1} parent=35 // pred_region
        %p325 = scmp.lt.s32.totalorder %s16, 1
        %s326 = scalar_select %p325, %s16, 1
        %s327 = smul.addr %s326, 4
        %s328 = smul.addr %s327, 8
        %s329 = scalar_lea.vmem %s7, %s328
      $region48: #{encoder_forward.1} parent=35 // pred_fallthru
        _
      // Predicated region
      $region49: #{encoder_forward.1} parent=35 // pred_check
        %p330 = pneg %p219
      $region50: #{encoder_forward.1} parent=35 // pred_check_branch
        %332 = sbr.rel (%p330) target = $region52
      $region51: #{encoder_forward.1} parent=35 // pred_region
        %p333 = scmp.lt.s32.totalorder %s16, 1
        %s334 = scalar_select %p333, %s16, 1
        %s335 = smul.addr %s334, 8
        %s336 = smul.addr %s335, 8
        %s337 = scalar_lea.vmem %s8, %s336
      $region52: #{encoder_forward.1} parent=35 // pred_fallthru
        _
      // Predicated region
      $region53: #{encoder_forward.1} parent=35 // pred_check
        %p338 = pneg %p245
      $region54: #{encoder_forward.1} parent=35 // pred_check_branch
        %340 = sbr.rel (%p338) target = $region56
      $region55: #{encoder_forward.1} parent=35 // pred_region
        %p341 = scmp.lt.s32.totalorder %s16, 1
        %s342 = scalar_select %p341, %s16, 1
        %s343 = smul.addr %s342, 8
        %s344 = scalar_lea.vmem %s9, %s343
      $region56: #{encoder_forward.1} parent=35 // pred_fallthru
        _
    $region36: #{encoder_forward.1} parent=5 // pred_fallthru
      _
    %p345 = scmp.le.s32.totalorder 1, %s16
    %p346 = scmp.lt.s32.totalorder %s16, 3
    %p347 = pnand %p345, %p346
    %p348 = pneg %p347
    // Predicated region
    $region57: #{encoder_forward.1} parent=5 // pred_check
      _
    $region58: #{encoder_forward.1} parent=5 // pred_check_branch
      %350 = sbr.rel (%p347) target = $region60
    $region59: #{encoder_forward.1} parent=5 // pred_region
      %s351 = ssub.s32 %s16, 1
      %p352 = pneg %p37
      %p353 = pneg %p34
      %p354 = pneg %p58
      %p355 = pneg %p55
      %p356 = pneg %p79
      %p357 = pneg %p76
      %p358 = pneg %p100
      %p359 = pneg %p97
      %p360 = pneg %p121
      %p361 = pneg %p118
      %p362 = scmp.lt.s32.totalorder %s21, 1
      %s363 = scalar_select %p362, %s21, 1
      %s364 = smul.addr %s363, 4
      %s365 = smul.addr %s364, 8
      %s366 = scalar_lea.vmem %s5, %s365
      %p367 = pneg %p147
      %p368 = pneg %p144
      %p369 = scmp.lt.s32.totalorder %s21, 1
      %s370 = scalar_select %p369, %s21, 1
      %s371 = smul.addr %s370, 4
      %s372 = smul.addr %s371, 8
      %s373 = scalar_lea.vmem %s6, %s372
      %p374 = pneg %p173
      %p375 = pneg %p170
      %p376 = scmp.lt.s32.totalorder %s21, 1
      %s377 = scalar_select %p376, %s21, 1
      %s378 = smul.addr %s377, 4
      %s379 = smul.addr %s378, 8
      %s380 = scalar_lea.vmem %s7, %s379
      %p381 = pneg %p199
      %p382 = pneg %p196
      %p383 = scmp.lt.s32.totalorder %s21, 1
      %s384 = scalar_select %p383, %s21, 1
      %s385 = smul.addr %s384, 8
      %s386 = smul.addr %s385, 8
      %s387 = scalar_lea.vmem %s8, %s386
      %p388 = pneg %p225
      %p389 = pneg %p222
      %p390 = scmp.lt.s32.totalorder %s21, 1
      %s391 = scalar_select %p390, %s21, 1
      %s392 = smul.addr %s391, 8
      %s393 = scalar_lea.vmem %s9, %s392
      %p394 = pneg %p251
      %p395 = pneg %p248
      %p396 = pneg %p272
      %p397 = pneg %p269
      %p398 = scmp.lt.s32.totalorder %s21, 1
      %s399 = scalar_select %p398, %s21, 1
      %s400 = smul.addr %s399, 4
      %s401 = smul.addr %s400, 8
      %s402 = scalar_lea.vmem %s5, %s401
      %p403 = scmp.lt.s32.totalorder %s21, 1
      %s404 = scalar_select %p403, %s21, 1
      %s405 = smul.addr %s404, 4
      %s406 = smul.addr %s405, 8
      %s407 = scalar_lea.vmem %s6, %s406
      %p408 = scmp.lt.s32.totalorder %s21, 1
      %s409 = scalar_select %p408, %s21, 1
      %s410 = smul.addr %s409, 4
      %s411 = smul.addr %s410, 8
      %s412 = scalar_lea.vmem %s7, %s411
      %p413 = scmp.lt.s32.totalorder %s21, 1
      %s414 = scalar_select %p413, %s21, 1
      %s415 = smul.addr %s414, 8
      %s416 = smul.addr %s415, 8
      %s417 = scalar_lea.vmem %s8, %s416
      %p418 = scmp.lt.s32.totalorder %s21, 1
      %s419 = scalar_select %p418, %s21, 1
      %s420 = smul.addr %s419, 8
      %s421 = scalar_lea.vmem %s9, %s420
      %p422 = scmp.eq.s32.totalorder %s21, 0
      // Predicated region
      $region61: #{encoder_forward.1} parent=59 // pred_check
        %p423 = pneg %p422
      $region62: #{encoder_forward.1} parent=59 // pred_check_branch
        %425 = sbr.rel (%p423) target = $region64
      $region63: #{encoder_forward.1} parent=59 // pred_region
        %v426 = vld [vmem:[%s0] sm:$0xff]
        %v427 = vld [vmem:[%s0 + $0x8] sm:$0xff]
        %v428 = vld [vmem:[%s1] sm:$0xff]
        %v429 = vld [vmem:[%s1 + $0x8] sm:$0xff]
        %vm430 = vcmask 130048
        %v432 = vsel %vm430, %v426, 0
        %v435 = vsel %vm430, %v427, 0
        %437 = vmatprep.subr.mxu0 0.0
        %438 = vmatpush1.msra.mxu0 0.0
        %439 = vmatprep.subr.mxu0 0.0
        %440 = vmatpush1.msra.mxu0 0.0
        %441 = vmatprep.subr.mxu0 0.0
        %442 = vmatpush1.msra.mxu0 0.0
        %443 = vmatprep.subr.mxu0 0.0
        %444 = vmatpush1.msra.mxu0 0.0
        %445 = vmatprep.subr.mxu0 0.0
        %446 = vmatpush1.msra.mxu0 0.0
        %447 = vmatprep.subr.mxu0 0.0
        %448 = vmatpush1.msra.mxu0 0.0
        %449 = vmatprep.subr.mxu0 0.0
        %450 = vmatpush1.msra.mxu0 0.0
        %451 = vmatprep.subr.mxu0 0.0
        %452 = vmatpush1.msra.mxu0 0.0
        %453 = vmatprep.subr.mxu0 0.0
        %454 = vmatpush1.msra.mxu0 0.0
        %455 = vmatprep.subr.mxu0 0.0
        %456 = vmatpush1.msra.mxu0 0.0
        %457 = vmatprep.subr.mxu0 0.0
        %458 = vmatpush1.msra.mxu0 0.0
        %459 = vmatprep.subr.mxu0 0.0
        %460 = vmatpush1.msra.mxu0 0.0
        %461 = vmatprep.subr.mxu0 0.0
        %462 = vmatpush1.msra.mxu0 0.0
        %463 = vmatprep.subr.mxu0 0.0
        %464 = vmatpush1.msra.mxu0 0.0
        %465 = vmatprep.subr.mxu0 0.0
        %466 = vmatpush1.msra.mxu0 %v429
        %467 = vmatprep.subr.mxu0 0.0
        %468 = vmatpush1.msra.mxu0 %v428
        %469 = vmatprep.subr.mxu0 0.0
        %470 = vmatpush2.msra.mxu0 0.0
        %471 = vmatprep.subr.mxu0 0.0
        %472 = vmatpush2.msra.mxu0 0.0
        %473 = vmatprep.subr.mxu0 0.0
        %474 = vmatpush2.msra.mxu0 0.0
        %475 = vmatprep.subr.mxu0 0.0
        %476 = vmatpush2.msra.mxu0 0.0
        %477 = vmatprep.subr.mxu0 0.0
        %478 = vmatpush2.msra.mxu0 0.0
        %479 = vmatprep.subr.mxu0 0.0
        %480 = vmatpush2.msra.mxu0 0.0
        %481 = vmatprep.subr.mxu0 0.0
        %482 = vmatpush2.msra.mxu0 0.0
        %483 = vmatprep.subr.mxu0 0.0
        %484 = vmatpush2.msra.mxu0 0.0
        %485 = vmatprep.subr.mxu0 0.0
        %486 = vmatpush2.msra.mxu0 0.0
        %487 = vmatprep.subr.mxu0 0.0
        %488 = vmatpush2.msra.mxu0 0.0
        %489 = vmatprep.subr.mxu0 0.0
        %490 = vmatpush2.msra.mxu0 0.0
        %491 = vmatprep.subr.mxu0 0.0
        %492 = vmatpush2.msra.mxu0 0.0
        %493 = vmatprep.subr.mxu0 0.0
        %494 = vmatpush2.msra.mxu0 0.0
        %495 = vmatprep.subr.mxu0 0.0
        %496 = vmatpush2.msra.mxu0 0.0
        %497 = vmatprep.subr.mxu0 0.0
        %498 = vmatpush2.msra.mxu0 0.0
        %499 = vmatprep.subr.mxu0 0.0
        %500 = vmatpush2.msra.mxu0 0.0
        %501 = vmatprep.mubr.f32.mxu0 0.0
        %502 = vmatmul.mubr.f32.gmra.mxu0 %v432
        %v503 = vpop.f32.mrf.mxu0
        %v504 = vadd.f32 0.0, %v503
        %v505 = vpop.f32.mrf.mxu0
        %506 = vmatprep.mubr.f32.mxu0 0.0
        %507 = vmatmul.mubr.f32.gmra.mxu0 %v435
        %v508 = vpop.f32.mrf.mxu0
        %v509 = vadd.f32 0.0, %v508
        %v510 = vpop.f32.mrf.mxu0
        %511 = vdwg.mxu0
        %v512 = vld [vmem:[%s2] sm:$0x3]
        %v513 = vld [vmem:[%s2 + $0x2] sm:$0xff]
        %v514 = vld [vmem:[%s3] sm:$0xf]
        %vm515 = vcmask 257024
        %516 = vst.msk [vmem:[#allocation2] sm:$0xf] %vm515, %v514
        %v517 = vld [vmem:[%s4] sm:$0x3]
        %v518 = vadd.f32 %v517, %v512
        %vm519 = vcmask 254976
        %520 = vst.msk [vmem:[#allocation2 + $0x4] sm:$0x3] %vm519, %v518
        %v521 = vadd.f32 %v504, %v513
        %vm522 = vcmask 261120
        %523 = vst.msk [vmem:[#allocation2 + $0x6] sm:$0xff] %vm522, %v521
        %524 = vst.msk [vmem:[#allocation2 + $0xe] sm:$0xf] %vm515, %v514
        %s525 = scalar_lea.vmem %s4, 2
        %v526 = vld [vmem:[%s525] sm:$0x3]
        %v527 = vadd.f32 %v526, %v512
        %528 = vst.msk [vmem:[#allocation2 + $0x12] sm:$0x3] %vm519, %v527
        %v529 = vadd.f32 %v509, %v513
        %530 = vst.msk [vmem:[#allocation2 + $0x14] sm:$0xff] %vm522, %v529
      $region64: #{encoder_forward.1} parent=59 // pred_fallthru
        _
      %v531 = vld [vmem:[%s402] sm:$0xff]
      %v532 = vld [vmem:[%s402 + $0x8] sm:$0xff]
      %v533 = vld [vmem:[%s402 + $0x10] sm:$0xff]
      %v534 = vld [vmem:[%s402 + $0x18] sm:$0xff]
      %v535 = vld [vmem:[%s407] sm:$0xff]
      %v536 = vld [vmem:[%s407 + $0x8] sm:$0xff]
      %v537 = vld [vmem:[%s407 + $0x10] sm:$0xff]
      %v538 = vld [vmem:[%s407 + $0x18] sm:$0xff]
      %v539 = vld [vmem:[%s412] sm:$0xff]
      %v540 = vld [vmem:[%s412 + $0x8] sm:$0xff]
      %v541 = vld [vmem:[%s412 + $0x10] sm:$0xff]
      %v542 = vld [vmem:[%s412 + $0x18] sm:$0xff]
      %v543 = vld [vmem:[%s417] sm:$0xff]
      %v544 = vld [vmem:[%s417 + $0x8] sm:$0xff]
      %v545 = vld [vmem:[%s417 + $0x10] sm:$0xff]
      %v546 = vld [vmem:[%s417 + $0x18] sm:$0xff]
      %v547 = vld [vmem:[%s417 + $0x20] sm:$0xff]
      %v548 = vld [vmem:[%s417 + $0x28] sm:$0xff]
      %v549 = vld [vmem:[%s417 + $0x30] sm:$0xff]
      %v550 = vld [vmem:[%s417 + $0x38] sm:$0xff]
      %v551 = vld [vmem:[%s421] sm:$0xff]
      %v552 = vld [vmem:[#allocation2] sm:$0xff]
      %v553 = vld [vmem:[#allocation2 + $0x8] sm:$0xff]
      %v554 = vld [vmem:[#allocation2 + $0x10] sm:$0xff]
      %v555 = vld [vmem:[#allocation2 + $0x18] sm:$0xf]
      %v556 = vlaneseq
      %v557 = vshrl.u32 %v556, 7
      %v558 = vsub.s32 0, %v557
      %v559 = vrot.slane %v551, %v558
      %vm560 = vcmask 261120
      %v562 = vsel %vm560, %v552, 0
      %v565 = vsel %vm560, %v553, 0
      %v568 = vsel %vm560, %v554, 0
      %v571 = vsel %vm560, %v555, 0
      %573 = vmatprep.subr.mxu0 0.0
      %574 = vmatpush1.msra.mxu0 0.0
      %575 = vmatprep.subr.mxu0 0.0
      %576 = vmatpush1.msra.mxu0 0.0
      %577 = vmatprep.subr.mxu0 0.0
      %578 = vmatpush1.msra.mxu0 0.0
      %579 = vmatprep.subr.mxu0 0.0
      %580 = vmatpush1.msra.mxu0 0.0
      %581 = vmatprep.subr.mxu0 0.0
      %582 = vmatpush1.msra.mxu0 0.0
      %583 = vmatprep.subr.mxu0 0.0
      %584 = vmatpush1.msra.mxu0 0.0
      %585 = vmatprep.subr.mxu0 0.0
      %586 = vmatpush1.msra.mxu0 0.0
      %587 = vmatprep.subr.mxu0 0.0
      %588 = vmatpush1.msra.mxu0 0.0
      %589 = vmatprep.subr.mxu0 0.0
      %590 = vmatpush1.msra.mxu0 0.0
      %591 = vmatprep.subr.mxu0 0.0
      %592 = vmatpush1.msra.mxu0 0.0
      %593 = vmatprep.subr.mxu0 0.0
      %594 = vmatpush1.msra.mxu0 0.0
      %595 = vmatprep.subr.mxu0 0.0
      %596 = vmatpush1.msra.mxu0 0.0
      %597 = vmatprep.subr.mxu0 0.0
      %598 = vmatpush1.msra.mxu0 %v534
      %599 = vmatprep.subr.mxu0 0.0
      %600 = vmatpush1.msra.mxu0 %v533
      %601 = vmatprep.subr.mxu0 0.0
      %602 = vmatpush1.msra.mxu0 %v532
      %603 = vmatprep.subr.mxu0 0.0
      %604 = vmatpush1.msra.mxu0 %v531
      %605 = vmatprep.subr.mxu0 0.0
      %606 = vmatpush2.msra.mxu0 0.0
      %607 = vmatprep.subr.mxu0 0.0
      %608 = vmatpush2.msra.mxu0 0.0
      %609 = vmatprep.subr.mxu0 0.0
      %610 = vmatpush2.msra.mxu0 0.0
      %611 = vmatprep.subr.mxu0 0.0
      %612 = vmatpush2.msra.mxu0 0.0
      %613 = vmatprep.subr.mxu0 0.0
      %614 = vmatpush2.msra.mxu0 0.0
      %615 = vmatprep.subr.mxu0 0.0
      %616 = vmatpush2.msra.mxu0 0.0
      %617 = vmatprep.subr.mxu0 0.0
      %618 = vmatpush2.msra.mxu0 0.0
      %619 = vmatprep.subr.mxu0 0.0
      %620 = vmatpush2.msra.mxu0 0.0
      %621 = vmatprep.subr.mxu0 0.0
      %622 = vmatpush2.msra.mxu0 0.0
      %623 = vmatprep.subr.mxu0 0.0
      %624 = vmatpush2.msra.mxu0 0.0
      %625 = vmatprep.subr.mxu0 0.0
      %626 = vmatpush2.msra.mxu0 0.0
      %627 = vmatprep.subr.mxu0 0.0
      %628 = vmatpush2.msra.mxu0 0.0
      %629 = vmatprep.subr.mxu0 0.0
      %630 = vmatpush2.msra.mxu0 0.0
      %631 = vmatprep.subr.mxu0 0.0
      %632 = vmatpush2.msra.mxu0 0.0
      %633 = vmatprep.subr.mxu0 0.0
      %634 = vmatpush2.msra.mxu0 0.0
      %635 = vmatprep.subr.mxu0 0.0
      %636 = vmatpush2.msra.mxu0 0.0
      %637 = vmatprep.mubr.f32.mxu0 0.0
      %638 = vmatmul.mubr.f32.gmra.mxu0 %v562
      %v639 = vpop.f32.mrf.mxu0
      %v640 = vadd.f32 %v559, %v639
      %v641 = vpop.f32.mrf.mxu0
      %642 = vmatprep.mubr.f32.mxu0 0.0
      %643 = vmatmul.mubr.f32.gmra.mxu0 %v565
      %v644 = vpop.f32.mrf.mxu0
      %v645 = vadd.f32 %v559, %v644
      %v646 = vpop.f32.mrf.mxu0
      %647 = vmatprep.mubr.f32.mxu0 0.0
      %648 = vmatmul.mubr.f32.gmra.mxu0 %v568
      %v649 = vpop.f32.mrf.mxu0
      %v650 = vadd.f32 %v559, %v649
      %v651 = vpop.f32.mrf.mxu0
      %652 = vmatprep.mubr.f32.mxu0 0.0
      %653 = vmatmul.mubr.f32.gmra.mxu0 %v571
      %v654 = vpop.f32.mrf.mxu0
      %v655 = vadd.f32 %v559, %v654
      %v656 = vpop.f32.mrf.mxu0
      %657 = vdwg.mxu0
      %660 = vrot.lane.b32.xlu0 %v640, 96
      %v661 = vpop.permute.xlu0 %660
      %662 = vrot.lane.b32.xlu0 %v645, 96
      %v663 = vpop.permute.xlu0 %662
      %vm664 = vcmask 64512
      %v665 = vsel %vm664, %v640, 0
      %v667 = vsel %vm664, %v645, 0
      %v669 = vsel %vm664, %v661, 0
      %v671 = vsel %vm664, %v663, 0
      %673 = vmatprep.subr.mxu0 0.0
      %674 = vmatpush1.xpose.msra.mxu0 0.0
      %675 = vmatprep.subr.mxu0 0.0
      %676 = vmatpush1.xpose.msra.mxu0 0.0
      %677 = vmatprep.subr.mxu0 0.0
      %678 = vmatpush1.xpose.msra.mxu0 0.0
      %679 = vmatprep.subr.mxu0 0.0
      %680 = vmatpush1.xpose.msra.mxu0 0.0
      %681 = vmatprep.subr.mxu0 0.0
      %682 = vmatpush1.xpose.msra.mxu0 0.0
      %683 = vmatprep.subr.mxu0 0.0
      %684 = vmatpush1.xpose.msra.mxu0 0.0
      %685 = vmatprep.subr.mxu0 0.0
      %686 = vmatpush1.xpose.msra.mxu0 0.0
      %687 = vmatprep.subr.mxu0 0.0
      %688 = vmatpush1.xpose.msra.mxu0 0.0
      %689 = vmatprep.subr.mxu0 0.0
      %690 = vmatpush1.xpose.msra.mxu0 0.0
      %691 = vmatprep.subr.mxu0 0.0
      %692 = vmatpush1.xpose.msra.mxu0 0.0
      %693 = vmatprep.subr.mxu0 0.0
      %694 = vmatpush1.xpose.msra.mxu0 0.0
      %695 = vmatprep.subr.mxu0 0.0
      %696 = vmatpush1.xpose.msra.mxu0 0.0
      %697 = vmatprep.subr.mxu0 0.0
      %698 = vmatpush1.xpose.msra.mxu0 0.0
      %699 = vmatprep.subr.mxu0 0.0
      %700 = vmatpush1.xpose.msra.mxu0 0.0
      %701 = vmatprep.subr.mxu0 0.0
      %702 = vmatpush1.xpose.msra.mxu0 %v671
      %703 = vmatprep.subr.mxu0 0.0
      %704 = vmatpush1.xpose.msra.mxu0 %v669
      %705 = vmatprep.subr.mxu0 0.0
      %706 = vmatpush2.xpose.msra.mxu0 0.0
      %707 = vmatprep.subr.mxu0 0.0
      %708 = vmatpush2.xpose.msra.mxu0 0.0
      %709 = vmatprep.subr.mxu0 0.0
      %710 = vmatpush2.xpose.msra.mxu0 0.0
      %711 = vmatprep.subr.mxu0 0.0
      %712 = vmatpush2.xpose.msra.mxu0 0.0
      %713 = vmatprep.subr.mxu0 0.0
      %714 = vmatpush2.xpose.msra.mxu0 0.0
      %715 = vmatprep.subr.mxu0 0.0
      %716 = vmatpush2.xpose.msra.mxu0 0.0
      %717 = vmatprep.subr.mxu0 0.0
      %718 = vmatpush2.xpose.msra.mxu0 0.0
      %719 = vmatprep.subr.mxu0 0.0
      %720 = vmatpush2.xpose.msra.mxu0 0.0
      %721 = vmatprep.subr.mxu0 0.0
      %722 = vmatpush2.xpose.msra.mxu0 0.0
      %723 = vmatprep.subr.mxu0 0.0
      %724 = vmatpush2.xpose.msra.mxu0 0.0
      %725 = vmatprep.subr.mxu0 0.0
      %726 = vmatpush2.xpose.msra.mxu0 0.0
      %727 = vmatprep.subr.mxu0 0.0
      %728 = vmatpush2.xpose.msra.mxu0 0.0
      %729 = vmatprep.subr.mxu0 0.0
      %730 = vmatpush2.xpose.msra.mxu0 0.0
      %731 = vmatprep.subr.mxu0 0.0
      %732 = vmatpush2.xpose.msra.mxu0 0.0
      %733 = vmatprep.subr.mxu0 0.0
      %734 = vmatpush2.xpose.msra.mxu0 0.0
      %735 = vmatprep.subr.mxu0 0.0
      %736 = vmatpush2.xpose.msra.mxu0 0.0
      %737 = vmatprep.mubr.f32.mxu0 0.0
      %738 = vmatmul.mubr.f32.gmra.mxu0 %v665
      %v739 = vpop.f32.mrf.mxu0
      %v740 = vadd.f32 0.0, %v739
      %v741 = vpop.f32.mrf.mxu0
      %742 = vmatprep.mubr.f32.mxu0 0.0
      %743 = vmatmul.mubr.f32.gmra.mxu0 %v667
      %v744 = vpop.f32.mrf.mxu0
      %v745 = vadd.f32 0.0, %v744
      %v746 = vpop.f32.mrf.mxu0
      %747 = vdwg.mxu0
      %vm748 = vcmask 113664
      %v749 = vsel %vm748, %v740, -inf
      %750 = vmax.xlane.f32.xlu0 %v749
      %v751 = vpop.xlane.xlu0 %750
      %vm752 = vcmask 111616
      %v753 = vsel %vm752, %v745, -inf
      %754 = vmax.xlane.f32.xlu0 %v753
      %v755 = vpop.xlane.xlu0 %754
      %v756 = vsub.f32 %v740, %v751
      %v757 = vsub.f32 %v745, %v755
      %v758 = vmul.f32 %v756, 1.442695
      %v759 = vpow.pop %v758
      %v760 = vmul.f32 %v757, 1.442695
      %v761 = vpow.pop %v760
      %v762 = vsel %vm748, %v759, 0.0
      %763 = vadd.xlane.f32.xlu0 %v762
      %v764 = vpop.xlane.xlu0 %763
      %v765 = vsel %vm752, %v761, 0.0
      %766 = vadd.xlane.f32.xlu0 %v765
      %v767 = vpop.xlane.xlu0 %766
      %v768 = vrcp.pop %v764
      %v769 = vrcp.pop %v767
      %v770 = vmul.f32 %v759, %v768
      %v771 = vmul.f32 %v761, %v769
      %772 = vrot.lane.b32.xlu0 %v640, 64
      %v773 = vpop.permute.xlu0 %772
      %774 = vrot.lane.b32.xlu0 %v645, 64
      %v775 = vpop.permute.xlu0 %774
      %v778 = vsel %vm748, %v770, 0
      %v781 = vsel %vm748, %v771, 0
      %vm783 = vcmask 1045504
      %v784 = vsel %vm783, %v775, 0
      %786 = vmatprep.subr.mxu0 0.0
      %787 = vmatpush1.msra.mxu0 0.0
      %788 = vmatprep.subr.mxu0 0.0
      %789 = vmatpush1.msra.mxu0 0.0
      %790 = vmatprep.subr.mxu0 0.0
      %791 = vmatpush1.msra.mxu0 0.0
      %792 = vmatprep.subr.mxu0 0.0
      %793 = vmatpush1.msra.mxu0 0.0
      %794 = vmatprep.subr.mxu0 0.0
      %795 = vmatpush1.msra.mxu0 0.0
      %796 = vmatprep.subr.mxu0 0.0
      %797 = vmatpush1.msra.mxu0 0.0
      %798 = vmatprep.subr.mxu0 0.0
      %799 = vmatpush1.msra.mxu0 0.0
      %800 = vmatprep.subr.mxu0 0.0
      %801 = vmatpush1.msra.mxu0 0.0
      %802 = vmatprep.subr.mxu0 0.0
      %803 = vmatpush1.msra.mxu0 0.0
      %804 = vmatprep.subr.mxu0 0.0
      %805 = vmatpush1.msra.mxu0 0.0
      %806 = vmatprep.subr.mxu0 0.0
      %807 = vmatpush1.msra.mxu0 0.0
      %808 = vmatprep.subr.mxu0 0.0
      %809 = vmatpush1.msra.mxu0 0.0
      %810 = vmatprep.subr.mxu0 0.0
      %811 = vmatpush1.msra.mxu0 0.0
      %812 = vmatprep.subr.mxu0 0.0
      %813 = vmatpush1.msra.mxu0 0.0
      %814 = vmatprep.subr.mxu0 0.0
      %815 = vmatpush1.msra.mxu0 %v784
      %816 = vmatprep.subr.mxu0 0.0
      %817 = vmatpush1.msra.mxu0 %v773
      %818 = vmatprep.subr.mxu0 0.0
      %819 = vmatpush2.msra.mxu0 0.0
      %820 = vmatprep.subr.mxu0 0.0
      %821 = vmatpush2.msra.mxu0 0.0
      %822 = vmatprep.subr.mxu0 0.0
      %823 = vmatpush2.msra.mxu0 0.0
      %824 = vmatprep.subr.mxu0 0.0
      %825 = vmatpush2.msra.mxu0 0.0
      %826 = vmatprep.subr.mxu0 0.0
      %827 = vmatpush2.msra.mxu0 0.0
      %828 = vmatprep.subr.mxu0 0.0
      %829 = vmatpush2.msra.mxu0 0.0
      %830 = vmatprep.subr.mxu0 0.0
      %831 = vmatpush2.msra.mxu0 0.0
      %832 = vmatprep.subr.mxu0 0.0
      %833 = vmatpush2.msra.mxu0 0.0
      %834 = vmatprep.subr.mxu0 0.0
      %835 = vmatpush2.msra.mxu0 0.0
      %836 = vmatprep.subr.mxu0 0.0
      %837 = vmatpush2.msra.mxu0 0.0
      %838 = vmatprep.subr.mxu0 0.0
      %839 = vmatpush2.msra.mxu0 0.0
      %840 = vmatprep.subr.mxu0 0.0
      %841 = vmatpush2.msra.mxu0 0.0
      %842 = vmatprep.subr.mxu0 0.0
      %843 = vmatpush2.msra.mxu0 0.0
      %844 = vmatprep.subr.mxu0 0.0
      %845 = vmatpush2.msra.mxu0 0.0
      %846 = vmatprep.subr.mxu0 0.0
      %847 = vmatpush2.msra.mxu0 0.0
      %848 = vmatprep.subr.mxu0 0.0
      %849 = vmatpush2.msra.mxu0 0.0
      %850 = vmatprep.mubr.f32.mxu0 0.0
      %851 = vmatmul.mubr.f32.gmra.mxu0 %v778
      %v852 = vpop.f32.mrf.mxu0
      %v853 = vadd.f32 0.0, %v852
      %v854 = vpop.f32.mrf.mxu0
      %855 = vmatprep.mubr.f32.mxu0 0.0
      %856 = vmatmul.mubr.f32.gmra.mxu0 %v781
      %v857 = vpop.f32.mrf.mxu0
      %v858 = vadd.f32 0.0, %v857
      %v859 = vpop.f32.mrf.mxu0
      %860 = vdwg.mxu0
      %861 = vrot.lane.b32.xlu0 %v640, 120
      %v862 = vpop.permute.xlu0 %861
      %863 = vrot.lane.b32.xlu0 %v645, 120
      %v864 = vpop.permute.xlu0 %863
      %865 = vrot.lane.b32.xlu0 %v640, 88
      %v866 = vpop.permute.xlu0 %865
      %867 = vrot.lane.b32.xlu0 %v645, 88
      %v868 = vpop.permute.xlu0 %867
      %v869 = vsel %vm664, %v862, 0
      %v871 = vsel %vm664, %v864, 0
      %v873 = vsel %vm664, %v866, 0
      %v875 = vsel %vm664, %v868, 0
      %877 = vmatprep.subr.mxu0 0.0
      %878 = vmatpush1.xpose.msra.mxu0 0.0
      %879 = vmatprep.subr.mxu0 0.0
      %880 = vmatpush1.xpose.msra.mxu0 0.0
      %881 = vmatprep.subr.mxu0 0.0
      %882 = vmatpush1.xpose.msra.mxu0 0.0
      %883 = vmatprep.subr.mxu0 0.0
      %884 = vmatpush1.xpose.msra.mxu0 0.0
      %885 = vmatprep.subr.mxu0 0.0
      %886 = vmatpush1.xpose.msra.mxu0 0.0
      %887 = vmatprep.subr.mxu0 0.0
      %888 = vmatpush1.xpose.msra.mxu0 0.0
      %889 = vmatprep.subr.mxu0 0.0
      %890 = vmatpush1.xpose.msra.mxu0 0.0
      %891 = vmatprep.subr.mxu0 0.0
      %892 = vmatpush1.xpose.msra.mxu0 0.0
      %893 = vmatprep.subr.mxu0 0.0
      %894 = vmatpush1.xpose.msra.mxu0 0.0
      %895 = vmatprep.subr.mxu0 0.0
      %896 = vmatpush1.xpose.msra.mxu0 0.0
      %897 = vmatprep.subr.mxu0 0.0
      %898 = vmatpush1.xpose.msra.mxu0 0.0
      %899 = vmatprep.subr.mxu0 0.0
      %900 = vmatpush1.xpose.msra.mxu0 0.0
      %901 = vmatprep.subr.mxu0 0.0
      %902 = vmatpush1.xpose.msra.mxu0 0.0
      %903 = vmatprep.subr.mxu0 0.0
      %904 = vmatpush1.xpose.msra.mxu0 0.0
      %905 = vmatprep.subr.mxu0 0.0
      %906 = vmatpush1.xpose.msra.mxu0 %v875
      %907 = vmatprep.subr.mxu0 0.0
      %908 = vmatpush1.xpose.msra.mxu0 %v873
      %909 = vmatprep.subr.mxu0 0.0
      %910 = vmatpush2.xpose.msra.mxu0 0.0
      %911 = vmatprep.subr.mxu0 0.0
      %912 = vmatpush2.xpose.msra.mxu0 0.0
      %913 = vmatprep.subr.mxu0 0.0
      %914 = vmatpush2.xpose.msra.mxu0 0.0
      %915 = vmatprep.subr.mxu0 0.0
      %916 = vmatpush2.xpose.msra.mxu0 0.0
      %917 = vmatprep.subr.mxu0 0.0
      %918 = vmatpush2.xpose.msra.mxu0 0.0
      %919 = vmatprep.subr.mxu0 0.0
      %920 = vmatpush2.xpose.msra.mxu0 0.0
      %921 = vmatprep.subr.mxu0 0.0
      %922 = vmatpush2.xpose.msra.mxu0 0.0
      %923 = vmatprep.subr.mxu0 0.0
      %924 = vmatpush2.xpose.msra.mxu0 0.0
      %925 = vmatprep.subr.mxu0 0.0
      %926 = vmatpush2.xpose.msra.mxu0 0.0
      %927 = vmatprep.subr.mxu0 0.0
      %928 = vmatpush2.xpose.msra.mxu0 0.0
      %929 = vmatprep.subr.mxu0 0.0
      %930 = vmatpush2.xpose.msra.mxu0 0.0
      %931 = vmatprep.subr.mxu0 0.0
      %932 = vmatpush2.xpose.msra.mxu0 0.0
      %933 = vmatprep.subr.mxu0 0.0
      %934 = vmatpush2.xpose.msra.mxu0 0.0
      %935 = vmatprep.subr.mxu0 0.0
      %936 = vmatpush2.xpose.msra.mxu0 0.0
      %937 = vmatprep.subr.mxu0 0.0
      %938 = vmatpush2.xpose.msra.mxu0 0.0
      %939 = vmatprep.subr.mxu0 0.0
      %940 = vmatpush2.xpose.msra.mxu0 0.0
      %941 = vmatprep.mubr.f32.mxu0 0.0
      %942 = vmatmul.mubr.f32.gmra.mxu0 %v869
      %v943 = vpop.f32.mrf.mxu0
      %v944 = vadd.f32 0.0, %v943
      %v945 = vpop.f32.mrf.mxu0
      %946 = vmatprep.mubr.f32.mxu0 0.0
      %947 = vmatmul.mubr.f32.gmra.mxu0 %v871
      %v948 = vpop.f32.mrf.mxu0
      %v949 = vadd.f32 0.0, %v948
      %v950 = vpop.f32.mrf.mxu0
      %951 = vdwg.mxu0
      %v952 = vsel %vm748, %v944, -inf
      %953 = vmax.xlane.f32.xlu0 %v952
      %v954 = vpop.xlane.xlu0 %953
      %v955 = vsel %vm752, %v949, -inf
      %956 = vmax.xlane.f32.xlu0 %v955
      %v957 = vpop.xlane.xlu0 %956
      %v958 = vsub.f32 %v944, %v954
      %v959 = vsub.f32 %v949, %v957
      %v960 = vmul.f32 %v958, 1.442695
      %v961 = vpow.pop %v960
      %v962 = vmul.f32 %v959, 1.442695
      %v963 = vpow.pop %v962
      %v964 = vsel %vm748, %v961, 0.0
      %965 = vadd.xlane.f32.xlu0 %v964
      %v966 = vpop.xlane.xlu0 %965
      %v967 = vsel %vm752, %v963, 0.0
      %968 = vadd.xlane.f32.xlu0 %v967
      %v969 = vpop.xlane.xlu0 %968
      %v970 = vrcp.pop %v966
      %v971 = vrcp.pop %v969
      %v972 = vmul.f32 %v961, %v970
      %v973 = vmul.f32 %v963, %v971
      %974 = vrot.lane.b32.xlu0 %v640, 56
      %v975 = vpop.permute.xlu0 %974
      %976 = vrot.lane.b32.xlu0 %v645, 56
      %v977 = vpop.permute.xlu0 %976
      %v980 = vsel %vm748, %v972, 0
      %v983 = vsel %vm748, %v973, 0
      %v985 = vsel %vm783, %v977, 0
      %987 = vmatprep.subr.mxu0 0.0
      %988 = vmatpush1.msra.mxu0 0.0
      %989 = vmatprep.subr.mxu0 0.0
      %990 = vmatpush1.msra.mxu0 0.0
      %991 = vmatprep.subr.mxu0 0.0
      %992 = vmatpush1.msra.mxu0 0.0
      %993 = vmatprep.subr.mxu0 0.0
      %994 = vmatpush1.msra.mxu0 0.0
      %995 = vmatprep.subr.mxu0 0.0
      %996 = vmatpush1.msra.mxu0 0.0
      %997 = vmatprep.subr.mxu0 0.0
      %998 = vmatpush1.msra.mxu0 0.0
      %999 = vmatprep.subr.mxu0 0.0
      %1000 = vmatpush1.msra.mxu0 0.0
      %1001 = vmatprep.subr.mxu0 0.0
      %1002 = vmatpush1.msra.mxu0 0.0
      %1003 = vmatprep.subr.mxu0 0.0
      %1004 = vmatpush1.msra.mxu0 0.0
      %1005 = vmatprep.subr.mxu0 0.0
      %1006 = vmatpush1.msra.mxu0 0.0
      %1007 = vmatprep.subr.mxu0 0.0
      %1008 = vmatpush1.msra.mxu0 0.0
      %1009 = vmatprep.subr.mxu0 0.0
      %1010 = vmatpush1.msra.mxu0 0.0
      %1011 = vmatprep.subr.mxu0 0.0
      %1012 = vmatpush1.msra.mxu0 0.0
      %1013 = vmatprep.subr.mxu0 0.0
      %1014 = vmatpush1.msra.mxu0 0.0
      %1015 = vmatprep.subr.mxu0 0.0
      %1016 = vmatpush1.msra.mxu0 %v985
      %1017 = vmatprep.subr.mxu0 0.0
      %1018 = vmatpush1.msra.mxu0 %v975
      %1019 = vmatprep.subr.mxu0 0.0
      %1020 = vmatpush2.msra.mxu0 0.0
      %1021 = vmatprep.subr.mxu0 0.0
      %1022 = vmatpush2.msra.mxu0 0.0
      %1023 = vmatprep.subr.mxu0 0.0
      %1024 = vmatpush2.msra.mxu0 0.0
      %1025 = vmatprep.subr.mxu0 0.0
      %1026 = vmatpush2.msra.mxu0 0.0
      %1027 = vmatprep.subr.mxu0 0.0
      %1028 = vmatpush2.msra.mxu0 0.0
      %1029 = vmatprep.subr.mxu0 0.0
      %1030 = vmatpush2.msra.mxu0 0.0
      %1031 = vmatprep.subr.mxu0 0.0
      %1032 = vmatpush2.msra.mxu0 0.0
      %1033 = vmatprep.subr.mxu0 0.0
      %1034 = vmatpush2.msra.mxu0 0.0
      %1035 = vmatprep.subr.mxu0 0.0
      %1036 = vmatpush2.msra.mxu0 0.0
      %1037 = vmatprep.subr.mxu0 0.0
      %1038 = vmatpush2.msra.mxu0 0.0
      %1039 = vmatprep.subr.mxu0 0.0
      %1040 = vmatpush2.msra.mxu0 0.0
      %1041 = vmatprep.subr.mxu0 0.0
      %1042 = vmatpush2.msra.mxu0 0.0
      %1043 = vmatprep.subr.mxu0 0.0
      %1044 = vmatpush2.msra.mxu0 0.0
      %1045 = vmatprep.subr.mxu0 0.0
      %1046 = vmatpush2.msra.mxu0 0.0
      %1047 = vmatprep.subr.mxu0 0.0
      %1048 = vmatpush2.msra.mxu0 0.0
      %1049 = vmatprep.subr.mxu0 0.0
      %1050 = vmatpush2.msra.mxu0 0.0
      %1051 = vmatprep.mubr.f32.mxu0 0.0
      %1052 = vmatmul.mubr.f32.gmra.mxu0 %v980
      %v1053 = vpop.f32.mrf.mxu0
      %v1054 = vadd.f32 0.0, %v1053
      %v1055 = vpop.f32.mrf.mxu0
      %1056 = vmatprep.mubr.f32.mxu0 0.0
      %1057 = vmatmul.mubr.f32.gmra.mxu0 %v983
      %v1058 = vpop.f32.mrf.mxu0
      %v1059 = vadd.f32 0.0, %v1058
      %v1060 = vpop.f32.mrf.mxu0
      %1061 = vdwg.mxu0
      %1062 = vrot.lane.b32.xlu0 %v640, 112
      %v1063 = vpop.permute.xlu0 %1062
      %1064 = vrot.lane.b32.xlu0 %v645, 112
      %v1065 = vpop.permute.xlu0 %1064
      %1066 = vrot.lane.b32.xlu0 %v640, 80
      %v1067 = vpop.permute.xlu0 %1066
      %1068 = vrot.lane.b32.xlu0 %v645, 80
      %v1069 = vpop.permute.xlu0 %1068
      %v1070 = vsel %vm664, %v1063, 0
      %v1072 = vsel %vm664, %v1065, 0
      %v1074 = vsel %vm664, %v1067, 0
      %v1076 = vsel %vm664, %v1069, 0
      %1078 = vmatprep.subr.mxu0 0.0
      %1079 = vmatpush1.xpose.msra.mxu0 0.0
      %1080 = vmatprep.subr.mxu0 0.0
      %1081 = vmatpush1.xpose.msra.mxu0 0.0
      %1082 = vmatprep.subr.mxu0 0.0
      %1083 = vmatpush1.xpose.msra.mxu0 0.0
      %1084 = vmatprep.subr.mxu0 0.0
      %1085 = vmatpush1.xpose.msra.mxu0 0.0
      %1086 = vmatprep.subr.mxu0 0.0
      %1087 = vmatpush1.xpose.msra.mxu0 0.0
      %1088 = vmatprep.subr.mxu0 0.0
      %1089 = vmatpush1.xpose.msra.mxu0 0.0
      %1090 = vmatprep.subr.mxu0 0.0
      %1091 = vmatpush1.xpose.msra.mxu0 0.0
      %1092 = vmatprep.subr.mxu0 0.0
      %1093 = vmatpush1.xpose.msra.mxu0 0.0
      %1094 = vmatprep.subr.mxu0 0.0
      %1095 = vmatpush1.xpose.msra.mxu0 0.0
      %1096 = vmatprep.subr.mxu0 0.0
      %1097 = vmatpush1.xpose.msra.mxu0 0.0
      %1098 = vmatprep.subr.mxu0 0.0
      %1099 = vmatpush1.xpose.msra.mxu0 0.0
      %1100 = vmatprep.subr.mxu0 0.0
      %1101 = vmatpush1.xpose.msra.mxu0 0.0
      %1102 = vmatprep.subr.mxu0 0.0
      %1103 = vmatpush1.xpose.msra.mxu0 0.0
      %1104 = vmatprep.subr.mxu0 0.0
      %1105 = vmatpush1.xpose.msra.mxu0 0.0
      %1106 = vmatprep.subr.mxu0 0.0
      %1107 = vmatpush1.xpose.msra.mxu0 %v1076
      %1108 = vmatprep.subr.mxu0 0.0
      %1109 = vmatpush1.xpose.msra.mxu0 %v1074
      %1110 = vmatprep.subr.mxu0 0.0
      %1111 = vmatpush2.xpose.msra.mxu0 0.0
      %1112 = vmatprep.subr.mxu0 0.0
      %1113 = vmatpush2.xpose.msra.mxu0 0.0
      %1114 = vmatprep.subr.mxu0 0.0
      %1115 = vmatpush2.xpose.msra.mxu0 0.0
      %1116 = vmatprep.subr.mxu0 0.0
      %1117 = vmatpush2.xpose.msra.mxu0 0.0
      %1118 = vmatprep.subr.mxu0 0.0
      %1119 = vmatpush2.xpose.msra.mxu0 0.0
      %1120 = vmatprep.subr.mxu0 0.0
      %1121 = vmatpush2.xpose.msra.mxu0 0.0
      %1122 = vmatprep.subr.mxu0 0.0
      %1123 = vmatpush2.xpose.msra.mxu0 0.0
      %1124 = vmatprep.subr.mxu0 0.0
      %1125 = vmatpush2.xpose.msra.mxu0 0.0
      %1126 = vmatprep.subr.mxu0 0.0
      %1127 = vmatpush2.xpose.msra.mxu0 0.0
      %1128 = vmatprep.subr.mxu0 0.0
      %1129 = vmatpush2.xpose.msra.mxu0 0.0
      %1130 = vmatprep.subr.mxu0 0.0
      %1131 = vmatpush2.xpose.msra.mxu0 0.0
      %1132 = vmatprep.subr.mxu0 0.0
      %1133 = vmatpush2.xpose.msra.mxu0 0.0
      %1134 = vmatprep.subr.mxu0 0.0
      %1135 = vmatpush2.xpose.msra.mxu0 0.0
      %1136 = vmatprep.subr.mxu0 0.0
      %1137 = vmatpush2.xpose.msra.mxu0 0.0
      %1138 = vmatprep.subr.mxu0 0.0
      %1139 = vmatpush2.xpose.msra.mxu0 0.0
      %1140 = vmatprep.subr.mxu0 0.0
      %1141 = vmatpush2.xpose.msra.mxu0 0.0
      %1142 = vmatprep.mubr.f32.mxu0 0.0
      %1143 = vmatmul.mubr.f32.gmra.mxu0 %v1070
      %v1144 = vpop.f32.mrf.mxu0
      %v1145 = vadd.f32 0.0, %v1144
      %v1146 = vpop.f32.mrf.mxu0
      %1147 = vmatprep.mubr.f32.mxu0 0.0
      %1148 = vmatmul.mubr.f32.gmra.mxu0 %v1072
      %v1149 = vpop.f32.mrf.mxu0
      %v1150 = vadd.f32 0.0, %v1149
      %v1151 = vpop.f32.mrf.mxu0
      %1152 = vdwg.mxu0
      %v1153 = vsel %vm748, %v1145, -inf
      %1154 = vmax.xlane.f32.xlu0 %v1153
      %v1155 = vpop.xlane.xlu0 %1154
      %v1156 = vsel %vm752, %v1150, -inf
      %1157 = vmax.xlane.f32.xlu0 %v1156
      %v1158 = vpop.xlane.xlu0 %1157
      %v1159 = vsub.f32 %v1145, %v1155
      %v1160 = vsub.f32 %v1150, %v1158
      %v1161 = vmul.f32 %v1159, 1.442695
      %v1162 = vpow.pop %v1161
      %v1163 = vmul.f32 %v1160, 1.442695
      %v1164 = vpow.pop %v1163
      %v1165 = vsel %vm748, %v1162, 0.0
      %1166 = vadd.xlane.f32.xlu0 %v1165
      %v1167 = vpop.xlane.xlu0 %1166
      %v1168 = vsel %vm752, %v1164, 0.0
      %1169 = vadd.xlane.f32.xlu0 %v1168
      %v1170 = vpop.xlane.xlu0 %1169
      %v1171 = vrcp.pop %v1167
      %v1172 = vrcp.pop %v1170
      %v1173 = vmul.f32 %v1162, %v1171
      %v1174 = vmul.f32 %v1164, %v1172
      %1175 = vrot.lane.b32.xlu0 %v640, 48
      %v1176 = vpop.permute.xlu0 %1175
      %1177 = vrot.lane.b32.xlu0 %v645, 48
      %v1178 = vpop.permute.xlu0 %1177
      %v1181 = vsel %vm748, %v1173, 0
      %v1184 = vsel %vm748, %v1174, 0
      %v1186 = vsel %vm783, %v1178, 0
      %1188 = vmatprep.subr.mxu0 0.0
      %1189 = vmatpush1.msra.mxu0 0.0
      %1190 = vmatprep.subr.mxu0 0.0
      %1191 = vmatpush1.msra.mxu0 0.0
      %1192 = vmatprep.subr.mxu0 0.0
      %1193 = vmatpush1.msra.mxu0 0.0
      %1194 = vmatprep.subr.mxu0 0.0
      %1195 = vmatpush1.msra.mxu0 0.0
      %1196 = vmatprep.subr.mxu0 0.0
      %1197 = vmatpush1.msra.mxu0 0.0
      %1198 = vmatprep.subr.mxu0 0.0
      %1199 = vmatpush1.msra.mxu0 0.0
      %1200 = vmatprep.subr.mxu0 0.0
      %1201 = vmatpush1.msra.mxu0 0.0
      %1202 = vmatprep.subr.mxu0 0.0
      %1203 = vmatpush1.msra.mxu0 0.0
      %1204 = vmatprep.subr.mxu0 0.0
      %1205 = vmatpush1.msra.mxu0 0.0
      %1206 = vmatprep.subr.mxu0 0.0
      %1207 = vmatpush1.msra.mxu0 0.0
      %1208 = vmatprep.subr.mxu0 0.0
      %1209 = vmatpush1.msra.mxu0 0.0
      %1210 = vmatprep.subr.mxu0 0.0
      %1211 = vmatpush1.msra.mxu0 0.0
      %1212 = vmatprep.subr.mxu0 0.0
      %1213 = vmatpush1.msra.mxu0 0.0
      %1214 = vmatprep.subr.mxu0 0.0
      %1215 = vmatpush1.msra.mxu0 0.0
      %1216 = vmatprep.subr.mxu0 0.0
      %1217 = vmatpush1.msra.mxu0 %v1186
      %1218 = vmatprep.subr.mxu0 0.0
      %1219 = vmatpush1.msra.mxu0 %v1176
      %1220 = vmatprep.subr.mxu0 0.0
      %1221 = vmatpush2.msra.mxu0 0.0
      %1222 = vmatprep.subr.mxu0 0.0
      %1223 = vmatpush2.msra.mxu0 0.0
      %1224 = vmatprep.subr.mxu0 0.0
      %1225 = vmatpush2.msra.mxu0 0.0
      %1226 = vmatprep.subr.mxu0 0.0
      %1227 = vmatpush2.msra.mxu0 0.0
      %1228 = vmatprep.subr.mxu0 0.0
      %1229 = vmatpush2.msra.mxu0 0.0
      %1230 = vmatprep.subr.mxu0 0.0
      %1231 = vmatpush2.msra.mxu0 0.0
      %1232 = vmatprep.subr.mxu0 0.0
      %1233 = vmatpush2.msra.mxu0 0.0
      %1234 = vmatprep.subr.mxu0 0.0
      %1235 = vmatpush2.msra.mxu0 0.0
      %1236 = vmatprep.subr.mxu0 0.0
      %1237 = vmatpush2.msra.mxu0 0.0
      %1238 = vmatprep.subr.mxu0 0.0
      %1239 = vmatpush2.msra.mxu0 0.0
      %1240 = vmatprep.subr.mxu0 0.0
      %1241 = vmatpush2.msra.mxu0 0.0
      %1242 = vmatprep.subr.mxu0 0.0
      %1243 = vmatpush2.msra.mxu0 0.0
      %1244 = vmatprep.subr.mxu0 0.0
      %1245 = vmatpush2.msra.mxu0 0.0
      %1246 = vmatprep.subr.mxu0 0.0
      %1247 = vmatpush2.msra.mxu0 0.0
      %1248 = vmatprep.subr.mxu0 0.0
      %1249 = vmatpush2.msra.mxu0 0.0
      %1250 = vmatprep.subr.mxu0 0.0
      %1251 = vmatpush2.msra.mxu0 0.0
      %1252 = vmatprep.mubr.f32.mxu0 0.0
      %1253 = vmatmul.mubr.f32.gmra.mxu0 %v1181
      %v1254 = vpop.f32.mrf.mxu0
      %v1255 = vadd.f32 0.0, %v1254
      %v1256 = vpop.f32.mrf.mxu0
      %1257 = vmatprep.mubr.f32.mxu0 0.0
      %1258 = vmatmul.mubr.f32.gmra.mxu0 %v1184
      %v1259 = vpop.f32.mrf.mxu0
      %v1260 = vadd.f32 0.0, %v1259
      %v1261 = vpop.f32.mrf.mxu0
      %1262 = vdwg.mxu0
      %1263 = vrot.lane.b32.xlu0 %v640, 104
      %v1264 = vpop.permute.xlu0 %1263
      %1265 = vrot.lane.b32.xlu0 %v645, 104
      %v1266 = vpop.permute.xlu0 %1265
      %1267 = vrot.lane.b32.xlu0 %v640, 72
      %v1268 = vpop.permute.xlu0 %1267
      %1269 = vrot.lane.b32.xlu0 %v645, 72
      %v1270 = vpop.permute.xlu0 %1269
      %v1271 = vsel %vm664, %v1264, 0
      %v1273 = vsel %vm664, %v1266, 0
      %v1275 = vsel %vm664, %v1268, 0
      %v1277 = vsel %vm664, %v1270, 0
      %1279 = vmatprep.subr.mxu0 0.0
      %1280 = vmatpush1.xpose.msra.mxu0 0.0
      %1281 = vmatprep.subr.mxu0 0.0
      %1282 = vmatpush1.xpose.msra.mxu0 0.0
      %1283 = vmatprep.subr.mxu0 0.0
      %1284 = vmatpush1.xpose.msra.mxu0 0.0
      %1285 = vmatprep.subr.mxu0 0.0
      %1286 = vmatpush1.xpose.msra.mxu0 0.0
      %1287 = vmatprep.subr.mxu0 0.0
      %1288 = vmatpush1.xpose.msra.mxu0 0.0
      %1289 = vmatprep.subr.mxu0 0.0
      %1290 = vmatpush1.xpose.msra.mxu0 0.0
      %1291 = vmatprep.subr.mxu0 0.0
      %1292 = vmatpush1.xpose.msra.mxu0 0.0
      %1293 = vmatprep.subr.mxu0 0.0
      %1294 = vmatpush1.xpose.msra.mxu0 0.0
      %1295 = vmatprep.subr.mxu0 0.0
      %1296 = vmatpush1.xpose.msra.mxu0 0.0
      %1297 = vmatprep.subr.mxu0 0.0
      %1298 = vmatpush1.xpose.msra.mxu0 0.0
      %1299 = vmatprep.subr.mxu0 0.0
      %1300 = vmatpush1.xpose.msra.mxu0 0.0
      %1301 = vmatprep.subr.mxu0 0.0
      %1302 = vmatpush1.xpose.msra.mxu0 0.0
      %1303 = vmatprep.subr.mxu0 0.0
      %1304 = vmatpush1.xpose.msra.mxu0 0.0
      %1305 = vmatprep.subr.mxu0 0.0
      %1306 = vmatpush1.xpose.msra.mxu0 0.0
      %1307 = vmatprep.subr.mxu0 0.0
      %1308 = vmatpush1.xpose.msra.mxu0 %v1277
      %1309 = vmatprep.subr.mxu0 0.0
      %1310 = vmatpush1.xpose.msra.mxu0 %v1275
      %1311 = vmatprep.subr.mxu0 0.0
      %1312 = vmatpush2.xpose.msra.mxu0 0.0
      %1313 = vmatprep.subr.mxu0 0.0
      %1314 = vmatpush2.xpose.msra.mxu0 0.0
      %1315 = vmatprep.subr.mxu0 0.0
      %1316 = vmatpush2.xpose.msra.mxu0 0.0
      %1317 = vmatprep.subr.mxu0 0.0
      %1318 = vmatpush2.xpose.msra.mxu0 0.0
      %1319 = vmatprep.subr.mxu0 0.0
      %1320 = vmatpush2.xpose.msra.mxu0 0.0
      %1321 = vmatprep.subr.mxu0 0.0
      %1322 = vmatpush2.xpose.msra.mxu0 0.0
      %1323 = vmatprep.subr.mxu0 0.0
      %1324 = vmatpush2.xpose.msra.mxu0 0.0
      %1325 = vmatprep.subr.mxu0 0.0
      %1326 = vmatpush2.xpose.msra.mxu0 0.0
      %1327 = vmatprep.subr.mxu0 0.0
      %1328 = vmatpush2.xpose.msra.mxu0 0.0
      %1329 = vmatprep.subr.mxu0 0.0
      %1330 = vmatpush2.xpose.msra.mxu0 0.0
      %1331 = vmatprep.subr.mxu0 0.0
      %1332 = vmatpush2.xpose.msra.mxu0 0.0
      %1333 = vmatprep.subr.mxu0 0.0
      %1334 = vmatpush2.xpose.msra.mxu0 0.0
      %1335 = vmatprep.subr.mxu0 0.0
      %1336 = vmatpush2.xpose.msra.mxu0 0.0
      %1337 = vmatprep.subr.mxu0 0.0
      %1338 = vmatpush2.xpose.msra.mxu0 0.0
      %1339 = vmatprep.subr.mxu0 0.0
      %1340 = vmatpush2.xpose.msra.mxu0 0.0
      %1341 = vmatprep.subr.mxu0 0.0
      %1342 = vmatpush2.xpose.msra.mxu0 0.0
      %1343 = vmatprep.mubr.f32.mxu0 0.0
      %1344 = vmatmul.mubr.f32.gmra.mxu0 %v1271
      %v1345 = vpop.f32.mrf.mxu0
      %v1346 = vadd.f32 0.0, %v1345
      %v1347 = vpop.f32.mrf.mxu0
      %1348 = vmatprep.mubr.f32.mxu0 0.0
      %1349 = vmatmul.mubr.f32.gmra.mxu0 %v1273
      %v1350 = vpop.f32.mrf.mxu0
      %v1351 = vadd.f32 0.0, %v1350
      %v1352 = vpop.f32.mrf.mxu0
      %1353 = vdwg.mxu0
      %v1354 = vsel %vm748, %v1346, -inf
      %1355 = vmax.xlane.f32.xlu0 %v1354
      %v1356 = vpop.xlane.xlu0 %1355
      %v1357 = vsel %vm752, %v1351, -inf
      %1358 = vmax.xlane.f32.xlu0 %v1357
      %v1359 = vpop.xlane.xlu0 %1358
      %v1360 = vsub.f32 %v1346, %v1356
      %v1361 = vsub.f32 %v1351, %v1359
      %v1362 = vmul.f32 %v1360, 1.442695
      %v1363 = vpow.pop %v1362
      %v1364 = vmul.f32 %v1361, 1.442695
      %v1365 = vpow.pop %v1364
      %v1366 = vsel %vm748, %v1363, 0.0
      %1367 = vadd.xlane.f32.xlu0 %v1366
      %v1368 = vpop.xlane.xlu0 %1367
      %v1369 = vsel %vm752, %v1365, 0.0
      %1370 = vadd.xlane.f32.xlu0 %v1369
      %v1371 = vpop.xlane.xlu0 %1370
      %v1372 = vrcp.pop %v1368
      %v1373 = vrcp.pop %v1371
      %v1374 = vmul.f32 %v1363, %v1372
      %v1375 = vmul.f32 %v1365, %v1373
      %1376 = vrot.lane.b32.xlu0 %v640, 40
      %v1377 = vpop.permute.xlu0 %1376
      %1378 = vrot.lane.b32.xlu0 %v645, 40
      %v1379 = vpop.permute.xlu0 %1378
      %v1382 = vsel %vm748, %v1374, 0
      %v1385 = vsel %vm748, %v1375, 0
      %v1387 = vsel %vm783, %v1379, 0
      %1389 = vmatprep.subr.mxu0 0.0
      %1390 = vmatpush1.msra.mxu0 0.0
      %1391 = vmatprep.subr.mxu0 0.0
      %1392 = vmatpush1.msra.mxu0 0.0
      %1393 = vmatprep.subr.mxu0 0.0
      %1394 = vmatpush1.msra.mxu0 0.0
      %1395 = vmatprep.subr.mxu0 0.0
      %1396 = vmatpush1.msra.mxu0 0.0
      %1397 = vmatprep.subr.mxu0 0.0
      %1398 = vmatpush1.msra.mxu0 0.0
      %1399 = vmatprep.subr.mxu0 0.0
      %1400 = vmatpush1.msra.mxu0 0.0
      %1401 = vmatprep.subr.mxu0 0.0
      %1402 = vmatpush1.msra.mxu0 0.0
      %1403 = vmatprep.subr.mxu0 0.0
      %1404 = vmatpush1.msra.mxu0 0.0
      %1405 = vmatprep.subr.mxu0 0.0
      %1406 = vmatpush1.msra.mxu0 0.0
      %1407 = vmatprep.subr.mxu0 0.0
      %1408 = vmatpush1.msra.mxu0 0.0
      %1409 = vmatprep.subr.mxu0 0.0
      %1410 = vmatpush1.msra.mxu0 0.0
      %1411 = vmatprep.subr.mxu0 0.0
      %1412 = vmatpush1.msra.mxu0 0.0
      %1413 = vmatprep.subr.mxu0 0.0
      %1414 = vmatpush1.msra.mxu0 0.0
      %1415 = vmatprep.subr.mxu0 0.0
      %1416 = vmatpush1.msra.mxu0 0.0
      %1417 = vmatprep.subr.mxu0 0.0
      %1418 = vmatpush1.msra.mxu0 %v1387
      %1419 = vmatprep.subr.mxu0 0.0
      %1420 = vmatpush1.msra.mxu0 %v1377
      %1421 = vmatprep.subr.mxu0 0.0
      %1422 = vmatpush2.msra.mxu0 0.0
      %1423 = vmatprep.subr.mxu0 0.0
      %1424 = vmatpush2.msra.mxu0 0.0
      %1425 = vmatprep.subr.mxu0 0.0
      %1426 = vmatpush2.msra.mxu0 0.0
      %1427 = vmatprep.subr.mxu0 0.0
      %1428 = vmatpush2.msra.mxu0 0.0
      %1429 = vmatprep.subr.mxu0 0.0
      %1430 = vmatpush2.msra.mxu0 0.0
      %1431 = vmatprep.subr.mxu0 0.0
      %1432 = vmatpush2.msra.mxu0 0.0
      %1433 = vmatprep.subr.mxu0 0.0
      %1434 = vmatpush2.msra.mxu0 0.0
      %1435 = vmatprep.subr.mxu0 0.0
      %1436 = vmatpush2.msra.mxu0 0.0
      %1437 = vmatprep.subr.mxu0 0.0
      %1438 = vmatpush2.msra.mxu0 0.0
      %1439 = vmatprep.subr.mxu0 0.0
      %1440 = vmatpush2.msra.mxu0 0.0
      %1441 = vmatprep.subr.mxu0 0.0
      %1442 = vmatpush2.msra.mxu0 0.0
      %1443 = vmatprep.subr.mxu0 0.0
      %1444 = vmatpush2.msra.mxu0 0.0
      %1445 = vmatprep.subr.mxu0 0.0
      %1446 = vmatpush2.msra.mxu0 0.0
      %1447 = vmatprep.subr.mxu0 0.0
      %1448 = vmatpush2.msra.mxu0 0.0
      %1449 = vmatprep.subr.mxu0 0.0
      %1450 = vmatpush2.msra.mxu0 0.0
      %1451 = vmatprep.subr.mxu0 0.0
      %1452 = vmatpush2.msra.mxu0 0.0
      %1453 = vmatprep.mubr.f32.mxu0 0.0
      %1454 = vmatmul.mubr.f32.gmra.mxu0 %v1382
      %v1455 = vpop.f32.mrf.mxu0
      %v1456 = vadd.f32 0.0, %v1455
      %v1457 = vpop.f32.mrf.mxu0
      %1458 = vmatprep.mubr.f32.mxu0 0.0
      %1459 = vmatmul.mubr.f32.gmra.mxu0 %v1385
      %v1460 = vpop.f32.mrf.mxu0
      %v1461 = vadd.f32 0.0, %v1460
      %v1462 = vpop.f32.mrf.mxu0
      %1463 = vdwg.mxu0
      %1466 = vrot.lane.b32.xlu0 %v1054, 8
      %v1467 = vpop.permute.xlu0 %1466
      %1468 = vrot.lane.b32.xlu0 %v1059, 8
      %v1469 = vpop.permute.xlu0 %1468
      %1474 = vrot.lane.b32.xlu0 %v1255, 16
      %v1475 = vpop.permute.xlu0 %1474
      %1476 = vrot.lane.b32.xlu0 %v1260, 16
      %v1477 = vpop.permute.xlu0 %1476
      %1482 = vrot.lane.b32.xlu0 %v1456, 24
      %v1483 = vpop.permute.xlu0 %1482
      %1484 = vrot.lane.b32.xlu0 %v1461, 24
      %v1485 = vpop.permute.xlu0 %1484
      %v1488 = vsel %vm664, %v853, %v1467
      %v1489 = vsel %vm664, %v858, %v1469
      %vm1490 = vcmask 130048
      %v1491 = vsel %vm1490, %v1488, %v1475
      %v1492 = vsel %vm1490, %v1489, %v1477
      %vm1493 = vcmask 195584
      %v1494 = vsel %vm1493, %v1491, %v1483
      %v1495 = vsel %vm1493, %v1492, %v1485
      %vm1498 = vcmask 1041408
      %v1499 = vrot.slane %v645, 6
      %v1500 = vrot.slane %v650, 6
      %v1501 = vsel %vm1498, %v1499, %v1500
      %v1502 = vrot.slane %v655, 6
      %v1503 = vsel %vm1498, %v1500, %v1502
      %1504 = vrot.lane.b32.xlu0 %v1501, 96
      %v1505 = vpop.permute.xlu0 %1504
      %1506 = vrot.lane.b32.xlu0 %v1503, 96
      %v1507 = vpop.permute.xlu0 %1506
      %v1508 = vsel %vm664, %v1501, 0
      %v1510 = vsel %vm664, %v1503, 0
      %v1512 = vsel %vm664, %v1505, 0
      %v1514 = vsel %vm664, %v1507, 0
      %1516 = vmatprep.subr.mxu0 0.0
      %1517 = vmatpush1.xpose.msra.mxu0 0.0
      %1518 = vmatprep.subr.mxu0 0.0
      %1519 = vmatpush1.xpose.msra.mxu0 0.0
      %1520 = vmatprep.subr.mxu0 0.0
      %1521 = vmatpush1.xpose.msra.mxu0 0.0
      %1522 = vmatprep.subr.mxu0 0.0
      %1523 = vmatpush1.xpose.msra.mxu0 0.0
      %1524 = vmatprep.subr.mxu0 0.0
      %1525 = vmatpush1.xpose.msra.mxu0 0.0
      %1526 = vmatprep.subr.mxu0 0.0
      %1527 = vmatpush1.xpose.msra.mxu0 0.0
      %1528 = vmatprep.subr.mxu0 0.0
      %1529 = vmatpush1.xpose.msra.mxu0 0.0
      %1530 = vmatprep.subr.mxu0 0.0
      %1531 = vmatpush1.xpose.msra.mxu0 0.0
      %1532 = vmatprep.subr.mxu0 0.0
      %1533 = vmatpush1.xpose.msra.mxu0 0.0
      %1534 = vmatprep.subr.mxu0 0.0
      %1535 = vmatpush1.xpose.msra.mxu0 0.0
      %1536 = vmatprep.subr.mxu0 0.0
      %1537 = vmatpush1.xpose.msra.mxu0 0.0
      %1538 = vmatprep.subr.mxu0 0.0
      %1539 = vmatpush1.xpose.msra.mxu0 0.0
      %1540 = vmatprep.subr.mxu0 0.0
      %1541 = vmatpush1.xpose.msra.mxu0 0.0
      %1542 = vmatprep.subr.mxu0 0.0
      %1543 = vmatpush1.xpose.msra.mxu0 0.0
      %1544 = vmatprep.subr.mxu0 0.0
      %1545 = vmatpush1.xpose.msra.mxu0 %v1514
      %1546 = vmatprep.subr.mxu0 0.0
      %1547 = vmatpush1.xpose.msra.mxu0 %v1512
      %1548 = vmatprep.subr.mxu0 0.0
      %1549 = vmatpush2.xpose.msra.mxu0 0.0
      %1550 = vmatprep.subr.mxu0 0.0
      %1551 = vmatpush2.xpose.msra.mxu0 0.0
      %1552 = vmatprep.subr.mxu0 0.0
      %1553 = vmatpush2.xpose.msra.mxu0 0.0
      %1554 = vmatprep.subr.mxu0 0.0
      %1555 = vmatpush2.xpose.msra.mxu0 0.0
      %1556 = vmatprep.subr.mxu0 0.0
      %1557 = vmatpush2.xpose.msra.mxu0 0.0
      %1558 = vmatprep.subr.mxu0 0.0
      %1559 = vmatpush2.xpose.msra.mxu0 0.0
      %1560 = vmatprep.subr.mxu0 0.0
      %1561 = vmatpush2.xpose.msra.mxu0 0.0
      %1562 = vmatprep.subr.mxu0 0.0
      %1563 = vmatpush2.xpose.msra.mxu0 0.0
      %1564 = vmatprep.subr.mxu0 0.0
      %1565 = vmatpush2.xpose.msra.mxu0 0.0
      %1566 = vmatprep.subr.mxu0 0.0
      %1567 = vmatpush2.xpose.msra.mxu0 0.0
      %1568 = vmatprep.subr.mxu0 0.0
      %1569 = vmatpush2.xpose.msra.mxu0 0.0
      %1570 = vmatprep.subr.mxu0 0.0
      %1571 = vmatpush2.xpose.msra.mxu0 0.0
      %1572 = vmatprep.subr.mxu0 0.0
      %1573 = vmatpush2.xpose.msra.mxu0 0.0
      %1574 = vmatprep.subr.mxu0 0.0
      %1575 = vmatpush2.xpose.msra.mxu0 0.0
      %1576 = vmatprep.subr.mxu0 0.0
      %1577 = vmatpush2.xpose.msra.mxu0 0.0
      %1578 = vmatprep.subr.mxu0 0.0
      %1579 = vmatpush2.xpose.msra.mxu0 0.0
      %1580 = vmatprep.mubr.f32.mxu0 0.0
      %1581 = vmatmul.mubr.f32.gmra.mxu0 %v1508
      %v1582 = vpop.f32.mrf.mxu0
      %v1583 = vadd.f32 0.0, %v1582
      %v1584 = vpop.f32.mrf.mxu0
      %1585 = vmatprep.mubr.f32.mxu0 0.0
      %1586 = vmatmul.mubr.f32.gmra.mxu0 %v1510
      %v1587 = vpop.f32.mrf.mxu0
      %v1588 = vadd.f32 0.0, %v1587
      %v1589 = vpop.f32.mrf.mxu0
      %1590 = vdwg.mxu0
      %v1591 = vsel %vm748, %v1583, -inf
      %1592 = vmax.xlane.f32.xlu0 %v1591
      %v1593 = vpop.xlane.xlu0 %1592
      %v1594 = vsel %vm752, %v1588, -inf
      %1595 = vmax.xlane.f32.xlu0 %v1594
      %v1596 = vpop.xlane.xlu0 %1595
      %v1597 = vsub.f32 %v1583, %v1593
      %v1598 = vsub.f32 %v1588, %v1596
      %v1599 = vmul.f32 %v1597, 1.442695
      %v1600 = vpow.pop %v1599
      %v1601 = vmul.f32 %v1598, 1.442695
      %v1602 = vpow.pop %v1601
      %v1603 = vsel %vm748, %v1600, 0.0
      %1604 = vadd.xlane.f32.xlu0 %v1603
      %v1605 = vpop.xlane.xlu0 %1604
      %v1606 = vsel %vm752, %v1602, 0.0
      %1607 = vadd.xlane.f32.xlu0 %v1606
      %v1608 = vpop.xlane.xlu0 %1607
      %v1609 = vrcp.pop %v1605
      %v1610 = vrcp.pop %v1608
      %v1611 = vmul.f32 %v1600, %v1609
      %v1612 = vmul.f32 %v1602, %v1610
      %1613 = vrot.lane.b32.xlu0 %v1501, 64
      %v1614 = vpop.permute.xlu0 %1613
      %1615 = vrot.lane.b32.xlu0 %v1503, 64
      %v1616 = vpop.permute.xlu0 %1615
      %v1619 = vsel %vm748, %v1611, 0
      %v1622 = vsel %vm748, %v1612, 0
      %v1624 = vsel %vm783, %v1616, 0
      %1626 = vmatprep.subr.mxu0 0.0
      %1627 = vmatpush1.msra.mxu0 0.0
      %1628 = vmatprep.subr.mxu0 0.0
      %1629 = vmatpush1.msra.mxu0 0.0
      %1630 = vmatprep.subr.mxu0 0.0
      %1631 = vmatpush1.msra.mxu0 0.0
      %1632 = vmatprep.subr.mxu0 0.0
      %1633 = vmatpush1.msra.mxu0 0.0
      %1634 = vmatprep.subr.mxu0 0.0
      %1635 = vmatpush1.msra.mxu0 0.0
      %1636 = vmatprep.subr.mxu0 0.0
      %1637 = vmatpush1.msra.mxu0 0.0
      %1638 = vmatprep.subr.mxu0 0.0
      %1639 = vmatpush1.msra.mxu0 0.0
      %1640 = vmatprep.subr.mxu0 0.0
      %1641 = vmatpush1.msra.mxu0 0.0
      %1642 = vmatprep.subr.mxu0 0.0
      %1643 = vmatpush1.msra.mxu0 0.0
      %1644 = vmatprep.subr.mxu0 0.0
      %1645 = vmatpush1.msra.mxu0 0.0
      %1646 = vmatprep.subr.mxu0 0.0
      %1647 = vmatpush1.msra.mxu0 0.0
      %1648 = vmatprep.subr.mxu0 0.0
      %1649 = vmatpush1.msra.mxu0 0.0
      %1650 = vmatprep.subr.mxu0 0.0
      %1651 = vmatpush1.msra.mxu0 0.0
      %1652 = vmatprep.subr.mxu0 0.0
      %1653 = vmatpush1.msra.mxu0 0.0
      %1654 = vmatprep.subr.mxu0 0.0
      %1655 = vmatpush1.msra.mxu0 %v1624
      %1656 = vmatprep.subr.mxu0 0.0
      %1657 = vmatpush1.msra.mxu0 %v1614
      %1658 = vmatprep.subr.mxu0 0.0
      %1659 = vmatpush2.msra.mxu0 0.0
      %1660 = vmatprep.subr.mxu0 0.0
      %1661 = vmatpush2.msra.mxu0 0.0
      %1662 = vmatprep.subr.mxu0 0.0
      %1663 = vmatpush2.msra.mxu0 0.0
      %1664 = vmatprep.subr.mxu0 0.0
      %1665 = vmatpush2.msra.mxu0 0.0
      %1666 = vmatprep.subr.mxu0 0.0
      %1667 = vmatpush2.msra.mxu0 0.0
      %1668 = vmatprep.subr.mxu0 0.0
      %1669 = vmatpush2.msra.mxu0 0.0
      %1670 = vmatprep.subr.mxu0 0.0
      %1671 = vmatpush2.msra.mxu0 0.0
      %1672 = vmatprep.subr.mxu0 0.0
      %1673 = vmatpush2.msra.mxu0 0.0
      %1674 = vmatprep.subr.mxu0 0.0
      %1675 = vmatpush2.msra.mxu0 0.0
      %1676 = vmatprep.subr.mxu0 0.0
      %1677 = vmatpush2.msra.mxu0 0.0
      %1678 = vmatprep.subr.mxu0 0.0
      %1679 = vmatpush2.msra.mxu0 0.0
      %1680 = vmatprep.subr.mxu0 0.0
      %1681 = vmatpush2.msra.mxu0 0.0
      %1682 = vmatprep.subr.mxu0 0.0
      %1683 = vmatpush2.msra.mxu0 0.0
      %1684 = vmatprep.subr.mxu0 0.0
      %1685 = vmatpush2.msra.mxu0 0.0
      %1686 = vmatprep.subr.mxu0 0.0
      %1687 = vmatpush2.msra.mxu0 0.0
      %1688 = vmatprep.subr.mxu0 0.0
      %1689 = vmatpush2.msra.mxu0 0.0
      %1690 = vmatprep.mubr.f32.mxu0 0.0
      %1691 = vmatmul.mubr.f32.gmra.mxu0 %v1619
      %v1692 = vpop.f32.mrf.mxu0
      %v1693 = vadd.f32 0.0, %v1692
      %v1694 = vpop.f32.mrf.mxu0
      %1695 = vmatprep.mubr.f32.mxu0 0.0
      %1696 = vmatmul.mubr.f32.gmra.mxu0 %v1622
      %v1697 = vpop.f32.mrf.mxu0
      %v1698 = vadd.f32 0.0, %v1697
      %v1699 = vpop.f32.mrf.mxu0
      %1700 = vdwg.mxu0
      %1701 = vrot.lane.b32.xlu0 %v1501, 120
      %v1702 = vpop.permute.xlu0 %1701
      %1703 = vrot.lane.b32.xlu0 %v1503, 120
      %v1704 = vpop.permute.xlu0 %1703
      %1705 = vrot.lane.b32.xlu0 %v1501, 88
      %v1706 = vpop.permute.xlu0 %1705
      %1707 = vrot.lane.b32.xlu0 %v1503, 88
      %v1708 = vpop.permute.xlu0 %1707
      %v1709 = vsel %vm664, %v1702, 0
      %v1711 = vsel %vm664, %v1704, 0
      %v1713 = vsel %vm664, %v1706, 0
      %v1715 = vsel %vm664, %v1708, 0
      %1717 = vmatprep.subr.mxu0 0.0
      %1718 = vmatpush1.xpose.msra.mxu0 0.0
      %1719 = vmatprep.subr.mxu0 0.0
      %1720 = vmatpush1.xpose.msra.mxu0 0.0
      %1721 = vmatprep.subr.mxu0 0.0
      %1722 = vmatpush1.xpose.msra.mxu0 0.0
      %1723 = vmatprep.subr.mxu0 0.0
      %1724 = vmatpush1.xpose.msra.mxu0 0.0
      %1725 = vmatprep.subr.mxu0 0.0
      %1726 = vmatpush1.xpose.msra.mxu0 0.0
      %1727 = vmatprep.subr.mxu0 0.0
      %1728 = vmatpush1.xpose.msra.mxu0 0.0
      %1729 = vmatprep.subr.mxu0 0.0
      %1730 = vmatpush1.xpose.msra.mxu0 0.0
      %1731 = vmatprep.subr.mxu0 0.0
      %1732 = vmatpush1.xpose.msra.mxu0 0.0
      %1733 = vmatprep.subr.mxu0 0.0
      %1734 = vmatpush1.xpose.msra.mxu0 0.0
      %1735 = vmatprep.subr.mxu0 0.0
      %1736 = vmatpush1.xpose.msra.mxu0 0.0
      %1737 = vmatprep.subr.mxu0 0.0
      %1738 = vmatpush1.xpose.msra.mxu0 0.0
      %1739 = vmatprep.subr.mxu0 0.0
      %1740 = vmatpush1.xpose.msra.mxu0 0.0
      %1741 = vmatprep.subr.mxu0 0.0
      %1742 = vmatpush1.xpose.msra.mxu0 0.0
      %1743 = vmatprep.subr.mxu0 0.0
      %1744 = vmatpush1.xpose.msra.mxu0 0.0
      %1745 = vmatprep.subr.mxu0 0.0
      %1746 = vmatpush1.xpose.msra.mxu0 %v1715
      %1747 = vmatprep.subr.mxu0 0.0
      %1748 = vmatpush1.xpose.msra.mxu0 %v1713
      %1749 = vmatprep.subr.mxu0 0.0
      %1750 = vmatpush2.xpose.msra.mxu0 0.0
      %1751 = vmatprep.subr.mxu0 0.0
      %1752 = vmatpush2.xpose.msra.mxu0 0.0
      %1753 = vmatprep.subr.mxu0 0.0
      %1754 = vmatpush2.xpose.msra.mxu0 0.0
      %1755 = vmatprep.subr.mxu0 0.0
      %1756 = vmatpush2.xpose.msra.mxu0 0.0
      %1757 = vmatprep.subr.mxu0 0.0
      %1758 = vmatpush2.xpose.msra.mxu0 0.0
      %1759 = vmatprep.subr.mxu0 0.0
      %1760 = vmatpush2.xpose.msra.mxu0 0.0
      %1761 = vmatprep.subr.mxu0 0.0
      %1762 = vmatpush2.xpose.msra.mxu0 0.0
      %1763 = vmatprep.subr.mxu0 0.0
      %1764 = vmatpush2.xpose.msra.mxu0 0.0
      %1765 = vmatprep.subr.mxu0 0.0
      %1766 = vmatpush2.xpose.msra.mxu0 0.0
      %1767 = vmatprep.subr.mxu0 0.0
      %1768 = vmatpush2.xpose.msra.mxu0 0.0
      %1769 = vmatprep.subr.mxu0 0.0
      %1770 = vmatpush2.xpose.msra.mxu0 0.0
      %1771 = vmatprep.subr.mxu0 0.0
      %1772 = vmatpush2.xpose.msra.mxu0 0.0
      %1773 = vmatprep.subr.mxu0 0.0
      %1774 = vmatpush2.xpose.msra.mxu0 0.0
      %1775 = vmatprep.subr.mxu0 0.0
      %1776 = vmatpush2.xpose.msra.mxu0 0.0
      %1777 = vmatprep.subr.mxu0 0.0
      %1778 = vmatpush2.xpose.msra.mxu0 0.0
      %1779 = vmatprep.subr.mxu0 0.0
      %1780 = vmatpush2.xpose.msra.mxu0 0.0
      %1781 = vmatprep.mubr.f32.mxu0 0.0
      %1782 = vmatmul.mubr.f32.gmra.mxu0 %v1709
      %v1783 = vpop.f32.mrf.mxu0
      %v1784 = vadd.f32 0.0, %v1783
      %v1785 = vpop.f32.mrf.mxu0
      %1786 = vmatprep.mubr.f32.mxu0 0.0
      %1787 = vmatmul.mubr.f32.gmra.mxu0 %v1711
      %v1788 = vpop.f32.mrf.mxu0
      %v1789 = vadd.f32 0.0, %v1788
      %v1790 = vpop.f32.mrf.mxu0
      %1791 = vdwg.mxu0
      %v1792 = vsel %vm748, %v1784, -inf
      %1793 = vmax.xlane.f32.xlu0 %v1792
      %v1794 = vpop.xlane.xlu0 %1793
      %v1795 = vsel %vm752, %v1789, -inf
      %1796 = vmax.xlane.f32.xlu0 %v1795
      %v1797 = vpop.xlane.xlu0 %1796
      %v1798 = vsub.f32 %v1784, %v1794
      %v1799 = vsub.f32 %v1789, %v1797
      %v1800 = vmul.f32 %v1798, 1.442695
      %v1801 = vpow.pop %v1800
      %v1802 = vmul.f32 %v1799, 1.442695
      %v1803 = vpow.pop %v1802
      %v1804 = vsel %vm748, %v1801, 0.0
      %1805 = vadd.xlane.f32.xlu0 %v1804
      %v1806 = vpop.xlane.xlu0 %1805
      %v1807 = vsel %vm752, %v1803, 0.0
      %1808 = vadd.xlane.f32.xlu0 %v1807
      %v1809 = vpop.xlane.xlu0 %1808
      %v1810 = vrcp.pop %v1806
      %v1811 = vrcp.pop %v1809
      %v1812 = vmul.f32 %v1801, %v1810
      %v1813 = vmul.f32 %v1803, %v1811
      %1814 = vrot.lane.b32.xlu0 %v1501, 56
      %v1815 = vpop.permute.xlu0 %1814
      %1816 = vrot.lane.b32.xlu0 %v1503, 56
      %v1817 = vpop.permute.xlu0 %1816
      %v1820 = vsel %vm748, %v1812, 0
      %v1823 = vsel %vm748, %v1813, 0
      %v1825 = vsel %vm783, %v1817, 0
      %1827 = vmatprep.subr.mxu0 0.0
      %1828 = vmatpush1.msra.mxu0 0.0
      %1829 = vmatprep.subr.mxu0 0.0
      %1830 = vmatpush1.msra.mxu0 0.0
      %1831 = vmatprep.subr.mxu0 0.0
      %1832 = vmatpush1.msra.mxu0 0.0
      %1833 = vmatprep.subr.mxu0 0.0
      %1834 = vmatpush1.msra.mxu0 0.0
      %1835 = vmatprep.subr.mxu0 0.0
      %1836 = vmatpush1.msra.mxu0 0.0
      %1837 = vmatprep.subr.mxu0 0.0
      %1838 = vmatpush1.msra.mxu0 0.0
      %1839 = vmatprep.subr.mxu0 0.0
      %1840 = vmatpush1.msra.mxu0 0.0
      %1841 = vmatprep.subr.mxu0 0.0
      %1842 = vmatpush1.msra.mxu0 0.0
      %1843 = vmatprep.subr.mxu0 0.0
      %1844 = vmatpush1.msra.mxu0 0.0
      %1845 = vmatprep.subr.mxu0 0.0
      %1846 = vmatpush1.msra.mxu0 0.0
      %1847 = vmatprep.subr.mxu0 0.0
      %1848 = vmatpush1.msra.mxu0 0.0
      %1849 = vmatprep.subr.mxu0 0.0
      %1850 = vmatpush1.msra.mxu0 0.0
      %1851 = vmatprep.subr.mxu0 0.0
      %1852 = vmatpush1.msra.mxu0 0.0
      %1853 = vmatprep.subr.mxu0 0.0
      %1854 = vmatpush1.msra.mxu0 0.0
      %1855 = vmatprep.subr.mxu0 0.0
      %1856 = vmatpush1.msra.mxu0 %v1825
      %1857 = vmatprep.subr.mxu0 0.0
      %1858 = vmatpush1.msra.mxu0 %v1815
      %1859 = vmatprep.subr.mxu0 0.0
      %1860 = vmatpush2.msra.mxu0 0.0
      %1861 = vmatprep.subr.mxu0 0.0
      %1862 = vmatpush2.msra.mxu0 0.0
      %1863 = vmatprep.subr.mxu0 0.0
      %1864 = vmatpush2.msra.mxu0 0.0
      %1865 = vmatprep.subr.mxu0 0.0
      %1866 = vmatpush2.msra.mxu0 0.0
      %1867 = vmatprep.subr.mxu0 0.0
      %1868 = vmatpush2.msra.mxu0 0.0
      %1869 = vmatprep.subr.mxu0 0.0
      %1870 = vmatpush2.msra.mxu0 0.0
      %1871 = vmatprep.subr.mxu0 0.0
      %1872 = vmatpush2.msra.mxu0 0.0
      %1873 = vmatprep.subr.mxu0 0.0
      %1874 = vmatpush2.msra.mxu0 0.0
      %1875 = vmatprep.subr.mxu0 0.0
      %1876 = vmatpush2.msra.mxu0 0.0
      %1877 = vmatprep.subr.mxu0 0.0
      %1878 = vmatpush2.msra.mxu0 0.0
      %1879 = vmatprep.subr.mxu0 0.0
      %1880 = vmatpush2.msra.mxu0 0.0
      %1881 = vmatprep.subr.mxu0 0.0
      %1882 = vmatpush2.msra.mxu0 0.0
      %1883 = vmatprep.subr.mxu0 0.0
      %1884 = vmatpush2.msra.mxu0 0.0
      %1885 = vmatprep.subr.mxu0 0.0
      %1886 = vmatpush2.msra.mxu0 0.0
      %1887 = vmatprep.subr.mxu0 0.0
      %1888 = vmatpush2.msra.mxu0 0.0
      %1889 = vmatprep.subr.mxu0 0.0
      %1890 = vmatpush2.msra.mxu0 0.0
      %1891 = vmatprep.mubr.f32.mxu0 0.0
      %1892 = vmatmul.mubr.f32.gmra.mxu0 %v1820
      %v1893 = vpop.f32.mrf.mxu0
      %v1894 = vadd.f32 0.0, %v1893
      %v1895 = vpop.f32.mrf.mxu0
      %1896 = vmatprep.mubr.f32.mxu0 0.0
      %1897 = vmatmul.mubr.f32.gmra.mxu0 %v1823
      %v1898 = vpop.f32.mrf.mxu0
      %v1899 = vadd.f32 0.0, %v1898
      %v1900 = vpop.f32.mrf.mxu0
      %1901 = vdwg.mxu0
      %1902 = vrot.lane.b32.xlu0 %v1501, 112
      %v1903 = vpop.permute.xlu0 %1902
      %1904 = vrot.lane.b32.xlu0 %v1503, 112
      %v1905 = vpop.permute.xlu0 %1904
      %1906 = vrot.lane.b32.xlu0 %v1501, 80
      %v1907 = vpop.permute.xlu0 %1906
      %1908 = vrot.lane.b32.xlu0 %v1503, 80
      %v1909 = vpop.permute.xlu0 %1908
      %v1910 = vsel %vm664, %v1903, 0
      %v1912 = vsel %vm664, %v1905, 0
      %v1914 = vsel %vm664, %v1907, 0
      %v1916 = vsel %vm664, %v1909, 0
      %1918 = vmatprep.subr.mxu0 0.0
      %1919 = vmatpush1.xpose.msra.mxu0 0.0
      %1920 = vmatprep.subr.mxu0 0.0
      %1921 = vmatpush1.xpose.msra.mxu0 0.0
      %1922 = vmatprep.subr.mxu0 0.0
      %1923 = vmatpush1.xpose.msra.mxu0 0.0
      %1924 = vmatprep.subr.mxu0 0.0
      %1925 = vmatpush1.xpose.msra.mxu0 0.0
      %1926 = vmatprep.subr.mxu0 0.0
      %1927 = vmatpush1.xpose.msra.mxu0 0.0
      %1928 = vmatprep.subr.mxu0 0.0
      %1929 = vmatpush1.xpose.msra.mxu0 0.0
      %1930 = vmatprep.subr.mxu0 0.0
      %1931 = vmatpush1.xpose.msra.mxu0 0.0
      %1932 = vmatprep.subr.mxu0 0.0
      %1933 = vmatpush1.xpose.msra.mxu0 0.0
      %1934 = vmatprep.subr.mxu0 0.0
      %1935 = vmatpush1.xpose.msra.mxu0 0.0
      %1936 = vmatprep.subr.mxu0 0.0
      %1937 = vmatpush1.xpose.msra.mxu0 0.0
      %1938 = vmatprep.subr.mxu0 0.0
      %1939 = vmatpush1.xpose.msra.mxu0 0.0
      %1940 = vmatprep.subr.mxu0 0.0
      %1941 = vmatpush1.xpose.msra.mxu0 0.0
      %1942 = vmatprep.subr.mxu0 0.0
      %1943 = vmatpush1.xpose.msra.mxu0 0.0
      %1944 = vmatprep.subr.mxu0 0.0
      %1945 = vmatpush1.xpose.msra.mxu0 0.0
      %1946 = vmatprep.subr.mxu0 0.0
      %1947 = vmatpush1.xpose.msra.mxu0 %v1916
      %1948 = vmatprep.subr.mxu0 0.0
      %1949 = vmatpush1.xpose.msra.mxu0 %v1914
      %1950 = vmatprep.subr.mxu0 0.0
      %1951 = vmatpush2.xpose.msra.mxu0 0.0
      %1952 = vmatprep.subr.mxu0 0.0
      %1953 = vmatpush2.xpose.msra.mxu0 0.0
      %1954 = vmatprep.subr.mxu0 0.0
      %1955 = vmatpush2.xpose.msra.mxu0 0.0
      %1956 = vmatprep.subr.mxu0 0.0
      %1957 = vmatpush2.xpose.msra.mxu0 0.0
      %1958 = vmatprep.subr.mxu0 0.0
      %1959 = vmatpush2.xpose.msra.mxu0 0.0
      %1960 = vmatprep.subr.mxu0 0.0
      %1961 = vmatpush2.xpose.msra.mxu0 0.0
      %1962 = vmatprep.subr.mxu0 0.0
      %1963 = vmatpush2.xpose.msra.mxu0 0.0
      %1964 = vmatprep.subr.mxu0 0.0
      %1965 = vmatpush2.xpose.msra.mxu0 0.0
      %1966 = vmatprep.subr.mxu0 0.0
      %1967 = vmatpush2.xpose.msra.mxu0 0.0
      %1968 = vmatprep.subr.mxu0 0.0
      %1969 = vmatpush2.xpose.msra.mxu0 0.0
      %1970 = vmatprep.subr.mxu0 0.0
      %1971 = vmatpush2.xpose.msra.mxu0 0.0
      %1972 = vmatprep.subr.mxu0 0.0
      %1973 = vmatpush2.xpose.msra.mxu0 0.0
      %1974 = vmatprep.subr.mxu0 0.0
      %1975 = vmatpush2.xpose.msra.mxu0 0.0
      %1976 = vmatprep.subr.mxu0 0.0
      %1977 = vmatpush2.xpose.msra.mxu0 0.0
      %1978 = vmatprep.subr.mxu0 0.0
      %1979 = vmatpush2.xpose.msra.mxu0 0.0
      %1980 = vmatprep.subr.mxu0 0.0
      %1981 = vmatpush2.xpose.msra.mxu0 0.0
      %1982 = vmatprep.mubr.f32.mxu0 0.0
      %1983 = vmatmul.mubr.f32.gmra.mxu0 %v1910
      %v1984 = vpop.f32.mrf.mxu0
      %v1985 = vadd.f32 0.0, %v1984
      %v1986 = vpop.f32.mrf.mxu0
      %1987 = vmatprep.mubr.f32.mxu0 0.0
      %1988 = vmatmul.mubr.f32.gmra.mxu0 %v1912
      %v1989 = vpop.f32.mrf.mxu0
      %v1990 = vadd.f32 0.0, %v1989
      %v1991 = vpop.f32.mrf.mxu0
      %1992 = vdwg.mxu0
      %v1993 = vsel %vm748, %v1985, -inf
      %1994 = vmax.xlane.f32.xlu0 %v1993
      %v1995 = vpop.xlane.xlu0 %1994
      %v1996 = vsel %vm752, %v1990, -inf
      %1997 = vmax.xlane.f32.xlu0 %v1996
      %v1998 = vpop.xlane.xlu0 %1997
      %v1999 = vsub.f32 %v1985, %v1995
      %v2000 = vsub.f32 %v1990, %v1998
      %v2001 = vmul.f32 %v1999, 1.442695
      %v2002 = vpow.pop %v2001
      %v2003 = vmul.f32 %v2000, 1.442695
      %v2004 = vpow.pop %v2003
      %v2005 = vsel %vm748, %v2002, 0.0
      %2006 = vadd.xlane.f32.xlu0 %v2005
      %v2007 = vpop.xlane.xlu0 %2006
      %v2008 = vsel %vm752, %v2004, 0.0
      %2009 = vadd.xlane.f32.xlu0 %v2008
      %v2010 = vpop.xlane.xlu0 %2009
      %v2011 = vrcp.pop %v2007
      %v2012 = vrcp.pop %v2010
      %v2013 = vmul.f32 %v2002, %v2011
      %v2014 = vmul.f32 %v2004, %v2012
      %2015 = vrot.lane.b32.xlu0 %v1501, 48
      %v2016 = vpop.permute.xlu0 %2015
      %2017 = vrot.lane.b32.xlu0 %v1503, 48
      %v2018 = vpop.permute.xlu0 %2017
      %v2021 = vsel %vm748, %v2013, 0
      %v2024 = vsel %vm748, %v2014, 0
      %v2026 = vsel %vm783, %v2018, 0
      %2028 = vmatprep.subr.mxu0 0.0
      %2029 = vmatpush1.msra.mxu0 0.0
      %2030 = vmatprep.subr.mxu0 0.0
      %2031 = vmatpush1.msra.mxu0 0.0
      %2032 = vmatprep.subr.mxu0 0.0
      %2033 = vmatpush1.msra.mxu0 0.0
      %2034 = vmatprep.subr.mxu0 0.0
      %2035 = vmatpush1.msra.mxu0 0.0
      %2036 = vmatprep.subr.mxu0 0.0
      %2037 = vmatpush1.msra.mxu0 0.0
      %2038 = vmatprep.subr.mxu0 0.0
      %2039 = vmatpush1.msra.mxu0 0.0
      %2040 = vmatprep.subr.mxu0 0.0
      %2041 = vmatpush1.msra.mxu0 0.0
      %2042 = vmatprep.subr.mxu0 0.0
      %2043 = vmatpush1.msra.mxu0 0.0
      %2044 = vmatprep.subr.mxu0 0.0
      %2045 = vmatpush1.msra.mxu0 0.0
      %2046 = vmatprep.subr.mxu0 0.0
      %2047 = vmatpush1.msra.mxu0 0.0
      %2048 = vmatprep.subr.mxu0 0.0
      %2049 = vmatpush1.msra.mxu0 0.0
      %2050 = vmatprep.subr.mxu0 0.0
      %2051 = vmatpush1.msra.mxu0 0.0
      %2052 = vmatprep.subr.mxu0 0.0
      %2053 = vmatpush1.msra.mxu0 0.0
      %2054 = vmatprep.subr.mxu0 0.0
      %2055 = vmatpush1.msra.mxu0 0.0
      %2056 = vmatprep.subr.mxu0 0.0
      %2057 = vmatpush1.msra.mxu0 %v2026
      %2058 = vmatprep.subr.mxu0 0.0
      %2059 = vmatpush1.msra.mxu0 %v2016
      %2060 = vmatprep.subr.mxu0 0.0
      %2061 = vmatpush2.msra.mxu0 0.0
      %2062 = vmatprep.subr.mxu0 0.0
      %2063 = vmatpush2.msra.mxu0 0.0
      %2064 = vmatprep.subr.mxu0 0.0
      %2065 = vmatpush2.msra.mxu0 0.0
      %2066 = vmatprep.subr.mxu0 0.0
      %2067 = vmatpush2.msra.mxu0 0.0
      %2068 = vmatprep.subr.mxu0 0.0
      %2069 = vmatpush2.msra.mxu0 0.0
      %2070 = vmatprep.subr.mxu0 0.0
      %2071 = vmatpush2.msra.mxu0 0.0
      %2072 = vmatprep.subr.mxu0 0.0
      %2073 = vmatpush2.msra.mxu0 0.0
      %2074 = vmatprep.subr.mxu0 0.0
      %2075 = vmatpush2.msra.mxu0 0.0
      %2076 = vmatprep.subr.mxu0 0.0
      %2077 = vmatpush2.msra.mxu0 0.0
      %2078 = vmatprep.subr.mxu0 0.0
      %2079 = vmatpush2.msra.mxu0 0.0
      %2080 = vmatprep.subr.mxu0 0.0
      %2081 = vmatpush2.msra.mxu0 0.0
      %2082 = vmatprep.subr.mxu0 0.0
      %2083 = vmatpush2.msra.mxu0 0.0
      %2084 = vmatprep.subr.mxu0 0.0
      %2085 = vmatpush2.msra.mxu0 0.0
      %2086 = vmatprep.subr.mxu0 0.0
      %2087 = vmatpush2.msra.mxu0 0.0
      %2088 = vmatprep.subr.mxu0 0.0
      %2089 = vmatpush2.msra.mxu0 0.0
      %2090 = vmatprep.subr.mxu0 0.0
      %2091 = vmatpush2.msra.mxu0 0.0
      %2092 = vmatprep.mubr.f32.mxu0 0.0
      %2093 = vmatmul.mubr.f32.gmra.mxu0 %v2021
      %v2094 = vpop.f32.mrf.mxu0
      %v2095 = vadd.f32 0.0, %v2094
      %v2096 = vpop.f32.mrf.mxu0
      %2097 = vmatprep.mubr.f32.mxu0 0.0
      %2098 = vmatmul.mubr.f32.gmra.mxu0 %v2024
      %v2099 = vpop.f32.mrf.mxu0
      %v2100 = vadd.f32 0.0, %v2099
      %v2101 = vpop.f32.mrf.mxu0
      %2102 = vdwg.mxu0
      %2103 = vrot.lane.b32.xlu0 %v1501, 104
      %v2104 = vpop.permute.xlu0 %2103
      %2105 = vrot.lane.b32.xlu0 %v1503, 104
      %v2106 = vpop.permute.xlu0 %2105
      %2107 = vrot.lane.b32.xlu0 %v1501, 72
      %v2108 = vpop.permute.xlu0 %2107
      %2109 = vrot.lane.b32.xlu0 %v1503, 72
      %v2110 = vpop.permute.xlu0 %2109
      %v2111 = vsel %vm664, %v2104, 0
      %v2113 = vsel %vm664, %v2106, 0
      %v2115 = vsel %vm664, %v2108, 0
      %v2117 = vsel %vm664, %v2110, 0
      %2119 = vmatprep.subr.mxu0 0.0
      %2120 = vmatpush1.xpose.msra.mxu0 0.0
      %2121 = vmatprep.subr.mxu0 0.0
      %2122 = vmatpush1.xpose.msra.mxu0 0.0
      %2123 = vmatprep.subr.mxu0 0.0
      %2124 = vmatpush1.xpose.msra.mxu0 0.0
      %2125 = vmatprep.subr.mxu0 0.0
      %2126 = vmatpush1.xpose.msra.mxu0 0.0
      %2127 = vmatprep.subr.mxu0 0.0
      %2128 = vmatpush1.xpose.msra.mxu0 0.0
      %2129 = vmatprep.subr.mxu0 0.0
      %2130 = vmatpush1.xpose.msra.mxu0 0.0
      %2131 = vmatprep.subr.mxu0 0.0
      %2132 = vmatpush1.xpose.msra.mxu0 0.0
      %2133 = vmatprep.subr.mxu0 0.0
      %2134 = vmatpush1.xpose.msra.mxu0 0.0
      %2135 = vmatprep.subr.mxu0 0.0
      %2136 = vmatpush1.xpose.msra.mxu0 0.0
      %2137 = vmatprep.subr.mxu0 0.0
      %2138 = vmatpush1.xpose.msra.mxu0 0.0
      %2139 = vmatprep.subr.mxu0 0.0
      %2140 = vmatpush1.xpose.msra.mxu0 0.0
      %2141 = vmatprep.subr.mxu0 0.0
      %2142 = vmatpush1.xpose.msra.mxu0 0.0
      %2143 = vmatprep.subr.mxu0 0.0
      %2144 = vmatpush1.xpose.msra.mxu0 0.0
      %2145 = vmatprep.subr.mxu0 0.0
      %2146 = vmatpush1.xpose.msra.mxu0 0.0
      %2147 = vmatprep.subr.mxu0 0.0
      %2148 = vmatpush1.xpose.msra.mxu0 %v2117
      %2149 = vmatprep.subr.mxu0 0.0
      %2150 = vmatpush1.xpose.msra.mxu0 %v2115
      %2151 = vmatprep.subr.mxu0 0.0
      %2152 = vmatpush2.xpose.msra.mxu0 0.0
      %2153 = vmatprep.subr.mxu0 0.0
      %2154 = vmatpush2.xpose.msra.mxu0 0.0
      %2155 = vmatprep.subr.mxu0 0.0
      %2156 = vmatpush2.xpose.msra.mxu0 0.0
      %2157 = vmatprep.subr.mxu0 0.0
      %2158 = vmatpush2.xpose.msra.mxu0 0.0
      %2159 = vmatprep.subr.mxu0 0.0
      %2160 = vmatpush2.xpose.msra.mxu0 0.0
      %2161 = vmatprep.subr.mxu0 0.0
      %2162 = vmatpush2.xpose.msra.mxu0 0.0
      %2163 = vmatprep.subr.mxu0 0.0
      %2164 = vmatpush2.xpose.msra.mxu0 0.0
      %2165 = vmatprep.subr.mxu0 0.0
      %2166 = vmatpush2.xpose.msra.mxu0 0.0
      %2167 = vmatprep.subr.mxu0 0.0
      %2168 = vmatpush2.xpose.msra.mxu0 0.0
      %2169 = vmatprep.subr.mxu0 0.0
      %2170 = vmatpush2.xpose.msra.mxu0 0.0
      %2171 = vmatprep.subr.mxu0 0.0
      %2172 = vmatpush2.xpose.msra.mxu0 0.0
      %2173 = vmatprep.subr.mxu0 0.0
      %2174 = vmatpush2.xpose.msra.mxu0 0.0
      %2175 = vmatprep.subr.mxu0 0.0
      %2176 = vmatpush2.xpose.msra.mxu0 0.0
      %2177 = vmatprep.subr.mxu0 0.0
      %2178 = vmatpush2.xpose.msra.mxu0 0.0
      %2179 = vmatprep.subr.mxu0 0.0
      %2180 = vmatpush2.xpose.msra.mxu0 0.0
      %2181 = vmatprep.subr.mxu0 0.0
      %2182 = vmatpush2.xpose.msra.mxu0 0.0
      %2183 = vmatprep.mubr.f32.mxu0 0.0
      %2184 = vmatmul.mubr.f32.gmra.mxu0 %v2111
      %v2185 = vpop.f32.mrf.mxu0
      %v2186 = vadd.f32 0.0, %v2185
      %v2187 = vpop.f32.mrf.mxu0
      %2188 = vmatprep.mubr.f32.mxu0 0.0
      %2189 = vmatmul.mubr.f32.gmra.mxu0 %v2113
      %v2190 = vpop.f32.mrf.mxu0
      %v2191 = vadd.f32 0.0, %v2190
      %v2192 = vpop.f32.mrf.mxu0
      %2193 = vdwg.mxu0
      %v2194 = vsel %vm748, %v2186, -inf
      %2195 = vmax.xlane.f32.xlu0 %v2194
      %v2196 = vpop.xlane.xlu0 %2195
      %v2197 = vsel %vm752, %v2191, -inf
      %2198 = vmax.xlane.f32.xlu0 %v2197
      %v2199 = vpop.xlane.xlu0 %2198
      %v2200 = vsub.f32 %v2186, %v2196
      %v2201 = vsub.f32 %v2191, %v2199
      %v2202 = vmul.f32 %v2200, 1.442695
      %v2203 = vpow.pop %v2202
      %v2204 = vmul.f32 %v2201, 1.442695
      %v2205 = vpow.pop %v2204
      %v2206 = vsel %vm748, %v2203, 0.0
      %2207 = vadd.xlane.f32.xlu0 %v2206
      %v2208 = vpop.xlane.xlu0 %2207
      %v2209 = vsel %vm752, %v2205, 0.0
      %2210 = vadd.xlane.f32.xlu0 %v2209
      %v2211 = vpop.xlane.xlu0 %2210
      %v2212 = vrcp.pop %v2208
      %v2213 = vrcp.pop %v2211
      %v2214 = vmul.f32 %v2203, %v2212
      %v2215 = vmul.f32 %v2205, %v2213
      %2216 = vrot.lane.b32.xlu0 %v1501, 40
      %v2217 = vpop.permute.xlu0 %2216
      %2218 = vrot.lane.b32.xlu0 %v1503, 40
      %v2219 = vpop.permute.xlu0 %2218
      %v2222 = vsel %vm748, %v2214, 0
      %v2225 = vsel %vm748, %v2215, 0
      %v2227 = vsel %vm783, %v2219, 0
      %2229 = vmatprep.subr.mxu0 0.0
      %2230 = vmatpush1.msra.mxu0 0.0
      %2231 = vmatprep.subr.mxu0 0.0
      %2232 = vmatpush1.msra.mxu0 0.0
      %2233 = vmatprep.subr.mxu0 0.0
      %2234 = vmatpush1.msra.mxu0 0.0
      %2235 = vmatprep.subr.mxu0 0.0
      %2236 = vmatpush1.msra.mxu0 0.0
      %2237 = vmatprep.subr.mxu0 0.0
      %2238 = vmatpush1.msra.mxu0 0.0
      %2239 = vmatprep.subr.mxu0 0.0
      %2240 = vmatpush1.msra.mxu0 0.0
      %2241 = vmatprep.subr.mxu0 0.0
      %2242 = vmatpush1.msra.mxu0 0.0
      %2243 = vmatprep.subr.mxu0 0.0
      %2244 = vmatpush1.msra.mxu0 0.0
      %2245 = vmatprep.subr.mxu0 0.0
      %2246 = vmatpush1.msra.mxu0 0.0
      %2247 = vmatprep.subr.mxu0 0.0
      %2248 = vmatpush1.msra.mxu0 0.0
      %2249 = vmatprep.subr.mxu0 0.0
      %2250 = vmatpush1.msra.mxu0 0.0
      %2251 = vmatprep.subr.mxu0 0.0
      %2252 = vmatpush1.msra.mxu0 0.0
      %2253 = vmatprep.subr.mxu0 0.0
      %2254 = vmatpush1.msra.mxu0 0.0
      %2255 = vmatprep.subr.mxu0 0.0
      %2256 = vmatpush1.msra.mxu0 0.0
      %2257 = vmatprep.subr.mxu0 0.0
      %2258 = vmatpush1.msra.mxu0 %v2227
      %2259 = vmatprep.subr.mxu0 0.0
      %2260 = vmatpush1.msra.mxu0 %v2217
      %2261 = vmatprep.subr.mxu0 0.0
      %2262 = vmatpush2.msra.mxu0 0.0
      %2263 = vmatprep.subr.mxu0 0.0
      %2264 = vmatpush2.msra.mxu0 0.0
      %2265 = vmatprep.subr.mxu0 0.0
      %2266 = vmatpush2.msra.mxu0 0.0
      %2267 = vmatprep.subr.mxu0 0.0
      %2268 = vmatpush2.msra.mxu0 0.0
      %2269 = vmatprep.subr.mxu0 0.0
      %2270 = vmatpush2.msra.mxu0 0.0
      %2271 = vmatprep.subr.mxu0 0.0
      %2272 = vmatpush2.msra.mxu0 0.0
      %2273 = vmatprep.subr.mxu0 0.0
      %2274 = vmatpush2.msra.mxu0 0.0
      %2275 = vmatprep.subr.mxu0 0.0
      %2276 = vmatpush2.msra.mxu0 0.0
      %2277 = vmatprep.subr.mxu0 0.0
      %2278 = vmatpush2.msra.mxu0 0.0
      %2279 = vmatprep.subr.mxu0 0.0
      %2280 = vmatpush2.msra.mxu0 0.0
      %2281 = vmatprep.subr.mxu0 0.0
      %2282 = vmatpush2.msra.mxu0 0.0
      %2283 = vmatprep.subr.mxu0 0.0
      %2284 = vmatpush2.msra.mxu0 0.0
      %2285 = vmatprep.subr.mxu0 0.0
      %2286 = vmatpush2.msra.mxu0 0.0
      %2287 = vmatprep.subr.mxu0 0.0
      %2288 = vmatpush2.msra.mxu0 0.0
      %2289 = vmatprep.subr.mxu0 0.0
      %2290 = vmatpush2.msra.mxu0 0.0
      %2291 = vmatprep.subr.mxu0 0.0
      %2292 = vmatpush2.msra.mxu0 0.0
      %2293 = vmatprep.mubr.f32.mxu0 0.0
      %2294 = vmatmul.mubr.f32.gmra.mxu0 %v2222
      %v2295 = vpop.f32.mrf.mxu0
      %v2296 = vadd.f32 0.0, %v2295
      %v2297 = vpop.f32.mrf.mxu0
      %2298 = vmatprep.mubr.f32.mxu0 0.0
      %2299 = vmatmul.mubr.f32.gmra.mxu0 %v2225
      %v2300 = vpop.f32.mrf.mxu0
      %v2301 = vadd.f32 0.0, %v2300
      %v2302 = vpop.f32.mrf.mxu0
      %2303 = vdwg.mxu0
      %2306 = vrot.lane.b32.xlu0 %v1894, 8
      %v2307 = vpop.permute.xlu0 %2306
      %2308 = vrot.lane.b32.xlu0 %v1899, 8
      %v2309 = vpop.permute.xlu0 %2308
      %2314 = vrot.lane.b32.xlu0 %v2095, 16
      %v2315 = vpop.permute.xlu0 %2314
      %2316 = vrot.lane.b32.xlu0 %v2100, 16
      %v2317 = vpop.permute.xlu0 %2316
      %2322 = vrot.lane.b32.xlu0 %v2296, 24
      %v2323 = vpop.permute.xlu0 %2322
      %2324 = vrot.lane.b32.xlu0 %v2301, 24
      %v2325 = vpop.permute.xlu0 %2324
      %v2328 = vsel %vm664, %v1693, %v2307
      %v2329 = vsel %vm664, %v1698, %v2309
      %v2330 = vsel %vm1490, %v2328, %v2315
      %v2331 = vsel %vm1490, %v2329, %v2317
      %v2332 = vsel %vm1493, %v2330, %v2323
      %v2333 = vsel %vm1493, %v2331, %v2325
      %v2336 = vrot.slane %v2332, 2
      %v2337 = vrot.slane %v2333, 2
      %v2338 = vsel %vm783, %v2336, %v2337
      %v2340 = vsel %vm783, %v1495, %v2336
      %v2341 = vlaneseq
      %v2342 = vshrl.u32 %v2341, 7
      %v2343 = vsub.s32 1, %v2342
      %v2344 = vrot.slane %v551, %v2343
      %v2346 = vsel %vm560, %v1494, 0
      %v2349 = vsel %vm560, %v2340, 0
      %v2351 = vsel %vm560, %v2338, 0
      %v2353 = vsel %vm560, %v2337, 0
      %2355 = vmatprep.subr.mxu0 0.0
      %2356 = vmatpush1.msra.mxu0 0.0
      %2357 = vmatprep.subr.mxu0 0.0
      %2358 = vmatpush1.msra.mxu0 0.0
      %2359 = vmatprep.subr.mxu0 0.0
      %2360 = vmatpush1.msra.mxu0 0.0
      %2361 = vmatprep.subr.mxu0 0.0
      %2362 = vmatpush1.msra.mxu0 0.0
      %2363 = vmatprep.subr.mxu0 0.0
      %2364 = vmatpush1.msra.mxu0 0.0
      %2365 = vmatprep.subr.mxu0 0.0
      %2366 = vmatpush1.msra.mxu0 0.0
      %2367 = vmatprep.subr.mxu0 0.0
      %2368 = vmatpush1.msra.mxu0 0.0
      %2369 = vmatprep.subr.mxu0 0.0
      %2370 = vmatpush1.msra.mxu0 0.0
      %2371 = vmatprep.subr.mxu0 0.0
      %2372 = vmatpush1.msra.mxu0 0.0
      %2373 = vmatprep.subr.mxu0 0.0
      %2374 = vmatpush1.msra.mxu0 0.0
      %2375 = vmatprep.subr.mxu0 0.0
      %2376 = vmatpush1.msra.mxu0 0.0
      %2377 = vmatprep.subr.mxu0 0.0
      %2378 = vmatpush1.msra.mxu0 0.0
      %2379 = vmatprep.subr.mxu0 0.0
      %2380 = vmatpush1.msra.mxu0 %v538
      %2381 = vmatprep.subr.mxu0 0.0
      %2382 = vmatpush1.msra.mxu0 %v537
      %2383 = vmatprep.subr.mxu0 0.0
      %2384 = vmatpush1.msra.mxu0 %v536
      %2385 = vmatprep.subr.mxu0 0.0
      %2386 = vmatpush1.msra.mxu0 %v535
      %2387 = vmatprep.subr.mxu0 0.0
      %2388 = vmatpush2.msra.mxu0 0.0
      %2389 = vmatprep.subr.mxu0 0.0
      %2390 = vmatpush2.msra.mxu0 0.0
      %2391 = vmatprep.subr.mxu0 0.0
      %2392 = vmatpush2.msra.mxu0 0.0
      %2393 = vmatprep.subr.mxu0 0.0
      %2394 = vmatpush2.msra.mxu0 0.0
      %2395 = vmatprep.subr.mxu0 0.0
      %2396 = vmatpush2.msra.mxu0 0.0
      %2397 = vmatprep.subr.mxu0 0.0
      %2398 = vmatpush2.msra.mxu0 0.0
      %2399 = vmatprep.subr.mxu0 0.0
      %2400 = vmatpush2.msra.mxu0 0.0
      %2401 = vmatprep.subr.mxu0 0.0
      %2402 = vmatpush2.msra.mxu0 0.0
      %2403 = vmatprep.subr.mxu0 0.0
      %2404 = vmatpush2.msra.mxu0 0.0
      %2405 = vmatprep.subr.mxu0 0.0
      %2406 = vmatpush2.msra.mxu0 0.0
      %2407 = vmatprep.subr.mxu0 0.0
      %2408 = vmatpush2.msra.mxu0 0.0
      %2409 = vmatprep.subr.mxu0 0.0
      %2410 = vmatpush2.msra.mxu0 0.0
      %2411 = vmatprep.subr.mxu0 0.0
      %2412 = vmatpush2.msra.mxu0 0.0
      %2413 = vmatprep.subr.mxu0 0.0
      %2414 = vmatpush2.msra.mxu0 0.0
      %2415 = vmatprep.subr.mxu0 0.0
      %2416 = vmatpush2.msra.mxu0 0.0
      %2417 = vmatprep.subr.mxu0 0.0
      %2418 = vmatpush2.msra.mxu0 0.0
      %2419 = vmatprep.mubr.f32.mxu0 0.0
      %2420 = vmatmul.mubr.f32.gmra.mxu0 %v2346
      %v2421 = vpop.f32.mrf.mxu0
      %v2422 = vadd.f32 %v2344, %v2421
      %v2423 = vpop.f32.mrf.mxu0
      %2424 = vmatprep.mubr.f32.mxu0 0.0
      %2425 = vmatmul.mubr.f32.gmra.mxu0 %v2349
      %v2426 = vpop.f32.mrf.mxu0
      %v2427 = vadd.f32 %v2344, %v2426
      %v2428 = vpop.f32.mrf.mxu0
      %2429 = vmatprep.mubr.f32.mxu0 0.0
      %2430 = vmatmul.mubr.f32.gmra.mxu0 %v2351
      %v2431 = vpop.f32.mrf.mxu0
      %v2432 = vadd.f32 %v2344, %v2431
      %v2433 = vpop.f32.mrf.mxu0
      %2434 = vmatprep.mubr.f32.mxu0 0.0
      %2435 = vmatmul.mubr.f32.gmra.mxu0 %v2353
      %v2436 = vpop.f32.mrf.mxu0
      %v2437 = vadd.f32 %v2344, %v2436
      %v2438 = vpop.f32.mrf.mxu0
      %2439 = vdwg.mxu0
      %v2440 = vadd.f32 %v552, %v2422
      %v2441 = vadd.f32 %v553, %v2427
      %v2442 = vadd.f32 %v554, %v2432
      %v2443 = vadd.f32 %v555, %v2437
      %v2444 = vsel %vm560, %v2440, 0.0
      %2445 = vadd.xlane.f32.xlu0 %v2444
      %v2446 = vpop.xlane.xlu0 %2445
      %v2447 = vsel %vm560, %v2441, 0.0
      %2448 = vadd.xlane.f32.xlu0 %v2447
      %v2449 = vpop.xlane.xlu0 %2448
      %v2450 = vsel %vm560, %v2442, 0.0
      %2451 = vadd.xlane.f32.xlu0 %v2450
      %v2452 = vpop.xlane.xlu0 %2451
      %vm2453 = vcmask 257024
      %v2454 = vsel %vm2453, %v2443, 0.0
      %2455 = vadd.xlane.f32.xlu0 %v2454
      %v2456 = vpop.xlane.xlu0 %2455
      %v2457 = vrcp.pop 32.0
      %v2458 = vmul.f32 %v2446, %v2457
      %v2459 = vmul.f32 %v2449, %v2457
      %v2460 = vmul.f32 %v2452, %v2457
      %v2461 = vmul.f32 %v2456, %v2457
      %v2462 = vsub.f32 %v2440, %v2458
      %v2463 = vsub.f32 %v2441, %v2459
      %v2464 = vsub.f32 %v2442, %v2460
      %v2465 = vsub.f32 %v2443, %v2461
      %v2466 = vmul.f32 %v2462, %v2462
      %v2467 = vmul.f32 %v2463, %v2463
      %v2468 = vmul.f32 %v2464, %v2464
      %v2469 = vmul.f32 %v2465, %v2465
      %v2470 = vsel %vm560, %v2466, 0.0
      %2471 = vadd.xlane.f32.xlu0 %v2470
      %v2472 = vpop.xlane.xlu0 %2471
      %v2473 = vsel %vm560, %v2467, 0.0
      %2474 = vadd.xlane.f32.xlu0 %v2473
      %v2475 = vpop.xlane.xlu0 %2474
      %v2476 = vsel %vm560, %v2468, 0.0
      %2477 = vadd.xlane.f32.xlu0 %v2476
      %v2478 = vpop.xlane.xlu0 %2477
      %v2479 = vsel %vm2453, %v2469, 0.0
      %2480 = vadd.xlane.f32.xlu0 %v2479
      %v2481 = vpop.xlane.xlu0 %2480
      %v2482 = vmul.f32 %v2472, %v2457
      %v2483 = vmul.f32 %v2475, %v2457
      %v2484 = vmul.f32 %v2478, %v2457
      %v2485 = vmul.f32 %v2481, %v2457
      %v2486 = vadd.f32 %v2482, 1e-05
      %v2487 = vadd.f32 %v2483, 1e-05
      %v2488 = vadd.f32 %v2484, 1e-05
      %v2489 = vadd.f32 %v2485, 1e-05
      %v2490 = vrsqrt.pop %v2486
      %v2491 = vrsqrt.pop %v2487
      %v2492 = vrsqrt.pop %v2488
      %v2493 = vrsqrt.pop %v2489
      %v2494 = vmul.f32 %v2462, %v2490
      %v2495 = vmul.f32 %v2463, %v2491
      %v2496 = vmul.f32 %v2464, %v2492
      %v2497 = vmul.f32 %v2465, %v2493
      %v2498 = vlaneseq
      %v2499 = vshrl.u32 %v2498, 7
      %v2500 = vsub.s32 4, %v2499
      %v2501 = vrot.slane %v551, %v2500
      %v2502 = vmul.f32 %v2494, %v2501
      %v2503 = vmul.f32 %v2495, %v2501
      %v2504 = vmul.f32 %v2496, %v2501
      %v2505 = vmul.f32 %v2497, %v2501
      %v2506 = vlaneseq
      %v2507 = vshrl.u32 %v2506, 7
      %v2508 = vsub.s32 5, %v2507
      %v2509 = vrot.slane %v551, %v2508
      %v2510 = vadd.f32 %v2502, %v2509
      %v2511 = vadd.f32 %v2503, %v2509
      %v2512 = vadd.f32 %v2504, %v2509
      %v2513 = vadd.f32 %v2505, %v2509
      %v2514 = vlaneseq
      %v2515 = vshrl.u32 %v2514, 7
      %v2516 = vsub.s32 2, %v2515
      %v2517 = vrot.slane %v551, %v2516
      %v2519 = vsel %vm560, %v2510, 0
      %v2522 = vsel %vm560, %v2511, 0
      %v2525 = vsel %vm560, %v2512, 0
      %v2528 = vsel %vm560, %v2513, 0
      %2530 = vmatprep.subr.mxu0 0.0
      %2531 = vmatpush1.msra.mxu0 0.0
      %2532 = vmatprep.subr.mxu0 0.0
      %2533 = vmatpush1.msra.mxu0 0.0
      %2534 = vmatprep.subr.mxu0 0.0
      %2535 = vmatpush1.msra.mxu0 0.0
      %2536 = vmatprep.subr.mxu0 0.0
      %2537 = vmatpush1.msra.mxu0 0.0
      %2538 = vmatprep.subr.mxu0 0.0
      %2539 = vmatpush1.msra.mxu0 0.0
      %2540 = vmatprep.subr.mxu0 0.0
      %2541 = vmatpush1.msra.mxu0 0.0
      %2542 = vmatprep.subr.mxu0 0.0
      %2543 = vmatpush1.msra.mxu0 0.0
      %2544 = vmatprep.subr.mxu0 0.0
      %2545 = vmatpush1.msra.mxu0 0.0
      %2546 = vmatprep.subr.mxu0 0.0
      %2547 = vmatpush1.msra.mxu0 0.0
      %2548 = vmatprep.subr.mxu0 0.0
      %2549 = vmatpush1.msra.mxu0 0.0
      %2550 = vmatprep.subr.mxu0 0.0
      %2551 = vmatpush1.msra.mxu0 0.0
      %2552 = vmatprep.subr.mxu0 0.0
      %2553 = vmatpush1.msra.mxu0 0.0
      %2554 = vmatprep.subr.mxu0 0.0
      %2555 = vmatpush1.msra.mxu0 %v542
      %2556 = vmatprep.subr.mxu0 0.0
      %2557 = vmatpush1.msra.mxu0 %v541
      %2558 = vmatprep.subr.mxu0 0.0
      %2559 = vmatpush1.msra.mxu0 %v540
      %2560 = vmatprep.subr.mxu0 0.0
      %2561 = vmatpush1.msra.mxu0 %v539
      %2562 = vmatprep.subr.mxu0 0.0
      %2563 = vmatpush2.msra.mxu0 0.0
      %2564 = vmatprep.subr.mxu0 0.0
      %2565 = vmatpush2.msra.mxu0 0.0
      %2566 = vmatprep.subr.mxu0 0.0
      %2567 = vmatpush2.msra.mxu0 0.0
      %2568 = vmatprep.subr.mxu0 0.0
      %2569 = vmatpush2.msra.mxu0 0.0
      %2570 = vmatprep.subr.mxu0 0.0
      %2571 = vmatpush2.msra.mxu0 0.0
      %2572 = vmatprep.subr.mxu0 0.0
      %2573 = vmatpush2.msra.mxu0 0.0
      %2574 = vmatprep.subr.mxu0 0.0
      %2575 = vmatpush2.msra.mxu0 0.0
      %2576 = vmatprep.subr.mxu0 0.0
      %2577 = vmatpush2.msra.mxu0 0.0
      %2578 = vmatprep.subr.mxu0 0.0
      %2579 = vmatpush2.msra.mxu0 0.0
      %2580 = vmatprep.subr.mxu0 0.0
      %2581 = vmatpush2.msra.mxu0 0.0
      %2582 = vmatprep.subr.mxu0 0.0
      %2583 = vmatpush2.msra.mxu0 0.0
      %2584 = vmatprep.subr.mxu0 0.0
      %2585 = vmatpush2.msra.mxu0 0.0
      %2586 = vmatprep.subr.mxu0 0.0
      %2587 = vmatpush2.msra.mxu0 0.0
      %2588 = vmatprep.subr.mxu0 0.0
      %2589 = vmatpush2.msra.mxu0 0.0
      %2590 = vmatprep.subr.mxu0 0.0
      %2591 = vmatpush2.msra.mxu0 0.0
      %2592 = vmatprep.subr.mxu0 0.0
      %2593 = vmatpush2.msra.mxu0 0.0
      %2594 = vmatprep.mubr.f32.mxu0 0.0
      %2595 = vmatmul.mubr.f32.gmra.mxu0 %v2519
      %v2596 = vpop.f32.mrf.mxu0
      %v2597 = vadd.f32 %v2517, %v2596
      %v2598 = vpop.f32.mrf.mxu0
      %2599 = vmatprep.mubr.f32.mxu0 0.0
      %2600 = vmatmul.mubr.f32.gmra.mxu0 %v2522
      %v2601 = vpop.f32.mrf.mxu0
      %v2602 = vadd.f32 %v2517, %v2601
      %v2603 = vpop.f32.mrf.mxu0
      %2604 = vmatprep.mubr.f32.mxu0 0.0
      %2605 = vmatmul.mubr.f32.gmra.mxu0 %v2525
      %v2606 = vpop.f32.mrf.mxu0
      %v2607 = vadd.f32 %v2517, %v2606
      %v2608 = vpop.f32.mrf.mxu0
      %2609 = vmatprep.mubr.f32.mxu0 0.0
      %2610 = vmatmul.mubr.f32.gmra.mxu0 %v2528
      %v2611 = vpop.f32.mrf.mxu0
      %v2612 = vadd.f32 %v2517, %v2611
      %v2613 = vpop.f32.mrf.mxu0
      %2614 = vdwg.mxu0
      %v2615 = vmax.f32 %v2597, 0.0
      %v2616 = vmax.f32 %v2602, 0.0
      %v2617 = vmax.f32 %v2607, 0.0
      %v2618 = vmax.f32 %v2612, 0.0
      %v2619 = vlaneseq
      %v2620 = vshrl.u32 %v2619, 7
      %v2621 = vsub.s32 3, %v2620
      %v2622 = vrot.slane %v551, %v2621
      %vm2623 = vcmask 523264
      %v2625 = vsel %vm2623, %v2615, 0
      %v2628 = vsel %vm2623, %v2616, 0
      %v2631 = vsel %vm2623, %v2617, 0
      %v2634 = vsel %vm2623, %v2618, 0
      %2636 = vmatprep.subr.mxu0 0.0
      %2637 = vmatpush1.msra.mxu0 0.0
      %2638 = vmatprep.subr.mxu0 0.0
      %2639 = vmatpush1.msra.mxu0 0.0
      %2640 = vmatprep.subr.mxu0 0.0
      %2641 = vmatpush1.msra.mxu0 0.0
      %2642 = vmatprep.subr.mxu0 0.0
      %2643 = vmatpush1.msra.mxu0 0.0
      %2644 = vmatprep.subr.mxu0 0.0
      %2645 = vmatpush1.msra.mxu0 0.0
      %2646 = vmatprep.subr.mxu0 0.0
      %2647 = vmatpush1.msra.mxu0 0.0
      %2648 = vmatprep.subr.mxu0 0.0
      %2649 = vmatpush1.msra.mxu0 0.0
      %2650 = vmatprep.subr.mxu0 0.0
      %2651 = vmatpush1.msra.mxu0 0.0
      %2652 = vmatprep.subr.mxu0 0.0
      %2653 = vmatpush1.msra.mxu0 %v550
      %2654 = vmatprep.subr.mxu0 0.0
      %2655 = vmatpush1.msra.mxu0 %v549
      %2656 = vmatprep.subr.mxu0 0.0
      %2657 = vmatpush1.msra.mxu0 %v548
      %2658 = vmatprep.subr.mxu0 0.0
      %2659 = vmatpush1.msra.mxu0 %v547
      %2660 = vmatprep.subr.mxu0 0.0
      %2661 = vmatpush1.msra.mxu0 %v546
      %2662 = vmatprep.subr.mxu0 0.0
      %2663 = vmatpush1.msra.mxu0 %v545
      %2664 = vmatprep.subr.mxu0 0.0
      %2665 = vmatpush1.msra.mxu0 %v544
      %2666 = vmatprep.subr.mxu0 0.0
      %2667 = vmatpush1.msra.mxu0 %v543
      %2668 = vmatprep.subr.mxu0 0.0
      %2669 = vmatpush2.msra.mxu0 0.0
      %2670 = vmatprep.subr.mxu0 0.0
      %2671 = vmatpush2.msra.mxu0 0.0
      %2672 = vmatprep.subr.mxu0 0.0
      %2673 = vmatpush2.msra.mxu0 0.0
      %2674 = vmatprep.subr.mxu0 0.0
      %2675 = vmatpush2.msra.mxu0 0.0
      %2676 = vmatprep.subr.mxu0 0.0
      %2677 = vmatpush2.msra.mxu0 0.0
      %2678 = vmatprep.subr.mxu0 0.0
      %2679 = vmatpush2.msra.mxu0 0.0
      %2680 = vmatprep.subr.mxu0 0.0
      %2681 = vmatpush2.msra.mxu0 0.0
      %2682 = vmatprep.subr.mxu0 0.0
      %2683 = vmatpush2.msra.mxu0 0.0
      %2684 = vmatprep.subr.mxu0 0.0
      %2685 = vmatpush2.msra.mxu0 0.0
      %2686 = vmatprep.subr.mxu0 0.0
      %2687 = vmatpush2.msra.mxu0 0.0
      %2688 = vmatprep.subr.mxu0 0.0
      %2689 = vmatpush2.msra.mxu0 0.0
      %2690 = vmatprep.subr.mxu0 0.0
      %2691 = vmatpush2.msra.mxu0 0.0
      %2692 = vmatprep.subr.mxu0 0.0
      %2693 = vmatpush2.msra.mxu0 0.0
      %2694 = vmatprep.subr.mxu0 0.0
      %2695 = vmatpush2.msra.mxu0 0.0
      %2696 = vmatprep.subr.mxu0 0.0
      %2697 = vmatpush2.msra.mxu0 0.0
      %2698 = vmatprep.subr.mxu0 0.0
      %2699 = vmatpush2.msra.mxu0 0.0
      %2700 = vmatprep.mubr.f32.mxu0 0.0
      %2701 = vmatmul.mubr.f32.gmra.mxu0 %v2625
      %v2702 = vpop.f32.mrf.mxu0
      %v2703 = vadd.f32 %v2622, %v2702
      %v2704 = vpop.f32.mrf.mxu0
      %2705 = vmatprep.mubr.f32.mxu0 0.0
      %2706 = vmatmul.mubr.f32.gmra.mxu0 %v2628
      %v2707 = vpop.f32.mrf.mxu0
      %v2708 = vadd.f32 %v2622, %v2707
      %v2709 = vpop.f32.mrf.mxu0
      %2710 = vmatprep.mubr.f32.mxu0 0.0
      %2711 = vmatmul.mubr.f32.gmra.mxu0 %v2631
      %v2712 = vpop.f32.mrf.mxu0
      %v2713 = vadd.f32 %v2622, %v2712
      %v2714 = vpop.f32.mrf.mxu0
      %2715 = vmatprep.mubr.f32.mxu0 0.0
      %2716 = vmatmul.mubr.f32.gmra.mxu0 %v2634
      %v2717 = vpop.f32.mrf.mxu0
      %v2718 = vadd.f32 %v2622, %v2717
      %v2719 = vpop.f32.mrf.mxu0
      %2720 = vdwg.mxu0
      %v2721 = vadd.f32 %v2510, %v2703
      %v2722 = vadd.f32 %v2511, %v2708
      %v2723 = vadd.f32 %v2512, %v2713
      %v2724 = vadd.f32 %v2513, %v2718
      %v2725 = vsel %vm560, %v2721, 0.0
      %2726 = vadd.xlane.f32.xlu0 %v2725
      %v2727 = vpop.xlane.xlu0 %2726
      %v2728 = vsel %vm560, %v2722, 0.0
      %2729 = vadd.xlane.f32.xlu0 %v2728
      %v2730 = vpop.xlane.xlu0 %2729
      %v2731 = vsel %vm560, %v2723, 0.0
      %2732 = vadd.xlane.f32.xlu0 %v2731
      %v2733 = vpop.xlane.xlu0 %2732
      %v2734 = vsel %vm2453, %v2724, 0.0
      %2735 = vadd.xlane.f32.xlu0 %v2734
      %v2736 = vpop.xlane.xlu0 %2735
      %v2737 = vmul.f32 %v2727, %v2457
      %v2738 = vmul.f32 %v2730, %v2457
      %v2739 = vmul.f32 %v2733, %v2457
      %v2740 = vmul.f32 %v2736, %v2457
      %v2741 = vsub.f32 %v2721, %v2737
      %v2742 = vsub.f32 %v2722, %v2738
      %v2743 = vsub.f32 %v2723, %v2739
      %v2744 = vsub.f32 %v2724, %v2740
      %v2745 = vmul.f32 %v2741, %v2741
      %v2746 = vmul.f32 %v2742, %v2742
      %v2747 = vmul.f32 %v2743, %v2743
      %v2748 = vmul.f32 %v2744, %v2744
      %v2749 = vsel %vm560, %v2745, 0.0
      %2750 = vadd.xlane.f32.xlu0 %v2749
      %v2751 = vpop.xlane.xlu0 %2750
      %v2752 = vsel %vm560, %v2746, 0.0
      %2753 = vadd.xlane.f32.xlu0 %v2752
      %v2754 = vpop.xlane.xlu0 %2753
      %v2755 = vsel %vm560, %v2747, 0.0
      %2756 = vadd.xlane.f32.xlu0 %v2755
      %v2757 = vpop.xlane.xlu0 %2756
      %v2758 = vsel %vm2453, %v2748, 0.0
      %2759 = vadd.xlane.f32.xlu0 %v2758
      %v2760 = vpop.xlane.xlu0 %2759
      %v2761 = vmul.f32 %v2751, %v2457
      %v2762 = vmul.f32 %v2754, %v2457
      %v2763 = vmul.f32 %v2757, %v2457
      %v2764 = vmul.f32 %v2760, %v2457
      %v2765 = vadd.f32 %v2761, 1e-05
      %v2766 = vadd.f32 %v2762, 1e-05
      %v2767 = vadd.f32 %v2763, 1e-05
      %v2768 = vadd.f32 %v2764, 1e-05
      %v2769 = vrsqrt.pop %v2765
      %v2770 = vrsqrt.pop %v2766
      %v2771 = vrsqrt.pop %v2767
      %v2772 = vrsqrt.pop %v2768
      %v2773 = vmul.f32 %v2741, %v2769
      %v2774 = vmul.f32 %v2742, %v2770
      %v2775 = vmul.f32 %v2743, %v2771
      %v2776 = vmul.f32 %v2744, %v2772
      %v2777 = vlaneseq
      %v2778 = vshrl.u32 %v2777, 7
      %v2779 = vsub.s32 6, %v2778
      %v2780 = vrot.slane %v551, %v2779
      %v2781 = vmul.f32 %v2773, %v2780
      %v2782 = vmul.f32 %v2774, %v2780
      %v2783 = vmul.f32 %v2775, %v2780
      %v2784 = vmul.f32 %v2776, %v2780
      %v2785 = vlaneseq
      %v2786 = vshrl.u32 %v2785, 7
      %v2787 = vsub.s32 7, %v2786
      %v2788 = vrot.slane %v551, %v2787
      %v2789 = vadd.f32 %v2781, %v2788
      %v2790 = vadd.f32 %v2782, %v2788
      %v2791 = vadd.f32 %v2783, %v2788
      %v2792 = vadd.f32 %v2784, %v2788
      %2793 = vst.msk [vmem:[#allocation2] sm:$0xff] %vm560, %v2789
      %2794 = vst.msk [vmem:[#allocation2 + $0x8] sm:$0xff] %vm560, %v2790
      %2795 = vst.msk [vmem:[#allocation2 + $0x10] sm:$0xff] %vm560, %v2791
      %2796 = vst.msk [vmem:[#allocation2 + $0x18] sm:$0xf] %vm2453, %v2792
      %p2797 = scmp.eq.s32.totalorder %s21, 1
      // Predicated region
      $region65: #{encoder_forward.1} parent=59 // pred_check
        %p2798 = pneg %p2797
      $region66: #{encoder_forward.1} parent=59 // pred_check_branch
        %2800 = sbr.rel (%p2798) target = $region68
      $region67: #{encoder_forward.1} parent=59 // pred_region
        %v2803 = vrot.slane %v2790, 6
        %v2804 = vrot.slane %v2791, 6
        %v2805 = vsel %vm1498, %v2803, %v2804
        %2807 = vst.msk [vmem:[%s10] sm:$0xf] %vm2453, %v2789
        %2808 = vst.msk [vmem:[%s10 + $0x4] sm:$0xf] %vm2453, %v2805
      $region68: #{encoder_forward.1} parent=59 // pred_fallthru
        _
      // Predicated region
      $region69: #{encoder_forward.1} parent=59 // pred_check
        %p2809 = pneg %p269
      $region70: #{encoder_forward.1} parent=59 // pred_check_branch
        %2811 = sbr.rel (%p2809) target = $region72
      $region71: #{encoder_forward.1} parent=59 // pred_region
        _
      $region72: #{encoder_forward.1} parent=59 // pred_fallthru
        _
      // Predicated region
      $region73: #{encoder_forward.1} parent=59 // pred_check
        %p2812 = pneg %p269
      $region74: #{encoder_forward.1} parent=59 // pred_check_branch
        %2814 = sbr.rel (%p2812) target = $region76
      $region75: #{encoder_forward.1} parent=59 // pred_region
        _
      $region76: #{encoder_forward.1} parent=59 // pred_fallthru
        _
    $region60: #{encoder_forward.1} parent=5 // pred_fallthru
      _
    %p2815 = scmp.le.s32.totalorder 2, %s16
    // Predicated region
    $region77: #{encoder_forward.1} parent=5 // pred_check
      %p2816 = pneg %p2815
    $region78: #{encoder_forward.1} parent=5 // pred_check_branch
      %2818 = sbr.rel (%p2816) target = $region80
    $region79: #{encoder_forward.1} parent=5 // pred_region
      %s2819 = ssub.s32 %s16, 2
    $region80: #{encoder_forward.1} parent=5 // pred_fallthru
      _
  $region6: #{encoder_forward.1} parent=0 // loop_footer
    %s20 = sadd.s32 1, %s16
  $region7: #{encoder_forward.1} parent=0 // loop_footer_branch
    %15 = sbr.rel target = $region3
  $region8: #{encoder_forward.1} parent=0 // loop_exit
    _

</llo_original>
